<compile_context>
chip_gen: v7x
topology: tpu7x:2x2x1
jax: 0.10.0
libtpu: 0.0.40
codegen_flags: <defaults>
</compile_context>

<pallas_src>
import functools

import jax
import jax.numpy as jnp
from jax import lax
from jax.experimental import pallas as pl
from jax.experimental.pallas import tpu as pltpu

_ENC_T_BLK = 8          # source timesteps folded into one encoder grid step


# ----------------------------------------------------------------------------
# Padding helpers (exact-zero padding -> numerics identical to unpadded math)
# ----------------------------------------------------------------------------
def _round_up(x, m):
    return ((x + m - 1) // m) * m


def _pad_axis(x, axis, new_size):
    if x.shape[axis] == new_size:
        return x
    pad = [(0, 0)] * x.ndim
    pad[axis] = (0, new_size - x.shape[axis])
    return jnp.pad(x, pad)


# PyTorch LSTM gate order is (i, f, g, o).  Reorder to (i, f, o, g) at padding
# time so the three sigmoid gates form one contiguous [B, 3Hp] slice and tanh
# a single [B, Hp] slice (one sigmoid + one tanh issue per step).
_GATE_ORDER = (0, 1, 3, 2)


def _pad_gates(w, h, hp):
    parts = [_pad_axis(w[..., k * h:(k + 1) * h], -1, hp) for k in _GATE_ORDER]
    return jnp.concatenate(parts, axis=-1)


# ----------------------------------------------------------------------------
# Shared LSTM cell update (values only; bias is already folded into xc)
# ----------------------------------------------------------------------------
def _lstm_step(xc, h, c, whh, hp):
    z = xc + jnp.dot(h.astype(jnp.bfloat16), whh,
                     preferred_element_type=jnp.float32)
    sig = jax.nn.sigmoid(z[:, :3 * hp])          # gates (i, f, o), lane-aligned
    i = sig[:, 0 * hp:1 * hp]
    f = sig[:, 1 * hp:2 * hp]
    o = sig[:, 2 * hp:3 * hp]
    g = jnp.tanh(z[:, 3 * hp:])
    c_new = f * c + i * g
    h_new = o * jnp.tanh(c_new)
    return h_new, c_new


# ----------------------------------------------------------------------------
# Pallas kernels
# ----------------------------------------------------------------------------
def _encoder_kernel(xc_ref, whh_ref, h_ref, c_ref):
    """One grid step = _ENC_T_BLK source timesteps.
    xc:[T_BLK,B,4H] bf16 (emb@W_ih + bias, precomputed), whh:[H,4H] bf16,
    h/c:[B,H] f32 output accumulators resident across the whole grid."""
    hp = h_ref.shape[-1]
    t_blk = xc_ref.shape[0]

    @pl.when(pl.program_id(0) == 0)
    def _():
        h_ref[...] = jnp.zeros_like(h_ref)
        c_ref[...] = jnp.zeros_like(c_ref)

    whh = whh_ref[...]

    def step(k, carry):
        h, c = carry
        return _lstm_step(xc_ref[k].astype(jnp.float32), h, c, whh, hp)

    # Unrolled so the LLO scheduler sees all T_BLK small matmuls at once.
    h, c = lax.fori_loop(0, t_blk, step, (h_ref[...], c_ref[...]), unroll=True)
    h_ref[...] = h
    c_ref[...] = c


def _decoder_kernel(v_real, x0c_ref, h0_ref, c0_ref, emb_hbm_ref, whh_ref,
                    ow_ref, ob_ref, out_ref, h_sc, c_sc, xc_sc, idx_sc, gsem):
    """grid=(trg_len,): one greedy decode step per grid iteration.
    Recurrent state (h, c) and the next-step input projection xc live in VMEM
    scratch; logits are streamed out one (1,B,Vp) block per step.  emb_hbm
    ([Vp,4H] = emb@W_ih + bias) stays in HBM; the chosen token's row is
    fetched with one small DMA per batch row (dynamic-index gather) instead of
    a [B,Vp]@[Vp,4H] one-hot matmul."""
    bp, hp = h_sc.shape
    vp = ow_ref.shape[-1]
    t = pl.program_id(0)
    t_last = pl.num_programs(0) - 1

    @pl.when(t == 0)
    def _():
        out_ref[...] = jnp.zeros_like(out_ref)      # only outputs[0] is zeroed
        h_sc[...] = h0_ref[...]
        c_sc[...] = c0_ref[...]
        xc_sc[...] = x0c_ref[...]

    @pl.when(t > 0)
    def _():
        h_new, c_new = _lstm_step(xc_sc[...], h_sc[...], c_sc[...],
                                  whh_ref[...], hp)
        logits = (jnp.dot(h_new.astype(jnp.bfloat16), ow_ref[...],
                          preferred_element_type=jnp.float32) + ob_ref[...])
        out_ref[...] = logits[None, :, :]
        h_sc[...] = h_new
        c_sc[...] = c_new

        # Greedy argmax over the real vocab (padded lanes masked out,
        # first-occurrence tie-break) + per-row gather of the next-step input
        # projection straight from HBM.  Skipped on the last step.
        @pl.when(t < t_last)
        def _():
            col = lax.broadcasted_iota(jnp.int32, (bp, vp), 1)
            masked = jnp.where(col < v_real, logits, -jnp.inf)
            m = jnp.max(masked, axis=1, keepdims=True)
            idx_sc[...] = jnp.min(jnp.where(masked == m, col, vp),
                                  axis=1, keepdims=True)
            copies = []
            for b in range(bp):                     # bp rows, all DMAs in flight
                ib = idx_sc[b, 0]
                cp = pltpu.make_async_copy(emb_hbm_ref.at[pl.ds(ib, 1)],
                                           xc_sc.at[pl.ds(b, 1)],
                                           gsem.at[b])
                cp.start()
                copies.append(cp)
            for cp in copies:
                cp.wait()


# ----------------------------------------------------------------------------
# pallas_call wrappers
# ----------------------------------------------------------------------------
def _run_encoder(xc, whh):
    n_blk = xc.shape[0] // _ENC_T_BLK
    _, bp, g4 = xc.shape
    hp = whh.shape[0]
    const = lambda shape: pl.BlockSpec(shape, lambda s: (0,) * len(shape))
    # TODO(synk): for large H, single-buffer whh (pipeline_mode=pl.Buffered(1))
    #             and raise vmem_limit_bytes (v5e scoped default is 16 MiB).
    return pl.pallas_call(
        _encoder_kernel,
        grid=(n_blk,),
        in_specs=[pl.BlockSpec((_ENC_T_BLK, bp, g4), lambda s: (s, 0, 0)),
                  const((hp, g4))],
        out_specs=(const((bp, hp)), const((bp, hp))),
        out_shape=(jax.ShapeDtypeStruct((bp, hp), jnp.float32),
                   jax.ShapeDtypeStruct((bp, hp), jnp.float32)),
        compiler_params=pltpu.CompilerParams(
            dimension_semantics=("arbitrary",)),
    )(xc, whh)


def _run_decoder(trg_len, v_real, x0c, h0, c0, emb_proj, whh, ow, ob):
    bp, g4 = x0c.shape
    hp = h0.shape[-1]
    vp = ow.shape[-1]
    const = lambda shape: pl.BlockSpec(shape, lambda t: (0,) * len(shape))
    return pl.pallas_call(
        functools.partial(_decoder_kernel, v_real),
        grid=(trg_len,),
        in_specs=[const((bp, g4)),                      # x0c
                  const((bp, hp)),                      # h0
                  const((bp, hp)),                      # c0
                  pl.BlockSpec(memory_space=pl.ANY),    # emb_proj stays in HBM
                  const((hp, g4)),                      # whh (bf16)
                  const((hp, vp)),                      # ow  (bf16)
                  const((1, vp))],                      # ob
        out_specs=pl.BlockSpec((1, bp, vp), lambda t: (t, 0, 0)),
        out_shape=jax.ShapeDtypeStruct((trg_len, bp, vp), jnp.float32),
        scratch_shapes=[pltpu.VMEM((bp, hp), jnp.float32),   # h state
                        pltpu.VMEM((bp, hp), jnp.float32),   # c state
                        pltpu.VMEM((bp, g4), jnp.float32),   # next-step xc
                        pltpu.VMEM((bp, 1), jnp.int32),      # argmax indices
                        pltpu.SemaphoreType.DMA((bp,))],     # gather sems
        compiler_params=pltpu.CompilerParams(
            dimension_semantics=("arbitrary",)),
    )(x0c, h0, c0, emb_proj, whh, ow, ob)


# ----------------------------------------------------------------------------
# Seq2Seq forward
# ----------------------------------------------------------------------------
@jax.jit
def seq2seq_forward(params, source, target):
    """source: [src_len, B] int32 tokens; target: [trg_len, B] int32 tokens.
    Returns outputs: [trg_len, B, V] float32 (outputs[0] stays zeros)."""
    src_len, b = source.shape
    trg_len = target.shape[0]
    h = params["enc_whh"].shape[0]
    v = params["out_w"].shape[-1]

    hp = _round_up(h, 128)       # lane-aligned gate blocks
    vp = _round_up(v, 128)       # lane-aligned vocab (unmasked stores)
    bp = _round_up(b, 8)         # full sublanes

    # ---- pad / reorder weights (exact zero padding -> identical math) ----
    enc_wih = _pad_gates(params["enc_wih"], h, hp)                     # [E,4Hp]
    enc_whh = _pad_gates(_pad_axis(params["enc_whh"], 0, hp), h, hp)   # [Hp,4Hp]
    enc_b = _pad_gates(params["enc_b"], h, hp)                         # [1,4Hp]
    dec_wih = _pad_gates(params["dec_wih"], h, hp)
    dec_whh = _pad_gates(_pad_axis(params["dec_whh"], 0, hp), h, hp)
    dec_b = _pad_gates(params["dec_b"], h, hp)
    out_w = _pad_axis(_pad_axis(params["out_w"], 0, hp), 1, vp)        # [Hp,Vp]
    out_b = _pad_axis(params["out_b"], 1, vp)                          # [1,Vp]

    # Fold embedding AND the fused LSTM bias into the input projection once:
    #   emb[tok] @ W_ih + (b_ih+b_hh)  ==  (emb @ W_ih + b)[tok]
    enc_proj = jnp.dot(params["enc_emb"], enc_wih) + enc_b             # [Vs,4Hp]
    dec_proj = jnp.dot(params["dec_emb"], dec_wih) + dec_b             # [Vt,4Hp]
    dec_proj = _pad_axis(dec_proj, 0, vp)                              # [Vp,4Hp]

    # Pad batch (extra rows are computed but discarded at the end).
    source_p = _pad_axis(source, 1, bp)
    x0_tok = _pad_axis(target[0], 0, bp)

    # ---- encoder ----
    # LEFT-pad the time axis to a multiple of _ENC_T_BLK with zero input
    # projections: a zero-input LSTM step from zero state is an exact no-op
    # (c' = sig(0)*0 + sig(0)*tanh(0) = 0), so padded steps need no masking.
    enc_xc = jnp.take(enc_proj, source_p, axis=0)                      # [S,Bp,4Hp]
    t_pad = _round_up(src_len, _ENC_T_BLK)
    enc_xc = jnp.pad(enc_xc, ((t_pad - src_len, 0), (0, 0), (0, 0)))
    enc_xc = enc_xc.astype(jnp.bfloat16)            # halves the streamed DMA
    h_fin, c_fin = _run_encoder(enc_xc, enc_whh.astype(jnp.bfloat16))

    # ---- decoder: one grid step per target position, state in scratch ----
    x0c = jnp.take(dec_proj, x0_tok, axis=0)                           # [Bp,4Hp]
    out_p = _run_decoder(trg_len, v, x0c, h_fin, c_fin,
                         dec_proj,                                     # HBM
                         dec_whh.astype(jnp.bfloat16),
                         out_w.astype(jnp.bfloat16), out_b)

    return out_p[:, :b, :v]                                            # [T,B,V]


# ----------------------------------------------------------------------------
# Deterministic parameter init + demo
# ----------------------------------------------------------------------------
def init_params(key, src_vocab, trg_vocab, emb, hidden):
    ks = jax.random.split(key, 7)
    sc = 0.1
    return {
        "enc_emb": sc * jax.random.normal(ks[0], (src_vocab, emb), jnp.float32),
        "enc_wih": sc * jax.random.normal(ks[1], (emb, 4 * hidden), jnp.float32),
        "enc_whh": sc * jax.random.normal(ks[2], (hidden, 4 * hidden), jnp.float32),
        "enc_b":   jnp.zeros((1, 4 * hidden), jnp.float32),   # = b_ih + b_hh
        "dec_emb": sc * jax.random.normal(ks[3], (trg_vocab, emb), jnp.float32),
        "dec_wih": sc * jax.random.normal(ks[4], (emb, 4 * hidden), jnp.float32),
        "dec_whh": sc * jax.random.normal(ks[5], (hidden, 4 * hidden), jnp.float32),
        "dec_b":   jnp.zeros((1, 4 * hidden), jnp.float32),
        "out_w":   sc * jax.random.normal(ks[6], (hidden, trg_vocab), jnp.float32),
        "out_b":   jnp.zeros((1, trg_vocab), jnp.float32),
    }


if __name__ == "__main__":
    SRC_LEN, TRG_LEN, BATCH = 8, 8, 2
    SRC_VOCAB, TRG_VOCAB = 64, 64
    EMB, HIDDEN = 16, 32

    key = jax.random.PRNGKey(0)
    k_src, k_trg, k_par = jax.random.split(key, 3)

    source = jax.random.randint(k_src, (SRC_LEN, BATCH), 0, SRC_VOCAB, jnp.int32)
    target = jax.random.randint(k_trg, (TRG_LEN, BATCH), 0, TRG_VOCAB, jnp.int32)
    params = init_params(k_par, SRC_VOCAB, TRG_VOCAB, EMB, HIDDEN)

    outputs = seq2seq_forward(params, source, target)
    outputs = jax.block_until_ready(outputs)

    assert outputs.shape == (TRG_LEN, BATCH, TRG_VOCAB)
    assert outputs.dtype == jnp.float32
    assert bool(jnp.all(outputs[0] == 0.0))
    assert bool(jnp.all(jnp.isfinite(outputs)))
    print("KERNEL_OK")
</pallas_src>

<mosaic_0001>
module attributes {stable_mosaic.version = 11 : i64} {
  func.func @_encoder_kernel(%arg0: i32, %arg1: memref<8x8x512xbf16, #tpu.memory_space<vmem>>, %arg2: memref<128x512xbf16, #tpu.memory_space<vmem>>, %arg3: memref<8x128xf32, #tpu.memory_space<vmem>>, %arg4: memref<8x128xf32, #tpu.memory_space<vmem>>) attributes {dimension_semantics = [#tpu.dimension_semantics<arbitrary>], iteration_bounds = array<i64: 1>, scalar_prefetch = 0 : i64, scratch_operands = 0 : i64, tpu.core_type = #tpu.core_type<tc>, window_params = [{transform_indices = @transform_0, window_bounds = array<i64: 8, 8, 512>}, {pipeline_mode = #tpu.pipeline_mode<synchronous>, transform_indices = @transform_1, window_bounds = array<i64: 128, 512>}, {pipeline_mode = #tpu.pipeline_mode<synchronous>, transform_indices = @transform_2, window_bounds = array<i64: 8, 128>}, {pipeline_mode = #tpu.pipeline_mode<synchronous>, transform_indices = @transform_3, window_bounds = array<i64: 8, 128>}]} {
    %c0_i32 = arith.constant 0 : i32
    %0 = arith.cmpi eq, %arg0, %c0_i32 : i32
    %1 = arith.extui %0 : i1 to i32
    %c0_i32_0 = arith.constant 0 : i32
    %2 = arith.cmpi ne, %1, %c0_i32_0 : i32
    scf.if %2 {
      %cst_42 = arith.constant 0.000000e+00 : f32
      %192 = vector.broadcast %cst_42 : f32 to vector<8x128xf32>
      %c0_43 = arith.constant 0 : index
      %c0_44 = arith.constant 0 : index
      %193 = vector.load %arg3[%c0_43, %c0_44] : memref<8x128xf32, #tpu.memory_space<vmem>>, vector<8x128xf32>
      tpu.vector_store %arg3[%c0_43, %c0_44], %192 {strides = array<i32>} : memref<8x128xf32, #tpu.memory_space<vmem>>, vector<8x128xf32>,
      %cst_45 = arith.constant 0.000000e+00 : f32
      %194 = vector.broadcast %cst_45 : f32 to vector<8x128xf32>
      %c0_46 = arith.constant 0 : index
      %c0_47 = arith.constant 0 : index
      %195 = vector.load %arg4[%c0_46, %c0_47] : memref<8x128xf32, #tpu.memory_space<vmem>>, vector<8x128xf32>
      tpu.vector_store %arg4[%c0_46, %c0_47], %194 {strides = array<i32>} : memref<8x128xf32, #tpu.memory_space<vmem>>, vector<8x128xf32>,
    } else {
    }
    %c0 = arith.constant 0 : index
    %c0_1 = arith.constant 0 : index
    %3 = vector.load %arg2[%c0, %c0_1] : memref<128x512xbf16, #tpu.memory_space<vmem>>, vector<128x512xbf16>
    %c0_2 = arith.constant 0 : index
    %c0_3 = arith.constant 0 : index
    %4 = vector.load %arg3[%c0_2, %c0_3] : memref<8x128xf32, #tpu.memory_space<vmem>>, vector<8x128xf32>
    %c0_4 = arith.constant 0 : index
    %c0_5 = arith.constant 0 : index
    %5 = vector.load %arg4[%c0_4, %c0_5] : memref<8x128xf32, #tpu.memory_space<vmem>>, vector<8x128xf32>
    %c0_i32_6 = arith.constant 0 : i32
    %6 = arith.index_cast %c0_i32_6 : i32 to index
    %c0_7 = arith.constant 0 : index
    %c0_8 = arith.constant 0 : index
    %7 = vector.load %arg1[%6, %c0_7, %c0_8] : memref<8x8x512xbf16, #tpu.memory_space<vmem>>, vector<1x8x512xbf16>
    %8 = vector.shape_cast %7 : vector<1x8x512xbf16> to vector<8x512xbf16>
    %9 = arith.extf %8 : vector<8x512xbf16> to vector<8x512xf32>
    %10 = arith.truncf %4 : vector<8x128xf32> to vector<8x128xbf16>
    %cst = arith.constant dense<0.000000e+00> : vector<8x512xf32>
    %11 = tpu.matmul %10, %3, %cst {dimension_numbers = #tpu.dot_dimension_numbers<[1], [0], [0], [1], [0, 0, 1, 1], [], []>} : vector<8x128xbf16>, vector<128x512xbf16>, vector<8x512xf32> -> vector<8x512xf32>
    %12 = arith.addf %9, %11 : vector<8x512xf32>
    %13 = vector.extract_strided_slice %12 {offsets = [0, 0], sizes = [8, 384], strides = [1, 1]} : vector<8x512xf32> to vector<8x384xf32>
    %14 = arith.negf %13 : vector<8x384xf32>
    %15 = math.exp %14 : vector<8x384xf32>
    %cst_9 = arith.constant 1.000000e+00 : f32
    %16 = vector.broadcast %cst_9 : f32 to vector<8x384xf32>
    %17 = arith.addf %16, %15 : vector<8x384xf32>
    %18 = arith.divf %16, %17 : vector<8x384xf32>
    %19 = vector.extract_strided_slice %18 {offsets = [0, 0], sizes = [8, 128], strides = [1, 1]} : vector<8x384xf32> to vector<8x128xf32>
    %20 = vector.extract_strided_slice %18 {offsets = [0, 128], sizes = [8, 128], strides = [1, 1]} : vector<8x384xf32> to vector<8x128xf32>
    %21 = vector.extract_strided_slice %18 {offsets = [0, 256], sizes = [8, 128], strides = [1, 1]} : vector<8x384xf32> to vector<8x128xf32>
    %22 = vector.extract_strided_slice %12 {offsets = [0, 384], sizes = [8, 128], strides = [1, 1]} : vector<8x512xf32> to vector<8x128xf32>
    %23 = math.tanh %22 : vector<8x128xf32>
    %24 = arith.mulf %20, %5 : vector<8x128xf32>
    %25 = arith.mulf %19, %23 : vector<8x128xf32>
    %26 = arith.addf %24, %25 : vector<8x128xf32>
    %27 = math.tanh %26 : vector<8x128xf32>
    %28 = arith.mulf %21, %27 : vector<8x128xf32>
    %c1_i32 = arith.constant 1 : i32
    %29 = arith.index_cast %c1_i32 : i32 to index
    %c0_10 = arith.constant 0 : index
    %c0_11 = arith.constant 0 : index
    %30 = vector.load %arg1[%29, %c0_10, %c0_11] : memref<8x8x512xbf16, #tpu.memory_space<vmem>>, vector<1x8x512xbf16>
    %31 = vector.shape_cast %30 : vector<1x8x512xbf16> to vector<8x512xbf16>
    %32 = arith.extf %31 : vector<8x512xbf16> to vector<8x512xf32>
    %33 = arith.truncf %28 : vector<8x128xf32> to vector<8x128xbf16>
    %cst_12 = arith.constant dense<0.000000e+00> : vector<8x512xf32>
    %34 = tpu.matmul %33, %3, %cst_12 {dimension_numbers = #tpu.dot_dimension_numbers<[1], [0], [0], [1], [0, 0, 1, 1], [], []>} : vector<8x128xbf16>, vector<128x512xbf16>, vector<8x512xf32> -> vector<8x512xf32>
    %35 = arith.addf %32, %34 : vector<8x512xf32>
    %36 = vector.extract_strided_slice %35 {offsets = [0, 0], sizes = [8, 384], strides = [1, 1]} : vector<8x512xf32> to vector<8x384xf32>
    %37 = arith.negf %36 : vector<8x384xf32>
    %38 = math.exp %37 : vector<8x384xf32>
    %cst_13 = arith.constant 1.000000e+00 : f32
    %39 = vector.broadcast %cst_13 : f32 to vector<8x384xf32>
    %40 = arith.addf %39, %38 : vector<8x384xf32>
    %41 = arith.divf %39, %40 : vector<8x384xf32>
    %42 = vector.extract_strided_slice %41 {offsets = [0, 0], sizes = [8, 128], strides = [1, 1]} : vector<8x384xf32> to vector<8x128xf32>
    %43 = vector.extract_strided_slice %41 {offsets = [0, 128], sizes = [8, 128], strides = [1, 1]} : vector<8x384xf32> to vector<8x128xf32>
    %44 = vector.extract_strided_slice %41 {offsets = [0, 256], sizes = [8, 128], strides = [1, 1]} : vector<8x384xf32> to vector<8x128xf32>
    %45 = vector.extract_strided_slice %35 {offsets = [0, 384], sizes = [8, 128], strides = [1, 1]} : vector<8x512xf32> to vector<8x128xf32>
    %46 = math.tanh %45 : vector<8x128xf32>
    %47 = arith.mulf %43, %26 : vector<8x128xf32>
    %48 = arith.mulf %42, %46 : vector<8x128xf32>
    %49 = arith.addf %47, %48 : vector<8x128xf32>
    %50 = math.tanh %49 : vector<8x128xf32>
    %51 = arith.mulf %44, %50 : vector<8x128xf32>
    %c2_i32 = arith.constant 2 : i32
    %52 = arith.index_cast %c2_i32 : i32 to index
    %c0_14 = arith.constant 0 : index
    %c0_15 = arith.constant 0 : index
    %53 = vector.load %arg1[%52, %c0_14, %c0_15] : memref<8x8x512xbf16, #tpu.memory_space<vmem>>, vector<1x8x512xbf16>
    %54 = vector.shape_cast %53 : vector<1x8x512xbf16> to vector<8x512xbf16>
    %55 = arith.extf %54 : vector<8x512xbf16> to vector<8x512xf32>
    %56 = arith.truncf %51 : vector<8x128xf32> to vector<8x128xbf16>
    %cst_16 = arith.constant dense<0.000000e+00> : vector<8x512xf32>
    %57 = tpu.matmul %56, %3, %cst_16 {dimension_numbers = #tpu.dot_dimension_numbers<[1], [0], [0], [1], [0, 0, 1, 1], [], []>} : vector<8x128xbf16>, vector<128x512xbf16>, vector<8x512xf32> -> vector<8x512xf32>
    %58 = arith.addf %55, %57 : vector<8x512xf32>
    %59 = vector.extract_strided_slice %58 {offsets = [0, 0], sizes = [8, 384], strides = [1, 1]} : vector<8x512xf32> to vector<8x384xf32>
    %60 = arith.negf %59 : vector<8x384xf32>
    %61 = math.exp %60 : vector<8x384xf32>
    %cst_17 = arith.constant 1.000000e+00 : f32
    %62 = vector.broadcast %cst_17 : f32 to vector<8x384xf32>
    %63 = arith.addf %62, %61 : vector<8x384xf32>
    %64 = arith.divf %62, %63 : vector<8x384xf32>
    %65 = vector.extract_strided_slice %64 {offsets = [0, 0], sizes = [8, 128], strides = [1, 1]} : vector<8x384xf32> to vector<8x128xf32>
    %66 = vector.extract_strided_slice %64 {offsets = [0, 128], sizes = [8, 128], strides = [1, 1]} : vector<8x384xf32> to vector<8x128xf32>
    %67 = vector.extract_strided_slice %64 {offsets = [0, 256], sizes = [8, 128], strides = [1, 1]} : vector<8x384xf32> to vector<8x128xf32>
    %68 = vector.extract_strided_slice %58 {offsets = [0, 384], sizes = [8, 128], strides = [1, 1]} : vector<8x512xf32> to vector<8x128xf32>
    %69 = math.tanh %68 : vector<8x128xf32>
    %70 = arith.mulf %66, %49 : vector<8x128xf32>
    %71 = arith.mulf %65, %69 : vector<8x128xf32>
    %72 = arith.addf %70, %71 : vector<8x128xf32>
    %73 = math.tanh %72 : vector<8x128xf32>
    %74 = arith.mulf %67, %73 : vector<8x128xf32>
    %c3_i32 = arith.constant 3 : i32
    %75 = arith.index_cast %c3_i32 : i32 to index
    %c0_18 = arith.constant 0 : index
    %c0_19 = arith.constant 0 : index
    %76 = vector.load %arg1[%75, %c0_18, %c0_19] : memref<8x8x512xbf16, #tpu.memory_space<vmem>>, vector<1x8x512xbf16>
    %77 = vector.shape_cast %76 : vector<1x8x512xbf16> to vector<8x512xbf16>
    %78 = arith.extf %77 : vector<8x512xbf16> to vector<8x512xf32>
    %79 = arith.truncf %74 : vector<8x128xf32> to vector<8x128xbf16>
    %cst_20 = arith.constant dense<0.000000e+00> : vector<8x512xf32>
    %80 = tpu.matmul %79, %3, %cst_20 {dimension_numbers = #tpu.dot_dimension_numbers<[1], [0], [0], [1], [0, 0, 1, 1], [], []>} : vector<8x128xbf16>, vector<128x512xbf16>, vector<8x512xf32> -> vector<8x512xf32>
    %81 = arith.addf %78, %80 : vector<8x512xf32>
    %82 = vector.extract_strided_slice %81 {offsets = [0, 0], sizes = [8, 384], strides = [1, 1]} : vector<8x512xf32> to vector<8x384xf32>
    %83 = arith.negf %82 : vector<8x384xf32>
    %84 = math.exp %83 : vector<8x384xf32>
    %cst_21 = arith.constant 1.000000e+00 : f32
    %85 = vector.broadcast %cst_21 : f32 to vector<8x384xf32>
    %86 = arith.addf %85, %84 : vector<8x384xf32>
    %87 = arith.divf %85, %86 : vector<8x384xf32>
    %88 = vector.extract_strided_slice %87 {offsets = [0, 0], sizes = [8, 128], strides = [1, 1]} : vector<8x384xf32> to vector<8x128xf32>
    %89 = vector.extract_strided_slice %87 {offsets = [0, 128], sizes = [8, 128], strides = [1, 1]} : vector<8x384xf32> to vector<8x128xf32>
    %90 = vector.extract_strided_slice %87 {offsets = [0, 256], sizes = [8, 128], strides = [1, 1]} : vector<8x384xf32> to vector<8x128xf32>
    %91 = vector.extract_strided_slice %81 {offsets = [0, 384], sizes = [8, 128], strides = [1, 1]} : vector<8x512xf32> to vector<8x128xf32>
    %92 = math.tanh %91 : vector<8x128xf32>
    %93 = arith.mulf %89, %72 : vector<8x128xf32>
    %94 = arith.mulf %88, %92 : vector<8x128xf32>
    %95 = arith.addf %93, %94 : vector<8x128xf32>
    %96 = math.tanh %95 : vector<8x128xf32>
    %97 = arith.mulf %90, %96 : vector<8x128xf32>
    %c4_i32 = arith.constant 4 : i32
    %98 = arith.index_cast %c4_i32 : i32 to index
    %c0_22 = arith.constant 0 : index
    %c0_23 = arith.constant 0 : index
    %99 = vector.load %arg1[%98, %c0_22, %c0_23] : memref<8x8x512xbf16, #tpu.memory_space<vmem>>, vector<1x8x512xbf16>
    %100 = vector.shape_cast %99 : vector<1x8x512xbf16> to vector<8x512xbf16>
    %101 = arith.extf %100 : vector<8x512xbf16> to vector<8x512xf32>
    %102 = arith.truncf %97 : vector<8x128xf32> to vector<8x128xbf16>
    %cst_24 = arith.constant dense<0.000000e+00> : vector<8x512xf32>
    %103 = tpu.matmul %102, %3, %cst_24 {dimension_numbers = #tpu.dot_dimension_numbers<[1], [0], [0], [1], [0, 0, 1, 1], [], []>} : vector<8x128xbf16>, vector<128x512xbf16>, vector<8x512xf32> -> vector<8x512xf32>
    %104 = arith.addf %101, %103 : vector<8x512xf32>
    %105 = vector.extract_strided_slice %104 {offsets = [0, 0], sizes = [8, 384], strides = [1, 1]} : vector<8x512xf32> to vector<8x384xf32>
    %106 = arith.negf %105 : vector<8x384xf32>
    %107 = math.exp %106 : vector<8x384xf32>
    %cst_25 = arith.constant 1.000000e+00 : f32
    %108 = vector.broadcast %cst_25 : f32 to vector<8x384xf32>
    %109 = arith.addf %108, %107 : vector<8x384xf32>
    %110 = arith.divf %108, %109 : vector<8x384xf32>
    %111 = vector.extract_strided_slice %110 {offsets = [0, 0], sizes = [8, 128], strides = [1, 1]} : vector<8x384xf32> to vector<8x128xf32>
    %112 = vector.extract_strided_slice %110 {offsets = [0, 128], sizes = [8, 128], strides = [1, 1]} : vector<8x384xf32> to vector<8x128xf32>
    %113 = vector.extract_strided_slice %110 {offsets = [0, 256], sizes = [8, 128], strides = [1, 1]} : vector<8x384xf32> to vector<8x128xf32>
    %114 = vector.extract_strided_slice %104 {offsets = [0, 384], sizes = [8, 128], strides = [1, 1]} : vector<8x512xf32> to vector<8x128xf32>
    %115 = math.tanh %114 : vector<8x128xf32>
    %116 = arith.mulf %112, %95 : vector<8x128xf32>
    %117 = arith.mulf %111, %115 : vector<8x128xf32>
    %118 = arith.addf %116, %117 : vector<8x128xf32>
    %119 = math.tanh %118 : vector<8x128xf32>
    %120 = arith.mulf %113, %119 : vector<8x128xf32>
    %c5_i32 = arith.constant 5 : i32
    %121 = arith.index_cast %c5_i32 : i32 to index
    %c0_26 = arith.constant 0 : index
    %c0_27 = arith.constant 0 : index
    %122 = vector.load %arg1[%121, %c0_26, %c0_27] : memref<8x8x512xbf16, #tpu.memory_space<vmem>>, vector<1x8x512xbf16>
    %123 = vector.shape_cast %122 : vector<1x8x512xbf16> to vector<8x512xbf16>
    %124 = arith.extf %123 : vector<8x512xbf16> to vector<8x512xf32>
    %125 = arith.truncf %120 : vector<8x128xf32> to vector<8x128xbf16>
    %cst_28 = arith.constant dense<0.000000e+00> : vector<8x512xf32>
    %126 = tpu.matmul %125, %3, %cst_28 {dimension_numbers = #tpu.dot_dimension_numbers<[1], [0], [0], [1], [0, 0, 1, 1], [], []>} : vector<8x128xbf16>, vector<128x512xbf16>, vector<8x512xf32> -> vector<8x512xf32>
    %127 = arith.addf %124, %126 : vector<8x512xf32>
    %128 = vector.extract_strided_slice %127 {offsets = [0, 0], sizes = [8, 384], strides = [1, 1]} : vector<8x512xf32> to vector<8x384xf32>
    %129 = arith.negf %128 : vector<8x384xf32>
    %130 = math.exp %129 : vector<8x384xf32>
    %cst_29 = arith.constant 1.000000e+00 : f32
    %131 = vector.broadcast %cst_29 : f32 to vector<8x384xf32>
    %132 = arith.addf %131, %130 : vector<8x384xf32>
    %133 = arith.divf %131, %132 : vector<8x384xf32>
    %134 = vector.extract_strided_slice %133 {offsets = [0, 0], sizes = [8, 128], strides = [1, 1]} : vector<8x384xf32> to vector<8x128xf32>
    %135 = vector.extract_strided_slice %133 {offsets = [0, 128], sizes = [8, 128], strides = [1, 1]} : vector<8x384xf32> to vector<8x128xf32>
    %136 = vector.extract_strided_slice %133 {offsets = [0, 256], sizes = [8, 128], strides = [1, 1]} : vector<8x384xf32> to vector<8x128xf32>
    %137 = vector.extract_strided_slice %127 {offsets = [0, 384], sizes = [8, 128], strides = [1, 1]} : vector<8x512xf32> to vector<8x128xf32>
    %138 = math.tanh %137 : vector<8x128xf32>
    %139 = arith.mulf %135, %118 : vector<8x128xf32>
    %140 = arith.mulf %134, %138 : vector<8x128xf32>
    %141 = arith.addf %139, %140 : vector<8x128xf32>
    %142 = math.tanh %141 : vector<8x128xf32>
    %143 = arith.mulf %136, %142 : vector<8x128xf32>
    %c6_i32 = arith.constant 6 : i32
    %144 = arith.index_cast %c6_i32 : i32 to index
    %c0_30 = arith.constant 0 : index
    %c0_31 = arith.constant 0 : index
    %145 = vector.load %arg1[%144, %c0_30, %c0_31] : memref<8x8x512xbf16, #tpu.memory_space<vmem>>, vector<1x8x512xbf16>
    %146 = vector.shape_cast %145 : vector<1x8x512xbf16> to vector<8x512xbf16>
    %147 = arith.extf %146 : vector<8x512xbf16> to vector<8x512xf32>
    %148 = arith.truncf %143 : vector<8x128xf32> to vector<8x128xbf16>
    %cst_32 = arith.constant dense<0.000000e+00> : vector<8x512xf32>
    %149 = tpu.matmul %148, %3, %cst_32 {dimension_numbers = #tpu.dot_dimension_numbers<[1], [0], [0], [1], [0, 0, 1, 1], [], []>} : vector<8x128xbf16>, vector<128x512xbf16>, vector<8x512xf32> -> vector<8x512xf32>
    %150 = arith.addf %147, %149 : vector<8x512xf32>
    %151 = vector.extract_strided_slice %150 {offsets = [0, 0], sizes = [8, 384], strides = [1, 1]} : vector<8x512xf32> to vector<8x384xf32>
    %152 = arith.negf %151 : vector<8x384xf32>
    %153 = math.exp %152 : vector<8x384xf32>
    %cst_33 = arith.constant 1.000000e+00 : f32
    %154 = vector.broadcast %cst_33 : f32 to vector<8x384xf32>
    %155 = arith.addf %154, %153 : vector<8x384xf32>
    %156 = arith.divf %154, %155 : vector<8x384xf32>
    %157 = vector.extract_strided_slice %156 {offsets = [0, 0], sizes = [8, 128], strides = [1, 1]} : vector<8x384xf32> to vector<8x128xf32>
    %158 = vector.extract_strided_slice %156 {offsets = [0, 128], sizes = [8, 128], strides = [1, 1]} : vector<8x384xf32> to vector<8x128xf32>
    %159 = vector.extract_strided_slice %156 {offsets = [0, 256], sizes = [8, 128], strides = [1, 1]} : vector<8x384xf32> to vector<8x128xf32>
    %160 = vector.extract_strided_slice %150 {offsets = [0, 384], sizes = [8, 128], strides = [1, 1]} : vector<8x512xf32> to vector<8x128xf32>
    %161 = math.tanh %160 : vector<8x128xf32>
    %162 = arith.mulf %158, %141 : vector<8x128xf32>
    %163 = arith.mulf %157, %161 : vector<8x128xf32>
    %164 = arith.addf %162, %163 : vector<8x128xf32>
    %165 = math.tanh %164 : vector<8x128xf32>
    %166 = arith.mulf %159, %165 : vector<8x128xf32>
    %c7_i32 = arith.constant 7 : i32
    %167 = arith.index_cast %c7_i32 : i32 to index
    %c0_34 = arith.constant 0 : index
    %c0_35 = arith.constant 0 : index
    %168 = vector.load %arg1[%167, %c0_34, %c0_35] : memref<8x8x512xbf16, #tpu.memory_space<vmem>>, vector<1x8x512xbf16>
    %169 = vector.shape_cast %168 : vector<1x8x512xbf16> to vector<8x512xbf16>
    %170 = arith.extf %169 : vector<8x512xbf16> to vector<8x512xf32>
    %171 = arith.truncf %166 : vector<8x128xf32> to vector<8x128xbf16>
    %cst_36 = arith.constant dense<0.000000e+00> : vector<8x512xf32>
    %172 = tpu.matmul %171, %3, %cst_36 {dimension_numbers = #tpu.dot_dimension_numbers<[1], [0], [0], [1], [0, 0, 1, 1], [], []>} : vector<8x128xbf16>, vector<128x512xbf16>, vector<8x512xf32> -> vector<8x512xf32>
    %173 = arith.addf %170, %172 : vector<8x512xf32>
    %174 = vector.extract_strided_slice %173 {offsets = [0, 0], sizes = [8, 384], strides = [1, 1]} : vector<8x512xf32> to vector<8x384xf32>
    %175 = arith.negf %174 : vector<8x384xf32>
    %176 = math.exp %175 : vector<8x384xf32>
    %cst_37 = arith.constant 1.000000e+00 : f32
    %177 = vector.broadcast %cst_37 : f32 to vector<8x384xf32>
    %178 = arith.addf %177, %176 : vector<8x384xf32>
    %179 = arith.divf %177, %178 : vector<8x384xf32>
    %180 = vector.extract_strided_slice %179 {offsets = [0, 0], sizes = [8, 128], strides = [1, 1]} : vector<8x384xf32> to vector<8x128xf32>
    %181 = vector.extract_strided_slice %179 {offsets = [0, 128], sizes = [8, 128], strides = [1, 1]} : vector<8x384xf32> to vector<8x128xf32>
    %182 = vector.extract_strided_slice %179 {offsets = [0, 256], sizes = [8, 128], strides = [1, 1]} : vector<8x384xf32> to vector<8x128xf32>
    %183 = vector.extract_strided_slice %173 {offsets = [0, 384], sizes = [8, 128], strides = [1, 1]} : vector<8x512xf32> to vector<8x128xf32>
    %184 = math.tanh %183 : vector<8x128xf32>
    %185 = arith.mulf %181, %164 : vector<8x128xf32>
    %186 = arith.mulf %180, %184 : vector<8x128xf32>
    %187 = arith.addf %185, %186 : vector<8x128xf32>
    %188 = math.tanh %187 : vector<8x128xf32>
    %189 = arith.mulf %182, %188 : vector<8x128xf32>
    %c8_i32 = arith.constant 8 : i32
    %c0_38 = arith.constant 0 : index
    %c0_39 = arith.constant 0 : index
    %190 = vector.load %arg3[%c0_38, %c0_39] : memref<8x128xf32, #tpu.memory_space<vmem>>, vector<8x128xf32>
    tpu.vector_store %arg3[%c0_38, %c0_39], %189 {strides = array<i32>} : memref<8x128xf32, #tpu.memory_space<vmem>>, vector<8x128xf32>,
    %c0_40 = arith.constant 0 : index
    %c0_41 = arith.constant 0 : index
    %191 = vector.load %arg4[%c0_40, %c0_41] : memref<8x128xf32, #tpu.memory_space<vmem>>, vector<8x128xf32>
    tpu.vector_store %arg4[%c0_40, %c0_41], %187 {strides = array<i32>} : memref<8x128xf32, #tpu.memory_space<vmem>>, vector<8x128xf32>,
    return
  }
  func.func @transform_0(%arg0: i32) -> (i32, i32, i32) {
    %c0_i32 = arith.constant 0 : i32
    %c0_i32_0 = arith.constant 0 : i32
    %c0_i32_1 = arith.constant 0 : i32
    return %arg0, %c0_i32, %c0_i32_0 : i32, i32, i32
  }
  func.func @transform_1(%arg0: i32) -> (i32, i32) {
    %c0_i32 = arith.constant 0 : i32
    %c0_i32_0 = arith.constant 0 : i32
    %c0_i32_1 = arith.constant 0 : i32
    return %c0_i32, %c0_i32_0 : i32, i32
  }
  func.func @transform_2(%arg0: i32) -> (i32, i32) {
    %c0_i32 = arith.constant 0 : i32
    %c0_i32_0 = arith.constant 0 : i32
    %c0_i32_1 = arith.constant 0 : i32
    return %c0_i32, %c0_i32_0 : i32, i32
  }
  func.func @transform_3(%arg0: i32) -> (i32, i32) {
    %c0_i32 = arith.constant 0 : i32
    %c0_i32_0 = arith.constant 0 : i32
    %c0_i32_1 = arith.constant 0 : i32
    return %c0_i32, %c0_i32_0 : i32, i32
  }
}

module attributes {stable_mosaic.version = 11 : i64} {
  func.func @_decoder_kernel(%arg0: i32, %arg1: memref<8x512xf32, #tpu.memory_space<vmem>>, %arg2: memref<8x128xf32, #tpu.memory_space<vmem>>, %arg3: memref<8x128xf32, #tpu.memory_space<vmem>>, %arg4: memref<128x512xf32, #tpu.memory_space<any>>, %arg5: memref<128x512xbf16, #tpu.memory_space<vmem>>, %arg6: memref<128x128xbf16, #tpu.memory_space<vmem>>, %arg7: memref<1x128xf32, #tpu.memory_space<vmem>>, %arg8: memref<1x8x128xf32, #tpu.memory_space<vmem>>, %arg9: memref<8x128xf32, #tpu.memory_space<vmem>>, %arg10: memref<8x128xf32, #tpu.memory_space<vmem>>, %arg11: memref<8x512xf32, #tpu.memory_space<vmem>>, %arg12: memref<8x1xi32, #tpu.memory_space<vmem>>, %arg13: memref<8x!tpu.dma_semaphore, #tpu.memory_space<semaphore_mem>>) attributes {dimension_semantics = [#tpu.dimension_semantics<arbitrary>], iteration_bounds = array<i64: 8>, scalar_prefetch = 0 : i64, scratch_operands = 5 : i64, tpu.core_type = #tpu.core_type<tc>, window_params = [{pipeline_mode = #tpu.pipeline_mode<synchronous>, transform_indices = @transform_0, window_bounds = array<i64: 8, 512>}, {pipeline_mode = #tpu.pipeline_mode<synchronous>, transform_indices = @transform_1, window_bounds = array<i64: 8, 128>}, {pipeline_mode = #tpu.pipeline_mode<synchronous>, transform_indices = @transform_2, window_bounds = array<i64: 8, 128>}, {}, {pipeline_mode = #tpu.pipeline_mode<synchronous>, transform_indices = @transform_4, window_bounds = array<i64: 128, 512>}, {pipeline_mode = #tpu.pipeline_mode<synchronous>, transform_indices = @transform_5, window_bounds = array<i64: 128, 128>}, {pipeline_mode = #tpu.pipeline_mode<synchronous>, transform_indices = @transform_6, window_bounds = array<i64: 1, 128>}, {transform_indices = @transform_7, window_bounds = array<i64: 1, 8, 128>}]} {
    %c0_i32 = arith.constant 0 : i32
    %0 = arith.cmpi eq, %arg0, %c0_i32 : i32
    %1 = arith.extui %0 : i1 to i32
    %c0_i32_0 = arith.constant 0 : i32
    %2 = arith.cmpi ne, %1, %c0_i32_0 : i32
    scf.if %2 {
      %cst = arith.constant 0.000000e+00 : f32
      %6 = vector.broadcast %cst : f32 to vector<1x8x128xf32>
      %c0 = arith.constant 0 : index
      %c0_3 = arith.constant 0 : index
      %c0_4 = arith.constant 0 : index
      %7 = vector.load %arg8[%c0, %c0_3, %c0_4] : memref<1x8x128xf32, #tpu.memory_space<vmem>>, vector<1x8x128xf32>
      tpu.vector_store %arg8[%c0, %c0_3, %c0_4], %6 {strides = array<i32>} : memref<1x8x128xf32, #tpu.memory_space<vmem>>, vector<1x8x128xf32>,
      %c0_5 = arith.constant 0 : index
      %c0_6 = arith.constant 0 : index
      %8 = vector.load %arg2[%c0_5, %c0_6] : memref<8x128xf32, #tpu.memory_space<vmem>>, vector<8x128xf32>
      %c0_7 = arith.constant 0 : index
      %c0_8 = arith.constant 0 : index
      %9 = vector.load %arg9[%c0_7, %c0_8] : memref<8x128xf32, #tpu.memory_space<vmem>>, vector<8x128xf32>
      tpu.vector_store %arg9[%c0_7, %c0_8], %8 {strides = array<i32>} : memref<8x128xf32, #tpu.memory_space<vmem>>, vector<8x128xf32>,
      %c0_9 = arith.constant 0 : index
      %c0_10 = arith.constant 0 : index
      %10 = vector.load %arg3[%c0_9, %c0_10] : memref<8x128xf32, #tpu.memory_space<vmem>>, vector<8x128xf32>
      %c0_11 = arith.constant 0 : index
      %c0_12 = arith.constant 0 : index
      %11 = vector.load %arg10[%c0_11, %c0_12] : memref<8x128xf32, #tpu.memory_space<vmem>>, vector<8x128xf32>
      tpu.vector_store %arg10[%c0_11, %c0_12], %10 {strides = array<i32>} : memref<8x128xf32, #tpu.memory_space<vmem>>, vector<8x128xf32>,
      %c0_13 = arith.constant 0 : index
      %c0_14 = arith.constant 0 : index
      %12 = vector.load %arg1[%c0_13, %c0_14] : memref<8x512xf32, #tpu.memory_space<vmem>>, vector<8x512xf32>
      %c0_15 = arith.constant 0 : index
      %c0_16 = arith.constant 0 : index
      %13 = vector.load %arg11[%c0_15, %c0_16] : memref<8x512xf32, #tpu.memory_space<vmem>>, vector<8x512xf32>
      tpu.vector_store %arg11[%c0_15, %c0_16], %12 {strides = array<i32>} : memref<8x512xf32, #tpu.memory_space<vmem>>, vector<8x512xf32>,
    } else {
    }
    %c0_i32_1 = arith.constant 0 : i32
    %3 = arith.cmpi sgt, %arg0, %c0_i32_1 : i32
    %4 = arith.extui %3 : i1 to i32
    %c0_i32_2 = arith.constant 0 : i32
    %5 = arith.cmpi ne, %4, %c0_i32_2 : i32
    scf.if %5 {
      %c0 = arith.constant 0 : index
      %c0_3 = arith.constant 0 : index
      %6 = vector.load %arg11[%c0, %c0_3] : memref<8x512xf32, #tpu.memory_space<vmem>>, vector<8x512xf32>
      %c0_4 = arith.constant 0 : index
      %c0_5 = arith.constant 0 : index
      %7 = vector.load %arg9[%c0_4, %c0_5] : memref<8x128xf32, #tpu.memory_space<vmem>>, vector<8x128xf32>
      %c0_6 = arith.constant 0 : index
      %c0_7 = arith.constant 0 : index
      %8 = vector.load %arg10[%c0_6, %c0_7] : memref<8x128xf32, #tpu.memory_space<vmem>>, vector<8x128xf32>
      %c0_8 = arith.constant 0 : index
      %c0_9 = arith.constant 0 : index
      %9 = vector.load %arg5[%c0_8, %c0_9] : memref<128x512xbf16, #tpu.memory_space<vmem>>, vector<128x512xbf16>
      %10 = arith.truncf %7 : vector<8x128xf32> to vector<8x128xbf16>
      %cst = arith.constant dense<0.000000e+00> : vector<8x512xf32>
      %11 = tpu.matmul %10, %9, %cst {dimension_numbers = #tpu.dot_dimension_numbers<[1], [0], [0], [1], [0, 0, 1, 1], [], []>} : vector<8x128xbf16>, vector<128x512xbf16>, vector<8x512xf32> -> vector<8x512xf32>
      %12 = arith.addf %6, %11 : vector<8x512xf32>
      %13 = vector.extract_strided_slice %12 {offsets = [0, 0], sizes = [8, 384], strides = [1, 1]} : vector<8x512xf32> to vector<8x384xf32>
      %14 = arith.negf %13 : vector<8x384xf32>
      %15 = math.exp %14 : vector<8x384xf32>
      %cst_10 = arith.constant 1.000000e+00 : f32
      %16 = vector.broadcast %cst_10 : f32 to vector<8x384xf32>
      %17 = arith.addf %16, %15 : vector<8x384xf32>
      %18 = arith.divf %16, %17 : vector<8x384xf32>
      %19 = vector.extract_strided_slice %18 {offsets = [0, 0], sizes = [8, 128], strides = [1, 1]} : vector<8x384xf32> to vector<8x128xf32>
      %20 = vector.extract_strided_slice %18 {offsets = [0, 128], sizes = [8, 128], strides = [1, 1]} : vector<8x384xf32> to vector<8x128xf32>
      %21 = vector.extract_strided_slice %18 {offsets = [0, 256], sizes = [8, 128], strides = [1, 1]} : vector<8x384xf32> to vector<8x128xf32>
      %22 = vector.extract_strided_slice %12 {offsets = [0, 384], sizes = [8, 128], strides = [1, 1]} : vector<8x512xf32> to vector<8x128xf32>
      %23 = math.tanh %22 : vector<8x128xf32>
      %24 = arith.mulf %20, %8 : vector<8x128xf32>
      %25 = arith.mulf %19, %23 : vector<8x128xf32>
      %26 = arith.addf %24, %25 : vector<8x128xf32>
      %27 = math.tanh %26 : vector<8x128xf32>
      %28 = arith.mulf %21, %27 : vector<8x128xf32>
      %29 = arith.truncf %28 : vector<8x128xf32> to vector<8x128xbf16>
      %c0_11 = arith.constant 0 : index
      %c0_12 = arith.constant 0 : index
      %30 = vector.load %arg6[%c0_11, %c0_12] : memref<128x128xbf16, #tpu.memory_space<vmem>>, vector<128x128xbf16>
      %cst_13 = arith.constant dense<0.000000e+00> : vector<8x128xf32>
      %31 = tpu.matmul %29, %30, %cst_13 {dimension_numbers = #tpu.dot_dimension_numbers<[1], [0], [0], [1], [0, 0, 1, 1], [], []>} : vector<8x128xbf16>, vector<128x128xbf16>, vector<8x128xf32> -> vector<8x128xf32>
      %c0_14 = arith.constant 0 : index
      %c0_15 = arith.constant 0 : index
      %32 = vector.load %arg7[%c0_14, %c0_15] : memref<1x128xf32, #tpu.memory_space<vmem>>, vector<1x128xf32>
      %33 = vector.broadcast %32 : vector<1x128xf32> to vector<8x128xf32>
      %34 = arith.addf %31, %33 : vector<8x128xf32>
      %35 = vector.shape_cast %34 : vector<8x128xf32> to vector<1x8x128xf32>
      %c0_16 = arith.constant 0 : index
      %c0_17 = arith.constant 0 : index
      %c0_18 = arith.constant 0 : index
      %36 = vector.load %arg8[%c0_16, %c0_17, %c0_18] : memref<1x8x128xf32, #tpu.memory_space<vmem>>, vector<1x8x128xf32>
      tpu.vector_store %arg8[%c0_16, %c0_17, %c0_18], %35 {strides = array<i32>} : memref<1x8x128xf32, #tpu.memory_space<vmem>>, vector<1x8x128xf32>,
      %c0_19 = arith.constant 0 : index
      %c0_20 = arith.constant 0 : index
      %37 = vector.load %arg9[%c0_19, %c0_20] : memref<8x128xf32, #tpu.memory_space<vmem>>, vector<8x128xf32>
      tpu.vector_store %arg9[%c0_19, %c0_20], %28 {strides = array<i32>} : memref<8x128xf32, #tpu.memory_space<vmem>>, vector<8x128xf32>,
      %c0_21 = arith.constant 0 : index
      %c0_22 = arith.constant 0 : index
      %38 = vector.load %arg10[%c0_21, %c0_22] : memref<8x128xf32, #tpu.memory_space<vmem>>, vector<8x128xf32>
      tpu.vector_store %arg10[%c0_21, %c0_22], %26 {strides = array<i32>} : memref<8x128xf32, #tpu.memory_space<vmem>>, vector<8x128xf32>,
      %c7_i32 = arith.constant 7 : i32
      %39 = arith.cmpi slt, %arg0, %c7_i32 : i32
      %40 = arith.extui %39 : i1 to i32
      %c0_i32_23 = arith.constant 0 : i32
      %41 = arith.cmpi ne, %40, %c0_i32_23 : i32
      scf.if %41 {
        %42 = tpu.iota {dimensions = array<i32: 1>} : vector<8x128xi32>
        %c64_i32 = arith.constant 64 : i32
        %43 = vector.broadcast %c64_i32 : i32 to vector<8x128xi32>
        %44 = arith.cmpi slt, %42, %43 : vector<8x128xi32>
        %cst_24 = arith.constant 0xFF800000 : f32
        %45 = vector.broadcast %cst_24 : f32 to vector<8x128xf32>
        %46 = arith.select %44, %34, %45 : vector<8x128xi1>, vector<8x128xf32>
        %cst_25 = arith.constant dense<0xFF800000> : vector<8xf32>
        %47 = vector.multi_reduction <maximumf>, %46, %cst_25 [1] : vector<8x128xf32> to vector<8xf32>
        %48 = vector.shape_cast %47 : vector<8xf32> to vector<8x1xf32>
        %49 = vector.broadcast %48 : vector<8x1xf32> to vector<8x128xf32>
        %50 = arith.cmpf oeq, %46, %49 : vector<8x128xf32>
        %c128_i32 = arith.constant 128 : i32
        %51 = vector.broadcast %c128_i32 : i32 to vector<8x128xi32>
        %52 = arith.select %50, %42, %51 : vector<8x128xi1>, vector<8x128xi32>
        %cst_26 = arith.constant dense<2147483647> : vector<8xi32>
        %53 = vector.multi_reduction <minsi>, %52, %cst_26 [1] : vector<8x128xi32> to vector<8xi32>
        %54 = vector.shape_cast %53 : vector<8xi32> to vector<8x1xi32>
        %c0_27 = arith.constant 0 : index
        %c0_28 = arith.constant 0 : index
        %55 = vector.load %arg12[%c0_27, %c0_28] : memref<8x1xi32, #tpu.memory_space<vmem>>, vector<8x1xi32>
        tpu.vector_store %arg12[%c0_27, %c0_28], %54 {strides = array<i32>} : memref<8x1xi32, #tpu.memory_space<vmem>>, vector<8x1xi32>,
        %c0_29 = arith.constant 0 : index
        %c0_30 = arith.constant 0 : index
        %56 = vector.load %arg12[%c0_29, %c0_30] : memref<8x1xi32, #tpu.memory_space<vmem>>, vector<1x1xi32>
        %57 = vector.extract %56[0, 0] : i32 from vector<1x1xi32>
        %c0_i32_31 = arith.constant 0 : i32
        %c0_i32_32 = arith.constant 0 : i32
        %58 = tpu.memref_slice %arg4[%57, %c0_i32_32] : memref<128x512xf32, #tpu.memory_space<any>> -> memref<1x512xf32, #tpu.memory_space<any>>
        %c0_i32_33 = arith.constant 0 : i32
        %c0_i32_34 = arith.constant 0 : i32
        %59 = tpu.memref_slice %arg11[%c0_i32_33, %c0_i32_34] : memref<8x512xf32, #tpu.memory_space<vmem>> -> memref<1x512xf32, #tpu.memory_space<vmem>>
        %60 = tpu.memref_slice %arg13[%c0_i32_31] : memref<8x!tpu.dma_semaphore, #tpu.memory_space<semaphore_mem>> -> memref<1x!tpu.dma_semaphore, #tpu.memory_space<semaphore_mem>>
        %61 = tpu.memref_squeeze %60 : memref<1x!tpu.dma_semaphore, #tpu.memory_space<semaphore_mem>> -> memref<!tpu.dma_semaphore, #tpu.memory_space<semaphore_mem>>
        tpu.enqueue_dma source(%58 : memref<1x512xf32, #tpu.memory_space<any>>) target(%59 : memref<1x512xf32, #tpu.memory_space<vmem>>) target_semaphore(%61 : memref<!tpu.dma_semaphore, #tpu.memory_space<semaphore_mem>>)
        %c1 = arith.constant 1 : index
        %c0_35 = arith.constant 0 : index
        %62 = vector.load %arg12[%c1, %c0_35] : memref<8x1xi32, #tpu.memory_space<vmem>>, vector<1x1xi32>
        %63 = vector.extract %62[0, 0] : i32 from vector<1x1xi32>
        %c1_i32 = arith.constant 1 : i32
        %c0_i32_36 = arith.constant 0 : i32
        %64 = tpu.memref_slice %arg4[%63, %c0_i32_36] : memref<128x512xf32, #tpu.memory_space<any>> -> memref<1x512xf32, #tpu.memory_space<any>>
        %c1_i32_37 = arith.constant 1 : i32
        %c0_i32_38 = arith.constant 0 : i32
        %65 = tpu.memref_slice %arg11[%c1_i32_37, %c0_i32_38] : memref<8x512xf32, #tpu.memory_space<vmem>> -> memref<1x512xf32, #tpu.memory_space<vmem>>
        %66 = tpu.memref_slice %arg13[%c1_i32] : memref<8x!tpu.dma_semaphore, #tpu.memory_space<semaphore_mem>> -> memref<1x!tpu.dma_semaphore, #tpu.memory_space<semaphore_mem>>
        %67 = tpu.memref_squeeze %66 : memref<1x!tpu.dma_semaphore, #tpu.memory_space<semaphore_mem>> -> memref<!tpu.dma_semaphore, #tpu.memory_space<semaphore_mem>>
        tpu.enqueue_dma source(%64 : memref<1x512xf32, #tpu.memory_space<any>>) target(%65 : memref<1x512xf32, #tpu.memory_space<vmem>>) target_semaphore(%67 : memref<!tpu.dma_semaphore, #tpu.memory_space<semaphore_mem>>)
        %c2 = arith.constant 2 : index
        %c0_39 = arith.constant 0 : index
        %68 = vector.load %arg12[%c2, %c0_39] : memref<8x1xi32, #tpu.memory_space<vmem>>, vector<1x1xi32>
        %69 = vector.extract %68[0, 0] : i32 from vector<1x1xi32>
        %c2_i32 = arith.constant 2 : i32
        %c0_i32_40 = arith.constant 0 : i32
        %70 = tpu.memref_slice %arg4[%69, %c0_i32_40] : memref<128x512xf32, #tpu.memory_space<any>> -> memref<1x512xf32, #tpu.memory_space<any>>
        %c2_i32_41 = arith.constant 2 : i32
        %c0_i32_42 = arith.constant 0 : i32
        %71 = tpu.memref_slice %arg11[%c2_i32_41, %c0_i32_42] : memref<8x512xf32, #tpu.memory_space<vmem>> -> memref<1x512xf32, #tpu.memory_space<vmem>>
        %72 = tpu.memref_slice %arg13[%c2_i32] : memref<8x!tpu.dma_semaphore, #tpu.memory_space<semaphore_mem>> -> memref<1x!tpu.dma_semaphore, #tpu.memory_space<semaphore_mem>>
        %73 = tpu.memref_squeeze %72 : memref<1x!tpu.dma_semaphore, #tpu.memory_space<semaphore_mem>> -> memref<!tpu.dma_semaphore, #tpu.memory_space<semaphore_mem>>
        tpu.enqueue_dma source(%70 : memref<1x512xf32, #tpu.memory_space<any>>) target(%71 : memref<1x512xf32, #tpu.memory_space<vmem>>) target_semaphore(%73 : memref<!tpu.dma_semaphore, #tpu.memory_space<semaphore_mem>>)
        %c3 = arith.constant 3 : index
        %c0_43 = arith.constant 0 : index
        %74 = vector.load %arg12[%c3, %c0_43] : memref<8x1xi32, #tpu.memory_space<vmem>>, vector<1x1xi32>
        %75 = vector.extract %74[0, 0] : i32 from vector<1x1xi32>
        %c3_i32 = arith.constant 3 : i32
        %c0_i32_44 = arith.constant 0 : i32
        %76 = tpu.memref_slice %arg4[%75, %c0_i32_44] : memref<128x512xf32, #tpu.memory_space<any>> -> memref<1x512xf32, #tpu.memory_space<any>>
        %c3_i32_45 = arith.constant 3 : i32
        %c0_i32_46 = arith.constant 0 : i32
        %77 = tpu.memref_slice %arg11[%c3_i32_45, %c0_i32_46] : memref<8x512xf32, #tpu.memory_space<vmem>> -> memref<1x512xf32, #tpu.memory_space<vmem>>
        %78 = tpu.memref_slice %arg13[%c3_i32] : memref<8x!tpu.dma_semaphore, #tpu.memory_space<semaphore_mem>> -> memref<1x!tpu.dma_semaphore, #tpu.memory_space<semaphore_mem>>
        %79 = tpu.memref_squeeze %78 : memref<1x!tpu.dma_semaphore, #tpu.memory_space<semaphore_mem>> -> memref<!tpu.dma_semaphore, #tpu.memory_space<semaphore_mem>>
        tpu.enqueue_dma source(%76 : memref<1x512xf32, #tpu.memory_space<any>>) target(%77 : memref<1x512xf32, #tpu.memory_space<vmem>>) target_semaphore(%79 : memref<!tpu.dma_semaphore, #tpu.memory_space<semaphore_mem>>)
        %c4 = arith.constant 4 : index
        %c0_47 = arith.constant 0 : index
        %80 = vector.load %arg12[%c4, %c0_47] : memref<8x1xi32, #tpu.memory_space<vmem>>, vector<1x1xi32>
        %81 = vector.extract %80[0, 0] : i32 from vector<1x1xi32>
        %c4_i32 = arith.constant 4 : i32
        %c0_i32_48 = arith.constant 0 : i32
        %82 = tpu.memref_slice %arg4[%81, %c0_i32_48] : memref<128x512xf32, #tpu.memory_space<any>> -> memref<1x512xf32, #tpu.memory_space<any>>
        %c4_i32_49 = arith.constant 4 : i32
        %c0_i32_50 = arith.constant 0 : i32
        %83 = tpu.memref_slice %arg11[%c4_i32_49, %c0_i32_50] : memref<8x512xf32, #tpu.memory_space<vmem>> -> memref<1x512xf32, #tpu.memory_space<vmem>>
        %84 = tpu.memref_slice %arg13[%c4_i32] : memref<8x!tpu.dma_semaphore, #tpu.memory_space<semaphore_mem>> -> memref<1x!tpu.dma_semaphore, #tpu.memory_space<semaphore_mem>>
        %85 = tpu.memref_squeeze %84 : memref<1x!tpu.dma_semaphore, #tpu.memory_space<semaphore_mem>> -> memref<!tpu.dma_semaphore, #tpu.memory_space<semaphore_mem>>
        tpu.enqueue_dma source(%82 : memref<1x512xf32, #tpu.memory_space<any>>) target(%83 : memref<1x512xf32, #tpu.memory_space<vmem>>) target_semaphore(%85 : memref<!tpu.dma_semaphore, #tpu.memory_space<semaphore_mem>>)
        %c5 = arith.constant 5 : index
        %c0_51 = arith.constant 0 : index
        %86 = vector.load %arg12[%c5, %c0_51] : memref<8x1xi32, #tpu.memory_space<vmem>>, vector<1x1xi32>
        %87 = vector.extract %86[0, 0] : i32 from vector<1x1xi32>
        %c5_i32 = arith.constant 5 : i32
        %c0_i32_52 = arith.constant 0 : i32
        %88 = tpu.memref_slice %arg4[%87, %c0_i32_52] : memref<128x512xf32, #tpu.memory_space<any>> -> memref<1x512xf32, #tpu.memory_space<any>>
        %c5_i32_53 = arith.constant 5 : i32
        %c0_i32_54 = arith.constant 0 : i32
        %89 = tpu.memref_slice %arg11[%c5_i32_53, %c0_i32_54] : memref<8x512xf32, #tpu.memory_space<vmem>> -> memref<1x512xf32, #tpu.memory_space<vmem>>
        %90 = tpu.memref_slice %arg13[%c5_i32] : memref<8x!tpu.dma_semaphore, #tpu.memory_space<semaphore_mem>> -> memref<1x!tpu.dma_semaphore, #tpu.memory_space<semaphore_mem>>
        %91 = tpu.memref_squeeze %90 : memref<1x!tpu.dma_semaphore, #tpu.memory_space<semaphore_mem>> -> memref<!tpu.dma_semaphore, #tpu.memory_space<semaphore_mem>>
        tpu.enqueue_dma source(%88 : memref<1x512xf32, #tpu.memory_space<any>>) target(%89 : memref<1x512xf32, #tpu.memory_space<vmem>>) target_semaphore(%91 : memref<!tpu.dma_semaphore, #tpu.memory_space<semaphore_mem>>)
        %c6 = arith.constant 6 : index
        %c0_55 = arith.constant 0 : index
        %92 = vector.load %arg12[%c6, %c0_55] : memref<8x1xi32, #tpu.memory_space<vmem>>, vector<1x1xi32>
        %93 = vector.extract %92[0, 0] : i32 from vector<1x1xi32>
        %c6_i32 = arith.constant 6 : i32
        %c0_i32_56 = arith.constant 0 : i32
        %94 = tpu.memref_slice %arg4[%93, %c0_i32_56] : memref<128x512xf32, #tpu.memory_space<any>> -> memref<1x512xf32, #tpu.memory_space<any>>
        %c6_i32_57 = arith.constant 6 : i32
        %c0_i32_58 = arith.constant 0 : i32
        %95 = tpu.memref_slice %arg11[%c6_i32_57, %c0_i32_58] : memref<8x512xf32, #tpu.memory_space<vmem>> -> memref<1x512xf32, #tpu.memory_space<vmem>>
        %96 = tpu.memref_slice %arg13[%c6_i32] : memref<8x!tpu.dma_semaphore, #tpu.memory_space<semaphore_mem>> -> memref<1x!tpu.dma_semaphore, #tpu.memory_space<semaphore_mem>>
        %97 = tpu.memref_squeeze %96 : memref<1x!tpu.dma_semaphore, #tpu.memory_space<semaphore_mem>> -> memref<!tpu.dma_semaphore, #tpu.memory_space<semaphore_mem>>
        tpu.enqueue_dma source(%94 : memref<1x512xf32, #tpu.memory_space<any>>) target(%95 : memref<1x512xf32, #tpu.memory_space<vmem>>) target_semaphore(%97 : memref<!tpu.dma_semaphore, #tpu.memory_space<semaphore_mem>>)
        %c7 = arith.constant 7 : index
        %c0_59 = arith.constant 0 : index
        %98 = vector.load %arg12[%c7, %c0_59] : memref<8x1xi32, #tpu.memory_space<vmem>>, vector<1x1xi32>
        %99 = vector.extract %98[0, 0] : i32 from vector<1x1xi32>
        %c7_i32_60 = arith.constant 7 : i32
        %c0_i32_61 = arith.constant 0 : i32
        %100 = tpu.memref_slice %arg4[%99, %c0_i32_61] : memref<128x512xf32, #tpu.memory_space<any>> -> memref<1x512xf32, #tpu.memory_space<any>>
        %c7_i32_62 = arith.constant 7 : i32
        %c0_i32_63 = arith.constant 0 : i32
        %101 = tpu.memref_slice %arg11[%c7_i32_62, %c0_i32_63] : memref<8x512xf32, #tpu.memory_space<vmem>> -> memref<1x512xf32, #tpu.memory_space<vmem>>
        %102 = tpu.memref_slice %arg13[%c7_i32_60] : memref<8x!tpu.dma_semaphore, #tpu.memory_space<semaphore_mem>> -> memref<1x!tpu.dma_semaphore, #tpu.memory_space<semaphore_mem>>
        %103 = tpu.memref_squeeze %102 : memref<1x!tpu.dma_semaphore, #tpu.memory_space<semaphore_mem>> -> memref<!tpu.dma_semaphore, #tpu.memory_space<semaphore_mem>>
        tpu.enqueue_dma source(%100 : memref<1x512xf32, #tpu.memory_space<any>>) target(%101 : memref<1x512xf32, #tpu.memory_space<vmem>>) target_semaphore(%103 : memref<!tpu.dma_semaphore, #tpu.memory_space<semaphore_mem>>)
        %c0_i32_64 = arith.constant 0 : i32
        %c0_i32_65 = arith.constant 0 : i32
        %104 = tpu.memref_slice %arg4[%57, %c0_i32_65] : memref<128x512xf32, #tpu.memory_space<any>> -> memref<1x512xf32, #tpu.memory_space<any>>
        %c0_i32_66 = arith.constant 0 : i32
        %c0_i32_67 = arith.constant 0 : i32
        %105 = tpu.memref_slice %arg11[%c0_i32_66, %c0_i32_67] : memref<8x512xf32, #tpu.memory_space<vmem>> -> memref<1x512xf32, #tpu.memory_space<vmem>>
        %106 = tpu.memref_slice %arg13[%c0_i32_64] : memref<8x!tpu.dma_semaphore, #tpu.memory_space<semaphore_mem>> -> memref<1x!tpu.dma_semaphore, #tpu.memory_space<semaphore_mem>>
        %107 = tpu.memref_squeeze %106 : memref<1x!tpu.dma_semaphore, #tpu.memory_space<semaphore_mem>> -> memref<!tpu.dma_semaphore, #tpu.memory_space<semaphore_mem>>
        tpu.wait_dma2 semaphore(%107 : memref<!tpu.dma_semaphore, #tpu.memory_space<semaphore_mem>>) src(%104 : memref<1x512xf32, #tpu.memory_space<any>>) dst(%105 : memref<1x512xf32, #tpu.memory_space<vmem>>)
        %c1_i32_68 = arith.constant 1 : i32
        %c0_i32_69 = arith.constant 0 : i32
        %108 = tpu.memref_slice %arg4[%63, %c0_i32_69] : memref<128x512xf32, #tpu.memory_space<any>> -> memref<1x512xf32, #tpu.memory_space<any>>
        %c1_i32_70 = arith.constant 1 : i32
        %c0_i32_71 = arith.constant 0 : i32
        %109 = tpu.memref_slice %arg11[%c1_i32_70, %c0_i32_71] : memref<8x512xf32, #tpu.memory_space<vmem>> -> memref<1x512xf32, #tpu.memory_space<vmem>>
        %110 = tpu.memref_slice %arg13[%c1_i32_68] : memref<8x!tpu.dma_semaphore, #tpu.memory_space<semaphore_mem>> -> memref<1x!tpu.dma_semaphore, #tpu.memory_space<semaphore_mem>>
        %111 = tpu.memref_squeeze %110 : memref<1x!tpu.dma_semaphore, #tpu.memory_space<semaphore_mem>> -> memref<!tpu.dma_semaphore, #tpu.memory_space<semaphore_mem>>
        tpu.wait_dma2 semaphore(%111 : memref<!tpu.dma_semaphore, #tpu.memory_space<semaphore_mem>>) src(%108 : memref<1x512xf32, #tpu.memory_space<any>>) dst(%109 : memref<1x512xf32, #tpu.memory_space<vmem>>)
        %c2_i32_72 = arith.constant 2 : i32
        %c0_i32_73 = arith.constant 0 : i32
        %112 = tpu.memref_slice %arg4[%69, %c0_i32_73] : memref<128x512xf32, #tpu.memory_space<any>> -> memref<1x512xf32, #tpu.memory_space<any>>
        %c2_i32_74 = arith.constant 2 : i32
        %c0_i32_75 = arith.constant 0 : i32
        %113 = tpu.memref_slice %arg11[%c2_i32_74, %c0_i32_75] : memref<8x512xf32, #tpu.memory_space<vmem>> -> memref<1x512xf32, #tpu.memory_space<vmem>>
        %114 = tpu.memref_slice %arg13[%c2_i32_72] : memref<8x!tpu.dma_semaphore, #tpu.memory_space<semaphore_mem>> -> memref<1x!tpu.dma_semaphore, #tpu.memory_space<semaphore_mem>>
        %115 = tpu.memref_squeeze %114 : memref<1x!tpu.dma_semaphore, #tpu.memory_space<semaphore_mem>> -> memref<!tpu.dma_semaphore, #tpu.memory_space<semaphore_mem>>
        tpu.wait_dma2 semaphore(%115 : memref<!tpu.dma_semaphore, #tpu.memory_space<semaphore_mem>>) src(%112 : memref<1x512xf32, #tpu.memory_space<any>>) dst(%113 : memref<1x512xf32, #tpu.memory_space<vmem>>)
        %c3_i32_76 = arith.constant 3 : i32
        %c0_i32_77 = arith.constant 0 : i32
        %116 = tpu.memref_slice %arg4[%75, %c0_i32_77] : memref<128x512xf32, #tpu.memory_space<any>> -> memref<1x512xf32, #tpu.memory_space<any>>
        %c3_i32_78 = arith.constant 3 : i32
        %c0_i32_79 = arith.constant 0 : i32
        %117 = tpu.memref_slice %arg11[%c3_i32_78, %c0_i32_79] : memref<8x512xf32, #tpu.memory_space<vmem>> -> memref<1x512xf32, #tpu.memory_space<vmem>>
        %118 = tpu.memref_slice %arg13[%c3_i32_76] : memref<8x!tpu.dma_semaphore, #tpu.memory_space<semaphore_mem>> -> memref<1x!tpu.dma_semaphore, #tpu.memory_space<semaphore_mem>>
        %119 = tpu.memref_squeeze %118 : memref<1x!tpu.dma_semaphore, #tpu.memory_space<semaphore_mem>> -> memref<!tpu.dma_semaphore, #tpu.memory_space<semaphore_mem>>
        tpu.wait_dma2 semaphore(%119 : memref<!tpu.dma_semaphore, #tpu.memory_space<semaphore_mem>>) src(%116 : memref<1x512xf32, #tpu.memory_space<any>>) dst(%117 : memref<1x512xf32, #tpu.memory_space<vmem>>)
        %c4_i32_80 = arith.constant 4 : i32
        %c0_i32_81 = arith.constant 0 : i32
        %120 = tpu.memref_slice %arg4[%81, %c0_i32_81] : memref<128x512xf32, #tpu.memory_space<any>> -> memref<1x512xf32, #tpu.memory_space<any>>
        %c4_i32_82 = arith.constant 4 : i32
        %c0_i32_83 = arith.constant 0 : i32
        %121 = tpu.memref_slice %arg11[%c4_i32_82, %c0_i32_83] : memref<8x512xf32, #tpu.memory_space<vmem>> -> memref<1x512xf32, #tpu.memory_space<vmem>>
        %122 = tpu.memref_slice %arg13[%c4_i32_80] : memref<8x!tpu.dma_semaphore, #tpu.memory_space<semaphore_mem>> -> memref<1x!tpu.dma_semaphore, #tpu.memory_space<semaphore_mem>>
        %123 = tpu.memref_squeeze %122 : memref<1x!tpu.dma_semaphore, #tpu.memory_space<semaphore_mem>> -> memref<!tpu.dma_semaphore, #tpu.memory_space<semaphore_mem>>
        tpu.wait_dma2 semaphore(%123 : memref<!tpu.dma_semaphore, #tpu.memory_space<semaphore_mem>>) src(%120 : memref<1x512xf32, #tpu.memory_space<any>>) dst(%121 : memref<1x512xf32, #tpu.memory_space<vmem>>)
        %c5_i32_84 = arith.constant 5 : i32
        %c0_i32_85 = arith.constant 0 : i32
        %124 = tpu.memref_slice %arg4[%87, %c0_i32_85] : memref<128x512xf32, #tpu.memory_space<any>> -> memref<1x512xf32, #tpu.memory_space<any>>
        %c5_i32_86 = arith.constant 5 : i32
        %c0_i32_87 = arith.constant 0 : i32
        %125 = tpu.memref_slice %arg11[%c5_i32_86, %c0_i32_87] : memref<8x512xf32, #tpu.memory_space<vmem>> -> memref<1x512xf32, #tpu.memory_space<vmem>>
        %126 = tpu.memref_slice %arg13[%c5_i32_84] : memref<8x!tpu.dma_semaphore, #tpu.memory_space<semaphore_mem>> -> memref<1x!tpu.dma_semaphore, #tpu.memory_space<semaphore_mem>>
        %127 = tpu.memref_squeeze %126 : memref<1x!tpu.dma_semaphore, #tpu.memory_space<semaphore_mem>> -> memref<!tpu.dma_semaphore, #tpu.memory_space<semaphore_mem>>
        tpu.wait_dma2 semaphore(%127 : memref<!tpu.dma_semaphore, #tpu.memory_space<semaphore_mem>>) src(%124 : memref<1x512xf32, #tpu.memory_space<any>>) dst(%125 : memref<1x512xf32, #tpu.memory_space<vmem>>)
        %c6_i32_88 = arith.constant 6 : i32
        %c0_i32_89 = arith.constant 0 : i32
        %128 = tpu.memref_slice %arg4[%93, %c0_i32_89] : memref<128x512xf32, #tpu.memory_space<any>> -> memref<1x512xf32, #tpu.memory_space<any>>
        %c6_i32_90 = arith.constant 6 : i32
        %c0_i32_91 = arith.constant 0 : i32
        %129 = tpu.memref_slice %arg11[%c6_i32_90, %c0_i32_91] : memref<8x512xf32, #tpu.memory_space<vmem>> -> memref<1x512xf32, #tpu.memory_space<vmem>>
        %130 = tpu.memref_slice %arg13[%c6_i32_88] : memref<8x!tpu.dma_semaphore, #tpu.memory_space<semaphore_mem>> -> memref<1x!tpu.dma_semaphore, #tpu.memory_space<semaphore_mem>>
        %131 = tpu.memref_squeeze %130 : memref<1x!tpu.dma_semaphore, #tpu.memory_space<semaphore_mem>> -> memref<!tpu.dma_semaphore, #tpu.memory_space<semaphore_mem>>
        tpu.wait_dma2 semaphore(%131 : memref<!tpu.dma_semaphore, #tpu.memory_space<semaphore_mem>>) src(%128 : memref<1x512xf32, #tpu.memory_space<any>>) dst(%129 : memref<1x512xf32, #tpu.memory_space<vmem>>)
        %c7_i32_92 = arith.constant 7 : i32
        %c0_i32_93 = arith.constant 0 : i32
        %132 = tpu.memref_slice %arg4[%99, %c0_i32_93] : memref<128x512xf32, #tpu.memory_space<any>> -> memref<1x512xf32, #tpu.memory_space<any>>
        %c7_i32_94 = arith.constant 7 : i32
        %c0_i32_95 = arith.constant 0 : i32
        %133 = tpu.memref_slice %arg11[%c7_i32_94, %c0_i32_95] : memref<8x512xf32, #tpu.memory_space<vmem>> -> memref<1x512xf32, #tpu.memory_space<vmem>>
        %134 = tpu.memref_slice %arg13[%c7_i32_92] : memref<8x!tpu.dma_semaphore, #tpu.memory_space<semaphore_mem>> -> memref<1x!tpu.dma_semaphore, #tpu.memory_space<semaphore_mem>>
        %135 = tpu.memref_squeeze %134 : memref<1x!tpu.dma_semaphore, #tpu.memory_space<semaphore_mem>> -> memref<!tpu.dma_semaphore, #tpu.memory_space<semaphore_mem>>
        tpu.wait_dma2 semaphore(%135 : memref<!tpu.dma_semaphore, #tpu.memory_space<semaphore_mem>>) src(%132 : memref<1x512xf32, #tpu.memory_space<any>>) dst(%133 : memref<1x512xf32, #tpu.memory_space<vmem>>)
      } else {
      }
    } else {
    }
    return
  }
  func.func @transform_0(%arg0: i32) -> (i32, i32) {
    %c0_i32 = arith.constant 0 : i32
    %c0_i32_0 = arith.constant 0 : i32
    %c0_i32_1 = arith.constant 0 : i32
    return %c0_i32, %c0_i32_0 : i32, i32
  }
  func.func @transform_1(%arg0: i32) -> (i32, i32) {
    %c0_i32 = arith.constant 0 : i32
    %c0_i32_0 = arith.constant 0 : i32
    %c0_i32_1 = arith.constant 0 : i32
    return %c0_i32, %c0_i32_0 : i32, i32
  }
  func.func @transform_2(%arg0: i32) -> (i32, i32) {
    %c0_i32 = arith.constant 0 : i32
    %c0_i32_0 = arith.constant 0 : i32
    %c0_i32_1 = arith.constant 0 : i32
    return %c0_i32, %c0_i32_0 : i32, i32
  }
  func.func @transform_4(%arg0: i32) -> (i32, i32) {
    %c0_i32 = arith.constant 0 : i32
    %c0_i32_0 = arith.constant 0 : i32
    %c0_i32_1 = arith.constant 0 : i32
    return %c0_i32, %c0_i32_0 : i32, i32
  }
  func.func @transform_5(%arg0: i32) -> (i32, i32) {
    %c0_i32 = arith.constant 0 : i32
    %c0_i32_0 = arith.constant 0 : i32
    %c0_i32_1 = arith.constant 0 : i32
    return %c0_i32, %c0_i32_0 : i32, i32
  }
  func.func @transform_6(%arg0: i32) -> (i32, i32) {
    %c0_i32 = arith.constant 0 : i32
    %c0_i32_0 = arith.constant 0 : i32
    %c0_i32_1 = arith.constant 0 : i32
    return %c0_i32, %c0_i32_0 : i32, i32
  }
  func.func @transform_7(%arg0: i32) -> (i32, i32, i32) {
    %c0_i32 = arith.constant 0 : i32
    %c0_i32_0 = arith.constant 0 : i32
    %c0_i32_1 = arith.constant 0 : i32
    return %arg0, %c0_i32, %c0_i32_0 : i32, i32, i32
  }
}

</mosaic_0001>

<llo_original>
// kernel: seq2seq_forward.2
$region0: #{seq2seq_forward.2}
  #allocation0 [shape = 'u32[]', space=smem, size = 0x4, offset = 0x4, fixed_abs, tag = 'smem constant byte address 0x4 - core index']
  #allocation1 [shape = 'u32[144,128]{1,0:T(1,128)}', space=vmem, size = 0x12000, scoped, tag = 'internal scratch']
  %s0 = inlined_call_operand.vmem [shape: bf16[8,8,512], index: 0, kind: input, shape index: {}]
  %s1 = inlined_call_operand.vmem [shape: bf16[128,512], index: 1, kind: input, shape index: {}]
  %s2 = inlined_call_operand.vmem [shape: f32[8,128], index: 2, kind: output, shape index: {0}]
  %s3 = inlined_call_operand.vmem [shape: f32[8,128], index: 3, kind: output, shape index: {1}]
  %4 = xla_tuple %s2, %s3
  %s5 = sld [smem:[#allocation0]]
  $region30: #{seq2seq_forward.2} parent=0
    _
  %s7 = ssub.s32 1, %s5
  %s8 = scalar_select 0, %s7, %s5
  // Predicated region
  $region2: #{seq2seq_forward.2} parent=0 // pred_check
    _
  $region3: #{seq2seq_forward.2} parent=0 // pred_check_branch
    %10 = sbr.rel (0) target = $region5
  $region4: #{seq2seq_forward.2} parent=0 // pred_region
    _
  $region5: #{seq2seq_forward.2} parent=0 // pred_fallthru
    _
  // Predicated region
  $region6: #{seq2seq_forward.2} parent=0 // pred_check
    _
  $region7: #{seq2seq_forward.2} parent=0 // pred_check_branch
    %12 = sbr.rel (0) target = $region9
  $region8: #{seq2seq_forward.2} parent=0 // pred_region
    _
  $region9: #{seq2seq_forward.2} parent=0 // pred_fallthru
    _
  %p14 = scmp.eq.s32.totalorder 0, 0
  // Predicated region
  $region10: #{seq2seq_forward.2} parent=0 // pred_check
    %p15 = pneg %p14
  $region11: #{seq2seq_forward.2} parent=0 // pred_check_branch
    %17 = sbr.rel (%p15) target = $region13
  $region12: #{seq2seq_forward.2} parent=0 // pred_region
    %18 = vst [vmem:[%s2] sm:$0xff] 0.0
    %19 = vst [vmem:[%s3] sm:$0xff] 0.0
  $region13: #{seq2seq_forward.2} parent=0 // pred_fallthru
    _
  %v20 = vld [vmem:[%s1] sm:$0xff]
  %v21 = vld [vmem:[%s1 + $0x8] sm:$0xff]
  %v22 = vld [vmem:[%s1 + $0x10] sm:$0xff]
  %v23 = vld [vmem:[%s1 + $0x18] sm:$0xff]
  %v24 = vld [vmem:[%s1 + $0x20] sm:$0xff]
  %v25 = vld [vmem:[%s1 + $0x28] sm:$0xff]
  %v26 = vld [vmem:[%s1 + $0x30] sm:$0xff]
  %v27 = vld [vmem:[%s1 + $0x38] sm:$0xff]
  %v28 = vld [vmem:[%s1 + $0x40] sm:$0xff]
  %v29 = vld [vmem:[%s1 + $0x48] sm:$0xff]
  %v30 = vld [vmem:[%s1 + $0x50] sm:$0xff]
  %v31 = vld [vmem:[%s1 + $0x58] sm:$0xff]
  %v32 = vld [vmem:[%s1 + $0x60] sm:$0xff]
  %v33 = vld [vmem:[%s1 + $0x68] sm:$0xff]
  %v34 = vld [vmem:[%s1 + $0x70] sm:$0xff]
  %v35 = vld [vmem:[%s1 + $0x78] sm:$0xff]
  %v36 = vld [vmem:[%s1 + $0x80] sm:$0xff]
  %v37 = vld [vmem:[%s1 + $0x88] sm:$0xff]
  %v38 = vld [vmem:[%s1 + $0x90] sm:$0xff]
  %v39 = vld [vmem:[%s1 + $0x98] sm:$0xff]
  %v40 = vld [vmem:[%s1 + $0xa0] sm:$0xff]
  %v41 = vld [vmem:[%s1 + $0xa8] sm:$0xff]
  %v42 = vld [vmem:[%s1 + $0xb0] sm:$0xff]
  %v43 = vld [vmem:[%s1 + $0xb8] sm:$0xff]
  %v44 = vld [vmem:[%s1 + $0xc0] sm:$0xff]
  %v45 = vld [vmem:[%s1 + $0xc8] sm:$0xff]
  %v46 = vld [vmem:[%s1 + $0xd0] sm:$0xff]
  %v47 = vld [vmem:[%s1 + $0xd8] sm:$0xff]
  %v48 = vld [vmem:[%s1 + $0xe0] sm:$0xff]
  %v49 = vld [vmem:[%s1 + $0xe8] sm:$0xff]
  %v50 = vld [vmem:[%s1 + $0xf0] sm:$0xff]
  %v51 = vld [vmem:[%s1 + $0xf8] sm:$0xff]
  %v52 = vld [vmem:[%s2] sm:$0xff]
  %v53 = vld [vmem:[%s3] sm:$0xff]
  %v54 = vld [vmem:[%s0] sm:$0xff]
  %v55 = vld [vmem:[%s0 + $0x8] sm:$0xff]
  %v56 = vunpack.c.l.bf16 %v54
  %v57 = vunpack.c.h.bf16 %v54
  %v58 = vunpack.c.l.bf16 %v55
  %v59 = vunpack.c.h.bf16 %v55
  %v60 = vpack.c.bf16 %v52, %v52
  %v93 = vunpack.c.l.b16 %v20
  %v94 = vunpack.c.h.b16 %v20
  %v95 = vunpack.c.l.b16 %v21
  %v96 = vunpack.c.h.b16 %v21
  %v97 = vunpack.c.l.b16 %v22
  %v98 = vunpack.c.h.b16 %v22
  %v99 = vunpack.c.l.b16 %v23
  %v100 = vunpack.c.h.b16 %v23
  %v101 = vunpack.c.l.b16 %v24
  %v102 = vunpack.c.h.b16 %v24
  %v103 = vunpack.c.l.b16 %v25
  %v104 = vunpack.c.h.b16 %v25
  %v105 = vunpack.c.l.b16 %v26
  %v106 = vunpack.c.h.b16 %v26
  %v107 = vunpack.c.l.b16 %v27
  %v108 = vunpack.c.h.b16 %v27
  %v109 = vunpack.c.l.b16 %v28
  %v110 = vunpack.c.h.b16 %v28
  %v111 = vunpack.c.l.b16 %v29
  %v112 = vunpack.c.h.b16 %v29
  %v113 = vunpack.c.l.b16 %v30
  %v114 = vunpack.c.h.b16 %v30
  %v115 = vunpack.c.l.b16 %v31
  %v116 = vunpack.c.h.b16 %v31
  %v117 = vunpack.c.l.b16 %v32
  %v118 = vunpack.c.h.b16 %v32
  %v119 = vunpack.c.l.b16 %v33
  %v120 = vunpack.c.h.b16 %v33
  %v121 = vunpack.c.l.b16 %v34
  %v122 = vunpack.c.h.b16 %v34
  %v123 = vunpack.c.l.b16 %v35
  %v124 = vunpack.c.h.b16 %v35
  %v125 = vunpack.c.l.b16 %v36
  %v126 = vunpack.c.h.b16 %v36
  %v127 = vunpack.c.l.b16 %v37
  %v128 = vunpack.c.h.b16 %v37
  %v129 = vunpack.c.l.b16 %v38
  %v130 = vunpack.c.h.b16 %v38
  %v131 = vunpack.c.l.b16 %v39
  %v132 = vunpack.c.h.b16 %v39
  %v133 = vunpack.c.l.b16 %v40
  %v134 = vunpack.c.h.b16 %v40
  %v135 = vunpack.c.l.b16 %v41
  %v136 = vunpack.c.h.b16 %v41
  %v137 = vunpack.c.l.b16 %v42
  %v138 = vunpack.c.h.b16 %v42
  %v139 = vunpack.c.l.b16 %v43
  %v140 = vunpack.c.h.b16 %v43
  %v141 = vunpack.c.l.b16 %v44
  %v142 = vunpack.c.h.b16 %v44
  %v143 = vunpack.c.l.b16 %v45
  %v144 = vunpack.c.h.b16 %v45
  %v145 = vunpack.c.l.b16 %v46
  %v146 = vunpack.c.h.b16 %v46
  %v147 = vunpack.c.l.b16 %v47
  %v148 = vunpack.c.h.b16 %v47
  %v149 = vunpack.c.l.b16 %v48
  %v150 = vunpack.c.h.b16 %v48
  %v151 = vunpack.c.l.b16 %v49
  %v152 = vunpack.c.h.b16 %v49
  %v153 = vunpack.c.l.b16 %v50
  %v154 = vunpack.c.h.b16 %v50
  %v155 = vunpack.c.l.b16 %v51
  %v156 = vunpack.c.h.b16 %v51
  %v157 = vpack.c.b16 %v97, %v93
  %v158 = vpack.c.b16 %v98, %v94
  %v159 = vpack.c.b16 %v99, %v95
  %v160 = vpack.c.b16 %v100, %v96
  %v161 = vpack.c.b16 %v105, %v101
  %v162 = vpack.c.b16 %v106, %v102
  %v163 = vpack.c.b16 %v107, %v103
  %v164 = vpack.c.b16 %v108, %v104
  %v165 = vpack.c.b16 %v113, %v109
  %v166 = vpack.c.b16 %v114, %v110
  %v167 = vpack.c.b16 %v115, %v111
  %v168 = vpack.c.b16 %v116, %v112
  %v169 = vpack.c.b16 %v121, %v117
  %v170 = vpack.c.b16 %v122, %v118
  %v171 = vpack.c.b16 %v123, %v119
  %v172 = vpack.c.b16 %v124, %v120
  %v173 = vpack.c.b16 %v129, %v125
  %v174 = vpack.c.b16 %v130, %v126
  %v175 = vpack.c.b16 %v131, %v127
  %v176 = vpack.c.b16 %v132, %v128
  %v177 = vpack.c.b16 %v137, %v133
  %v178 = vpack.c.b16 %v138, %v134
  %v179 = vpack.c.b16 %v139, %v135
  %v180 = vpack.c.b16 %v140, %v136
  %v181 = vpack.c.b16 %v145, %v141
  %v182 = vpack.c.b16 %v146, %v142
  %v183 = vpack.c.b16 %v147, %v143
  %v184 = vpack.c.b16 %v148, %v144
  %v185 = vpack.c.b16 %v153, %v149
  %v186 = vpack.c.b16 %v154, %v150
  %v187 = vpack.c.b16 %v155, %v151
  %v188 = vpack.c.b16 %v156, %v152
  %221 = vmatprep.subr.bf16.mxu0 %v158
  %222 = vmatpush1.bf16.msra.mxu0 %v157
  %223 = vmatprep.subr.bf16.mxu0 %v162
  %224 = vmatpush1.bf16.msra.mxu0 %v161
  %225 = vmatprep.subr.bf16.mxu0 %v166
  %226 = vmatpush1.bf16.msra.mxu0 %v165
  %227 = vmatprep.subr.bf16.mxu0 %v170
  %228 = vmatpush1.bf16.msra.mxu0 %v169
  %229 = vmatprep.subr.bf16.mxu0 %v174
  %230 = vmatpush1.bf16.msra.mxu0 %v173
  %231 = vmatprep.subr.bf16.mxu0 %v178
  %232 = vmatpush1.bf16.msra.mxu0 %v177
  %233 = vmatprep.subr.bf16.mxu0 %v182
  %234 = vmatpush1.bf16.msra.mxu0 %v181
  %235 = vmatprep.subr.bf16.mxu0 %v186
  %236 = vmatpush1.bf16.msra.mxu0 %v185
  %237 = vmatprep.subr.bf16.mxu0 0
  %238 = vmatpush1.bf16.msra.mxu0 0
  %239 = vmatprep.subr.bf16.mxu0 0
  %240 = vmatpush1.bf16.msra.mxu0 0
  %241 = vmatprep.subr.bf16.mxu0 0
  %242 = vmatpush1.bf16.msra.mxu0 0
  %243 = vmatprep.subr.bf16.mxu0 0
  %244 = vmatpush1.bf16.msra.mxu0 0
  %245 = vmatprep.subr.bf16.mxu0 0
  %246 = vmatpush1.bf16.msra.mxu0 0
  %247 = vmatprep.subr.bf16.mxu0 0
  %248 = vmatpush1.bf16.msra.mxu0 0
  %249 = vmatprep.subr.bf16.mxu0 0
  %250 = vmatpush1.bf16.msra.mxu0 0
  %251 = vmatprep.subr.bf16.mxu0 0
  %252 = vmatpush1.bf16.msra.mxu0 0
  %253 = vmatprep.mubr.bf16.mxu0 0
  %254 = vmatmul.mubr.bf16.gmra.mrb[0].mxu0 %v60
  %v255 = vpop.f32.mrb[0].mxu0
  %v256 = vadd.f32 0.0, %v255
  %v257 = vpop.f32.mrb[0].mxu0
  %v258 = vadd.f32 0.0, %v257
  %v259 = vpop.f32.mrb[0].mxu0
  %v260 = vpop.f32.mrb[0].mxu0
  %261 = vdwg.mxu0
  %262 = vmatprep.subr.bf16.mxu0 %v160
  %263 = vmatpush1.bf16.msra.mxu0 %v159
  %264 = vmatprep.subr.bf16.mxu0 %v164
  %265 = vmatpush1.bf16.msra.mxu0 %v163
  %266 = vmatprep.subr.bf16.mxu0 %v168
  %267 = vmatpush1.bf16.msra.mxu0 %v167
  %268 = vmatprep.subr.bf16.mxu0 %v172
  %269 = vmatpush1.bf16.msra.mxu0 %v171
  %270 = vmatprep.subr.bf16.mxu0 %v176
  %271 = vmatpush1.bf16.msra.mxu0 %v175
  %272 = vmatprep.subr.bf16.mxu0 %v180
  %273 = vmatpush1.bf16.msra.mxu0 %v179
  %274 = vmatprep.subr.bf16.mxu0 %v184
  %275 = vmatpush1.bf16.msra.mxu0 %v183
  %276 = vmatprep.subr.bf16.mxu0 %v188
  %277 = vmatpush1.bf16.msra.mxu0 %v187
  %278 = vmatprep.subr.bf16.mxu0 0
  %279 = vmatpush1.bf16.msra.mxu0 0
  %280 = vmatprep.subr.bf16.mxu0 0
  %281 = vmatpush1.bf16.msra.mxu0 0
  %282 = vmatprep.subr.bf16.mxu0 0
  %283 = vmatpush1.bf16.msra.mxu0 0
  %284 = vmatprep.subr.bf16.mxu0 0
  %285 = vmatpush1.bf16.msra.mxu0 0
  %286 = vmatprep.subr.bf16.mxu0 0
  %287 = vmatpush1.bf16.msra.mxu0 0
  %288 = vmatprep.subr.bf16.mxu0 0
  %289 = vmatpush1.bf16.msra.mxu0 0
  %290 = vmatprep.subr.bf16.mxu0 0
  %291 = vmatpush1.bf16.msra.mxu0 0
  %292 = vmatprep.subr.bf16.mxu0 0
  %293 = vmatpush1.bf16.msra.mxu0 0
  %294 = vmatprep.mubr.bf16.mxu0 0
  %295 = vmatmul.mubr.bf16.gmra.mrb[0].mxu0 %v60
  %v296 = vpop.f32.mrb[0].mxu0
  %v297 = vadd.f32 0.0, %v296
  %v298 = vpop.f32.mrb[0].mxu0
  %v299 = vadd.f32 0.0, %v298
  %v300 = vpop.f32.mrb[0].mxu0
  %v301 = vpop.f32.mrb[0].mxu0
  %302 = vdwg.mxu0
  %v303 = vadd.f32 %v56, %v256
  %v304 = vadd.f32 %v57, %v258
  %v305 = vadd.f32 %v58, %v297
  %v306 = vadd.f32 %v59, %v299
  %v307 = vxor.u32 %v303, 2147483648
  %v308 = vxor.u32 %v304, 2147483648
  %v309 = vxor.u32 %v305, 2147483648
  %v310 = vmul.f32 %v307, 1.442695
  %v311 = vpow.pop %v310
  %v312 = vmul.f32 %v308, 1.442695
  %v313 = vpow.pop %v312
  %v314 = vmul.f32 %v309, 1.442695
  %v315 = vpow.pop %v314
  %v316 = vadd.f32 %v311, 1.0
  %v317 = vadd.f32 %v313, 1.0
  %v318 = vadd.f32 %v315, 1.0
  %v319 = vrcp.pop %v316
  %v320 = vmul.f32 1.0, %v319
  %v321 = vrcp.pop %v317
  %v322 = vmul.f32 1.0, %v321
  %v323 = vrcp.pop %v318
  %v324 = vmul.f32 1.0, %v323
  %v325 = vtanh.pop %v306
  %v326 = vmul.f32 %v322, %v53
  %v327 = vmul.f32 %v320, %v325
  %v328 = vadd.f32 %v326, %v327
  %v329 = vtanh.pop %v328
  %v330 = vmul.f32 %v324, %v329
  %s331 = scalar_lea.vmem %s0, 16
  %v332 = vld [vmem:[%s331] sm:$0xff]
  %v333 = vld [vmem:[%s331 + $0x8] sm:$0xff]
  %v334 = vunpack.c.l.bf16 %v332
  %v335 = vunpack.c.h.bf16 %v332
  %v336 = vunpack.c.l.bf16 %v333
  %v337 = vunpack.c.h.bf16 %v333
  %v338 = vpack.c.bf16 %v330, %v330
  %339 = vmatprep.subr.bf16.mxu0 %v158
  %340 = vmatpush1.bf16.msra.mxu0 %v157
  %341 = vmatprep.subr.bf16.mxu0 %v162
  %342 = vmatpush1.bf16.msra.mxu0 %v161
  %343 = vmatprep.subr.bf16.mxu0 %v166
  %344 = vmatpush1.bf16.msra.mxu0 %v165
  %345 = vmatprep.subr.bf16.mxu0 %v170
  %346 = vmatpush1.bf16.msra.mxu0 %v169
  %347 = vmatprep.subr.bf16.mxu0 %v174
  %348 = vmatpush1.bf16.msra.mxu0 %v173
  %349 = vmatprep.subr.bf16.mxu0 %v178
  %350 = vmatpush1.bf16.msra.mxu0 %v177
  %351 = vmatprep.subr.bf16.mxu0 %v182
  %352 = vmatpush1.bf16.msra.mxu0 %v181
  %353 = vmatprep.subr.bf16.mxu0 %v186
  %354 = vmatpush1.bf16.msra.mxu0 %v185
  %355 = vmatprep.subr.bf16.mxu0 0
  %356 = vmatpush1.bf16.msra.mxu0 0
  %357 = vmatprep.subr.bf16.mxu0 0
  %358 = vmatpush1.bf16.msra.mxu0 0
  %359 = vmatprep.subr.bf16.mxu0 0
  %360 = vmatpush1.bf16.msra.mxu0 0
  %361 = vmatprep.subr.bf16.mxu0 0
  %362 = vmatpush1.bf16.msra.mxu0 0
  %363 = vmatprep.subr.bf16.mxu0 0
  %364 = vmatpush1.bf16.msra.mxu0 0
  %365 = vmatprep.subr.bf16.mxu0 0
  %366 = vmatpush1.bf16.msra.mxu0 0
  %367 = vmatprep.subr.bf16.mxu0 0
  %368 = vmatpush1.bf16.msra.mxu0 0
  %369 = vmatprep.subr.bf16.mxu0 0
  %370 = vmatpush1.bf16.msra.mxu0 0
  %371 = vmatprep.mubr.bf16.mxu0 0
  %372 = vmatmul.mubr.bf16.gmra.mrb[0].mxu0 %v338
  %v373 = vpop.f32.mrb[0].mxu0
  %v374 = vadd.f32 0.0, %v373
  %v375 = vpop.f32.mrb[0].mxu0
  %v376 = vadd.f32 0.0, %v375
  %v377 = vpop.f32.mrb[0].mxu0
  %v378 = vpop.f32.mrb[0].mxu0
  %379 = vdwg.mxu0
  %380 = vmatprep.subr.bf16.mxu0 %v160
  %381 = vmatpush1.bf16.msra.mxu0 %v159
  %382 = vmatprep.subr.bf16.mxu0 %v164
  %383 = vmatpush1.bf16.msra.mxu0 %v163
  %384 = vmatprep.subr.bf16.mxu0 %v168
  %385 = vmatpush1.bf16.msra.mxu0 %v167
  %386 = vmatprep.subr.bf16.mxu0 %v172
  %387 = vmatpush1.bf16.msra.mxu0 %v171
  %388 = vmatprep.subr.bf16.mxu0 %v176
  %389 = vmatpush1.bf16.msra.mxu0 %v175
  %390 = vmatprep.subr.bf16.mxu0 %v180
  %391 = vmatpush1.bf16.msra.mxu0 %v179
  %392 = vmatprep.subr.bf16.mxu0 %v184
  %393 = vmatpush1.bf16.msra.mxu0 %v183
  %394 = vmatprep.subr.bf16.mxu0 %v188
  %395 = vmatpush1.bf16.msra.mxu0 %v187
  %396 = vmatprep.subr.bf16.mxu0 0
  %397 = vmatpush1.bf16.msra.mxu0 0
  %398 = vmatprep.subr.bf16.mxu0 0
  %399 = vmatpush1.bf16.msra.mxu0 0
  %400 = vmatprep.subr.bf16.mxu0 0
  %401 = vmatpush1.bf16.msra.mxu0 0
  %402 = vmatprep.subr.bf16.mxu0 0
  %403 = vmatpush1.bf16.msra.mxu0 0
  %404 = vmatprep.subr.bf16.mxu0 0
  %405 = vmatpush1.bf16.msra.mxu0 0
  %406 = vmatprep.subr.bf16.mxu0 0
  %407 = vmatpush1.bf16.msra.mxu0 0
  %408 = vmatprep.subr.bf16.mxu0 0
  %409 = vmatpush1.bf16.msra.mxu0 0
  %410 = vmatprep.subr.bf16.mxu0 0
  %411 = vmatpush1.bf16.msra.mxu0 0
  %412 = vmatprep.mubr.bf16.mxu0 0
  %413 = vmatmul.mubr.bf16.gmra.mrb[0].mxu0 %v338
  %v414 = vpop.f32.mrb[0].mxu0
  %v415 = vadd.f32 0.0, %v414
  %v416 = vpop.f32.mrb[0].mxu0
  %v417 = vadd.f32 0.0, %v416
  %v418 = vpop.f32.mrb[0].mxu0
  %v419 = vpop.f32.mrb[0].mxu0
  %420 = vdwg.mxu0
  %v421 = vadd.f32 %v334, %v374
  %v422 = vadd.f32 %v335, %v376
  %v423 = vadd.f32 %v336, %v415
  %v424 = vadd.f32 %v337, %v417
  %v425 = vxor.u32 %v421, 2147483648
  %v426 = vxor.u32 %v422, 2147483648
  %v427 = vxor.u32 %v423, 2147483648
  %v428 = vmul.f32 %v425, 1.442695
  %v429 = vpow.pop %v428
  %v430 = vmul.f32 %v426, 1.442695
  %v431 = vpow.pop %v430
  %v432 = vmul.f32 %v427, 1.442695
  %v433 = vpow.pop %v432
  %v434 = vadd.f32 %v429, 1.0
  %v435 = vadd.f32 %v431, 1.0
  %v436 = vadd.f32 %v433, 1.0
  %v437 = vrcp.pop %v434
  %v438 = vmul.f32 1.0, %v437
  %v439 = vrcp.pop %v435
  %v440 = vmul.f32 1.0, %v439
  %v441 = vrcp.pop %v436
  %v442 = vmul.f32 1.0, %v441
  %v443 = vtanh.pop %v424
  %v444 = vmul.f32 %v440, %v328
  %v445 = vmul.f32 %v438, %v443
  %v446 = vadd.f32 %v444, %v445
  %v447 = vtanh.pop %v446
  %v448 = vmul.f32 %v442, %v447
  %s449 = scalar_lea.vmem %s0, 32
  %v450 = vld [vmem:[%s449] sm:$0xff]
  %v451 = vld [vmem:[%s449 + $0x8] sm:$0xff]
  %v452 = vunpack.c.l.bf16 %v450
  %v453 = vunpack.c.h.bf16 %v450
  %v454 = vunpack.c.l.bf16 %v451
  %v455 = vunpack.c.h.bf16 %v451
  %v456 = vpack.c.bf16 %v448, %v448
  %457 = vmatprep.subr.bf16.mxu0 %v158
  %458 = vmatpush1.bf16.msra.mxu0 %v157
  %459 = vmatprep.subr.bf16.mxu0 %v162
  %460 = vmatpush1.bf16.msra.mxu0 %v161
  %461 = vmatprep.subr.bf16.mxu0 %v166
  %462 = vmatpush1.bf16.msra.mxu0 %v165
  %463 = vmatprep.subr.bf16.mxu0 %v170
  %464 = vmatpush1.bf16.msra.mxu0 %v169
  %465 = vmatprep.subr.bf16.mxu0 %v174
  %466 = vmatpush1.bf16.msra.mxu0 %v173
  %467 = vmatprep.subr.bf16.mxu0 %v178
  %468 = vmatpush1.bf16.msra.mxu0 %v177
  %469 = vmatprep.subr.bf16.mxu0 %v182
  %470 = vmatpush1.bf16.msra.mxu0 %v181
  %471 = vmatprep.subr.bf16.mxu0 %v186
  %472 = vmatpush1.bf16.msra.mxu0 %v185
  %473 = vmatprep.subr.bf16.mxu0 0
  %474 = vmatpush1.bf16.msra.mxu0 0
  %475 = vmatprep.subr.bf16.mxu0 0
  %476 = vmatpush1.bf16.msra.mxu0 0
  %477 = vmatprep.subr.bf16.mxu0 0
  %478 = vmatpush1.bf16.msra.mxu0 0
  %479 = vmatprep.subr.bf16.mxu0 0
  %480 = vmatpush1.bf16.msra.mxu0 0
  %481 = vmatprep.subr.bf16.mxu0 0
  %482 = vmatpush1.bf16.msra.mxu0 0
  %483 = vmatprep.subr.bf16.mxu0 0
  %484 = vmatpush1.bf16.msra.mxu0 0
  %485 = vmatprep.subr.bf16.mxu0 0
  %486 = vmatpush1.bf16.msra.mxu0 0
  %487 = vmatprep.subr.bf16.mxu0 0
  %488 = vmatpush1.bf16.msra.mxu0 0
  %489 = vmatprep.mubr.bf16.mxu0 0
  %490 = vmatmul.mubr.bf16.gmra.mrb[0].mxu0 %v456
  %v491 = vpop.f32.mrb[0].mxu0
  %v492 = vadd.f32 0.0, %v491
  %v493 = vpop.f32.mrb[0].mxu0
  %v494 = vadd.f32 0.0, %v493
  %v495 = vpop.f32.mrb[0].mxu0
  %v496 = vpop.f32.mrb[0].mxu0
  %497 = vdwg.mxu0
  %498 = vmatprep.subr.bf16.mxu0 %v160
  %499 = vmatpush1.bf16.msra.mxu0 %v159
  %500 = vmatprep.subr.bf16.mxu0 %v164
  %501 = vmatpush1.bf16.msra.mxu0 %v163
  %502 = vmatprep.subr.bf16.mxu0 %v168
  %503 = vmatpush1.bf16.msra.mxu0 %v167
  %504 = vmatprep.subr.bf16.mxu0 %v172
  %505 = vmatpush1.bf16.msra.mxu0 %v171
  %506 = vmatprep.subr.bf16.mxu0 %v176
  %507 = vmatpush1.bf16.msra.mxu0 %v175
  %508 = vmatprep.subr.bf16.mxu0 %v180
  %509 = vmatpush1.bf16.msra.mxu0 %v179
  %510 = vmatprep.subr.bf16.mxu0 %v184
  %511 = vmatpush1.bf16.msra.mxu0 %v183
  %512 = vmatprep.subr.bf16.mxu0 %v188
  %513 = vmatpush1.bf16.msra.mxu0 %v187
  %514 = vmatprep.subr.bf16.mxu0 0
  %515 = vmatpush1.bf16.msra.mxu0 0
  %516 = vmatprep.subr.bf16.mxu0 0
  %517 = vmatpush1.bf16.msra.mxu0 0
  %518 = vmatprep.subr.bf16.mxu0 0
  %519 = vmatpush1.bf16.msra.mxu0 0
  %520 = vmatprep.subr.bf16.mxu0 0
  %521 = vmatpush1.bf16.msra.mxu0 0
  %522 = vmatprep.subr.bf16.mxu0 0
  %523 = vmatpush1.bf16.msra.mxu0 0
  %524 = vmatprep.subr.bf16.mxu0 0
  %525 = vmatpush1.bf16.msra.mxu0 0
  %526 = vmatprep.subr.bf16.mxu0 0
  %527 = vmatpush1.bf16.msra.mxu0 0
  %528 = vmatprep.subr.bf16.mxu0 0
  %529 = vmatpush1.bf16.msra.mxu0 0
  %530 = vmatprep.mubr.bf16.mxu0 0
  %531 = vmatmul.mubr.bf16.gmra.mrb[0].mxu0 %v456
  %v532 = vpop.f32.mrb[0].mxu0
  %v533 = vadd.f32 0.0, %v532
  %v534 = vpop.f32.mrb[0].mxu0
  %v535 = vadd.f32 0.0, %v534
  %v536 = vpop.f32.mrb[0].mxu0
  %v537 = vpop.f32.mrb[0].mxu0
  %538 = vdwg.mxu0
  %v539 = vadd.f32 %v452, %v492
  %v540 = vadd.f32 %v453, %v494
  %v541 = vadd.f32 %v454, %v533
  %v542 = vadd.f32 %v455, %v535
  %v543 = vxor.u32 %v539, 2147483648
  %v544 = vxor.u32 %v540, 2147483648
  %v545 = vxor.u32 %v541, 2147483648
  %v546 = vmul.f32 %v543, 1.442695
  %v547 = vpow.pop %v546
  %v548 = vmul.f32 %v544, 1.442695
  %v549 = vpow.pop %v548
  %v550 = vmul.f32 %v545, 1.442695
  %v551 = vpow.pop %v550
  %v552 = vadd.f32 %v547, 1.0
  %v553 = vadd.f32 %v549, 1.0
  %v554 = vadd.f32 %v551, 1.0
  %v555 = vrcp.pop %v552
  %v556 = vmul.f32 1.0, %v555
  %v557 = vrcp.pop %v553
  %v558 = vmul.f32 1.0, %v557
  %v559 = vrcp.pop %v554
  %v560 = vmul.f32 1.0, %v559
  %v561 = vtanh.pop %v542
  %v562 = vmul.f32 %v558, %v446
  %v563 = vmul.f32 %v556, %v561
  %v564 = vadd.f32 %v562, %v563
  %v565 = vtanh.pop %v564
  %v566 = vmul.f32 %v560, %v565
  %s567 = scalar_lea.vmem %s0, 48
  %v568 = vld [vmem:[%s567] sm:$0xff]
  %v569 = vld [vmem:[%s567 + $0x8] sm:$0xff]
  %v570 = vunpack.c.l.bf16 %v568
  %v571 = vunpack.c.h.bf16 %v568
  %v572 = vunpack.c.l.bf16 %v569
  %v573 = vunpack.c.h.bf16 %v569
  %v574 = vpack.c.bf16 %v566, %v566
  %575 = vmatprep.subr.bf16.mxu0 %v158
  %576 = vmatpush1.bf16.msra.mxu0 %v157
  %577 = vmatprep.subr.bf16.mxu0 %v162
  %578 = vmatpush1.bf16.msra.mxu0 %v161
  %579 = vmatprep.subr.bf16.mxu0 %v166
  %580 = vmatpush1.bf16.msra.mxu0 %v165
  %581 = vmatprep.subr.bf16.mxu0 %v170
  %582 = vmatpush1.bf16.msra.mxu0 %v169
  %583 = vmatprep.subr.bf16.mxu0 %v174
  %584 = vmatpush1.bf16.msra.mxu0 %v173
  %585 = vmatprep.subr.bf16.mxu0 %v178
  %586 = vmatpush1.bf16.msra.mxu0 %v177
  %587 = vmatprep.subr.bf16.mxu0 %v182
  %588 = vmatpush1.bf16.msra.mxu0 %v181
  %589 = vmatprep.subr.bf16.mxu0 %v186
  %590 = vmatpush1.bf16.msra.mxu0 %v185
  %591 = vmatprep.subr.bf16.mxu0 0
  %592 = vmatpush1.bf16.msra.mxu0 0
  %593 = vmatprep.subr.bf16.mxu0 0
  %594 = vmatpush1.bf16.msra.mxu0 0
  %595 = vmatprep.subr.bf16.mxu0 0
  %596 = vmatpush1.bf16.msra.mxu0 0
  %597 = vmatprep.subr.bf16.mxu0 0
  %598 = vmatpush1.bf16.msra.mxu0 0
  %599 = vmatprep.subr.bf16.mxu0 0
  %600 = vmatpush1.bf16.msra.mxu0 0
  %601 = vmatprep.subr.bf16.mxu0 0
  %602 = vmatpush1.bf16.msra.mxu0 0
  %603 = vmatprep.subr.bf16.mxu0 0
  %604 = vmatpush1.bf16.msra.mxu0 0
  %605 = vmatprep.subr.bf16.mxu0 0
  %606 = vmatpush1.bf16.msra.mxu0 0
  %607 = vmatprep.mubr.bf16.mxu0 0
  %608 = vmatmul.mubr.bf16.gmra.mrb[0].mxu0 %v574
  %v609 = vpop.f32.mrb[0].mxu0
  %v610 = vadd.f32 0.0, %v609
  %v611 = vpop.f32.mrb[0].mxu0
  %v612 = vadd.f32 0.0, %v611
  %v613 = vpop.f32.mrb[0].mxu0
  %v614 = vpop.f32.mrb[0].mxu0
  %615 = vdwg.mxu0
  %616 = vmatprep.subr.bf16.mxu0 %v160
  %617 = vmatpush1.bf16.msra.mxu0 %v159
  %618 = vmatprep.subr.bf16.mxu0 %v164
  %619 = vmatpush1.bf16.msra.mxu0 %v163
  %620 = vmatprep.subr.bf16.mxu0 %v168
  %621 = vmatpush1.bf16.msra.mxu0 %v167
  %622 = vmatprep.subr.bf16.mxu0 %v172
  %623 = vmatpush1.bf16.msra.mxu0 %v171
  %624 = vmatprep.subr.bf16.mxu0 %v176
  %625 = vmatpush1.bf16.msra.mxu0 %v175
  %626 = vmatprep.subr.bf16.mxu0 %v180
  %627 = vmatpush1.bf16.msra.mxu0 %v179
  %628 = vmatprep.subr.bf16.mxu0 %v184
  %629 = vmatpush1.bf16.msra.mxu0 %v183
  %630 = vmatprep.subr.bf16.mxu0 %v188
  %631 = vmatpush1.bf16.msra.mxu0 %v187
  %632 = vmatprep.subr.bf16.mxu0 0
  %633 = vmatpush1.bf16.msra.mxu0 0
  %634 = vmatprep.subr.bf16.mxu0 0
  %635 = vmatpush1.bf16.msra.mxu0 0
  %636 = vmatprep.subr.bf16.mxu0 0
  %637 = vmatpush1.bf16.msra.mxu0 0
  %638 = vmatprep.subr.bf16.mxu0 0
  %639 = vmatpush1.bf16.msra.mxu0 0
  %640 = vmatprep.subr.bf16.mxu0 0
  %641 = vmatpush1.bf16.msra.mxu0 0
  %642 = vmatprep.subr.bf16.mxu0 0
  %643 = vmatpush1.bf16.msra.mxu0 0
  %644 = vmatprep.subr.bf16.mxu0 0
  %645 = vmatpush1.bf16.msra.mxu0 0
  %646 = vmatprep.subr.bf16.mxu0 0
  %647 = vmatpush1.bf16.msra.mxu0 0
  %648 = vmatprep.mubr.bf16.mxu0 0
  %649 = vmatmul.mubr.bf16.gmra.mrb[0].mxu0 %v574
  %v650 = vpop.f32.mrb[0].mxu0
  %v651 = vadd.f32 0.0, %v650
  %v652 = vpop.f32.mrb[0].mxu0
  %v653 = vadd.f32 0.0, %v652
  %v654 = vpop.f32.mrb[0].mxu0
  %v655 = vpop.f32.mrb[0].mxu0
  %656 = vdwg.mxu0
  %v657 = vadd.f32 %v570, %v610
  %v658 = vadd.f32 %v571, %v612
  %v659 = vadd.f32 %v572, %v651
  %v660 = vadd.f32 %v573, %v653
  %v661 = vxor.u32 %v657, 2147483648
  %v662 = vxor.u32 %v658, 2147483648
  %v663 = vxor.u32 %v659, 2147483648
  %v664 = vmul.f32 %v661, 1.442695
  %v665 = vpow.pop %v664
  %v666 = vmul.f32 %v662, 1.442695
  %v667 = vpow.pop %v666
  %v668 = vmul.f32 %v663, 1.442695
  %v669 = vpow.pop %v668
  %v670 = vadd.f32 %v665, 1.0
  %v671 = vadd.f32 %v667, 1.0
  %v672 = vadd.f32 %v669, 1.0
  %v673 = vrcp.pop %v670
  %v674 = vmul.f32 1.0, %v673
  %v675 = vrcp.pop %v671
  %v676 = vmul.f32 1.0, %v675
  %v677 = vrcp.pop %v672
  %v678 = vmul.f32 1.0, %v677
  %v679 = vtanh.pop %v660
  %v680 = vmul.f32 %v676, %v564
  %v681 = vmul.f32 %v674, %v679
  %v682 = vadd.f32 %v680, %v681
  %v683 = vtanh.pop %v682
  %v684 = vmul.f32 %v678, %v683
  %s685 = scalar_lea.vmem %s0, 64
  %v686 = vld [vmem:[%s685] sm:$0xff]
  %v687 = vld [vmem:[%s685 + $0x8] sm:$0xff]
  %v688 = vunpack.c.l.bf16 %v686
  %v689 = vunpack.c.h.bf16 %v686
  %v690 = vunpack.c.l.bf16 %v687
  %v691 = vunpack.c.h.bf16 %v687
  %v692 = vpack.c.bf16 %v684, %v684
  %693 = vmatprep.subr.bf16.mxu0 %v158
  %694 = vmatpush1.bf16.msra.mxu0 %v157
  %695 = vmatprep.subr.bf16.mxu0 %v162
  %696 = vmatpush1.bf16.msra.mxu0 %v161
  %697 = vmatprep.subr.bf16.mxu0 %v166
  %698 = vmatpush1.bf16.msra.mxu0 %v165
  %699 = vmatprep.subr.bf16.mxu0 %v170
  %700 = vmatpush1.bf16.msra.mxu0 %v169
  %701 = vmatprep.subr.bf16.mxu0 %v174
  %702 = vmatpush1.bf16.msra.mxu0 %v173
  %703 = vmatprep.subr.bf16.mxu0 %v178
  %704 = vmatpush1.bf16.msra.mxu0 %v177
  %705 = vmatprep.subr.bf16.mxu0 %v182
  %706 = vmatpush1.bf16.msra.mxu0 %v181
  %707 = vmatprep.subr.bf16.mxu0 %v186
  %708 = vmatpush1.bf16.msra.mxu0 %v185
  %709 = vmatprep.subr.bf16.mxu0 0
  %710 = vmatpush1.bf16.msra.mxu0 0
  %711 = vmatprep.subr.bf16.mxu0 0
  %712 = vmatpush1.bf16.msra.mxu0 0
  %713 = vmatprep.subr.bf16.mxu0 0
  %714 = vmatpush1.bf16.msra.mxu0 0
  %715 = vmatprep.subr.bf16.mxu0 0
  %716 = vmatpush1.bf16.msra.mxu0 0
  %717 = vmatprep.subr.bf16.mxu0 0
  %718 = vmatpush1.bf16.msra.mxu0 0
  %719 = vmatprep.subr.bf16.mxu0 0
  %720 = vmatpush1.bf16.msra.mxu0 0
  %721 = vmatprep.subr.bf16.mxu0 0
  %722 = vmatpush1.bf16.msra.mxu0 0
  %723 = vmatprep.subr.bf16.mxu0 0
  %724 = vmatpush1.bf16.msra.mxu0 0
  %725 = vmatprep.mubr.bf16.mxu0 0
  %726 = vmatmul.mubr.bf16.gmra.mrb[0].mxu0 %v692
  %v727 = vpop.f32.mrb[0].mxu0
  %v728 = vadd.f32 0.0, %v727
  %v729 = vpop.f32.mrb[0].mxu0
  %v730 = vadd.f32 0.0, %v729
  %v731 = vpop.f32.mrb[0].mxu0
  %v732 = vpop.f32.mrb[0].mxu0
  %733 = vdwg.mxu0
  %734 = vmatprep.subr.bf16.mxu0 %v160
  %735 = vmatpush1.bf16.msra.mxu0 %v159
  %736 = vmatprep.subr.bf16.mxu0 %v164
  %737 = vmatpush1.bf16.msra.mxu0 %v163
  %738 = vmatprep.subr.bf16.mxu0 %v168
  %739 = vmatpush1.bf16.msra.mxu0 %v167
  %740 = vmatprep.subr.bf16.mxu0 %v172
  %741 = vmatpush1.bf16.msra.mxu0 %v171
  %742 = vmatprep.subr.bf16.mxu0 %v176
  %743 = vmatpush1.bf16.msra.mxu0 %v175
  %744 = vmatprep.subr.bf16.mxu0 %v180
  %745 = vmatpush1.bf16.msra.mxu0 %v179
  %746 = vmatprep.subr.bf16.mxu0 %v184
  %747 = vmatpush1.bf16.msra.mxu0 %v183
  %748 = vmatprep.subr.bf16.mxu0 %v188
  %749 = vmatpush1.bf16.msra.mxu0 %v187
  %750 = vmatprep.subr.bf16.mxu0 0
  %751 = vmatpush1.bf16.msra.mxu0 0
  %752 = vmatprep.subr.bf16.mxu0 0
  %753 = vmatpush1.bf16.msra.mxu0 0
  %754 = vmatprep.subr.bf16.mxu0 0
  %755 = vmatpush1.bf16.msra.mxu0 0
  %756 = vmatprep.subr.bf16.mxu0 0
  %757 = vmatpush1.bf16.msra.mxu0 0
  %758 = vmatprep.subr.bf16.mxu0 0
  %759 = vmatpush1.bf16.msra.mxu0 0
  %760 = vmatprep.subr.bf16.mxu0 0
  %761 = vmatpush1.bf16.msra.mxu0 0
  %762 = vmatprep.subr.bf16.mxu0 0
  %763 = vmatpush1.bf16.msra.mxu0 0
  %764 = vmatprep.subr.bf16.mxu0 0
  %765 = vmatpush1.bf16.msra.mxu0 0
  %766 = vmatprep.mubr.bf16.mxu0 0
  %767 = vmatmul.mubr.bf16.gmra.mrb[0].mxu0 %v692
  %v768 = vpop.f32.mrb[0].mxu0
  %v769 = vadd.f32 0.0, %v768
  %v770 = vpop.f32.mrb[0].mxu0
  %v771 = vadd.f32 0.0, %v770
  %v772 = vpop.f32.mrb[0].mxu0
  %v773 = vpop.f32.mrb[0].mxu0
  %774 = vdwg.mxu0
  %v775 = vadd.f32 %v688, %v728
  %v776 = vadd.f32 %v689, %v730
  %v777 = vadd.f32 %v690, %v769
  %v778 = vadd.f32 %v691, %v771
  %v779 = vxor.u32 %v775, 2147483648
  %v780 = vxor.u32 %v776, 2147483648
  %v781 = vxor.u32 %v777, 2147483648
  %v782 = vmul.f32 %v779, 1.442695
  %v783 = vpow.pop %v782
  %v784 = vmul.f32 %v780, 1.442695
  %v785 = vpow.pop %v784
  %v786 = vmul.f32 %v781, 1.442695
  %v787 = vpow.pop %v786
  %v788 = vadd.f32 %v783, 1.0
  %v789 = vadd.f32 %v785, 1.0
  %v790 = vadd.f32 %v787, 1.0
  %v791 = vrcp.pop %v788
  %v792 = vmul.f32 1.0, %v791
  %v793 = vrcp.pop %v789
  %v794 = vmul.f32 1.0, %v793
  %v795 = vrcp.pop %v790
  %v796 = vmul.f32 1.0, %v795
  %v797 = vtanh.pop %v778
  %v798 = vmul.f32 %v794, %v682
  %v799 = vmul.f32 %v792, %v797
  %v800 = vadd.f32 %v798, %v799
  %v801 = vtanh.pop %v800
  %v802 = vmul.f32 %v796, %v801
  %s803 = scalar_lea.vmem %s0, 80
  %v804 = vld [vmem:[%s803] sm:$0xff]
  %v805 = vld [vmem:[%s803 + $0x8] sm:$0xff]
  %v806 = vunpack.c.l.bf16 %v804
  %v807 = vunpack.c.h.bf16 %v804
  %v808 = vunpack.c.l.bf16 %v805
  %v809 = vunpack.c.h.bf16 %v805
  %v810 = vpack.c.bf16 %v802, %v802
  %811 = vmatprep.subr.bf16.mxu0 %v158
  %812 = vmatpush1.bf16.msra.mxu0 %v157
  %813 = vmatprep.subr.bf16.mxu0 %v162
  %814 = vmatpush1.bf16.msra.mxu0 %v161
  %815 = vmatprep.subr.bf16.mxu0 %v166
  %816 = vmatpush1.bf16.msra.mxu0 %v165
  %817 = vmatprep.subr.bf16.mxu0 %v170
  %818 = vmatpush1.bf16.msra.mxu0 %v169
  %819 = vmatprep.subr.bf16.mxu0 %v174
  %820 = vmatpush1.bf16.msra.mxu0 %v173
  %821 = vmatprep.subr.bf16.mxu0 %v178
  %822 = vmatpush1.bf16.msra.mxu0 %v177
  %823 = vmatprep.subr.bf16.mxu0 %v182
  %824 = vmatpush1.bf16.msra.mxu0 %v181
  %825 = vmatprep.subr.bf16.mxu0 %v186
  %826 = vmatpush1.bf16.msra.mxu0 %v185
  %827 = vmatprep.subr.bf16.mxu0 0
  %828 = vmatpush1.bf16.msra.mxu0 0
  %829 = vmatprep.subr.bf16.mxu0 0
  %830 = vmatpush1.bf16.msra.mxu0 0
  %831 = vmatprep.subr.bf16.mxu0 0
  %832 = vmatpush1.bf16.msra.mxu0 0
  %833 = vmatprep.subr.bf16.mxu0 0
  %834 = vmatpush1.bf16.msra.mxu0 0
  %835 = vmatprep.subr.bf16.mxu0 0
  %836 = vmatpush1.bf16.msra.mxu0 0
  %837 = vmatprep.subr.bf16.mxu0 0
  %838 = vmatpush1.bf16.msra.mxu0 0
  %839 = vmatprep.subr.bf16.mxu0 0
  %840 = vmatpush1.bf16.msra.mxu0 0
  %841 = vmatprep.subr.bf16.mxu0 0
  %842 = vmatpush1.bf16.msra.mxu0 0
  %843 = vmatprep.mubr.bf16.mxu0 0
  %844 = vmatmul.mubr.bf16.gmra.mrb[0].mxu0 %v810
  %v845 = vpop.f32.mrb[0].mxu0
  %v846 = vadd.f32 0.0, %v845
  %v847 = vpop.f32.mrb[0].mxu0
  %v848 = vadd.f32 0.0, %v847
  %v849 = vpop.f32.mrb[0].mxu0
  %v850 = vpop.f32.mrb[0].mxu0
  %851 = vdwg.mxu0
  %852 = vmatprep.subr.bf16.mxu0 %v160
  %853 = vmatpush1.bf16.msra.mxu0 %v159
  %854 = vmatprep.subr.bf16.mxu0 %v164
  %855 = vmatpush1.bf16.msra.mxu0 %v163
  %856 = vmatprep.subr.bf16.mxu0 %v168
  %857 = vmatpush1.bf16.msra.mxu0 %v167
  %858 = vmatprep.subr.bf16.mxu0 %v172
  %859 = vmatpush1.bf16.msra.mxu0 %v171
  %860 = vmatprep.subr.bf16.mxu0 %v176
  %861 = vmatpush1.bf16.msra.mxu0 %v175
  %862 = vmatprep.subr.bf16.mxu0 %v180
  %863 = vmatpush1.bf16.msra.mxu0 %v179
  %864 = vmatprep.subr.bf16.mxu0 %v184
  %865 = vmatpush1.bf16.msra.mxu0 %v183
  %866 = vmatprep.subr.bf16.mxu0 %v188
  %867 = vmatpush1.bf16.msra.mxu0 %v187
  %868 = vmatprep.subr.bf16.mxu0 0
  %869 = vmatpush1.bf16.msra.mxu0 0
  %870 = vmatprep.subr.bf16.mxu0 0
  %871 = vmatpush1.bf16.msra.mxu0 0
  %872 = vmatprep.subr.bf16.mxu0 0
  %873 = vmatpush1.bf16.msra.mxu0 0
  %874 = vmatprep.subr.bf16.mxu0 0
  %875 = vmatpush1.bf16.msra.mxu0 0
  %876 = vmatprep.subr.bf16.mxu0 0
  %877 = vmatpush1.bf16.msra.mxu0 0
  %878 = vmatprep.subr.bf16.mxu0 0
  %879 = vmatpush1.bf16.msra.mxu0 0
  %880 = vmatprep.subr.bf16.mxu0 0
  %881 = vmatpush1.bf16.msra.mxu0 0
  %882 = vmatprep.subr.bf16.mxu0 0
  %883 = vmatpush1.bf16.msra.mxu0 0
  %884 = vmatprep.mubr.bf16.mxu0 0
  %885 = vmatmul.mubr.bf16.gmra.mrb[0].mxu0 %v810
  %v886 = vpop.f32.mrb[0].mxu0
  %v887 = vadd.f32 0.0, %v886
  %v888 = vpop.f32.mrb[0].mxu0
  %v889 = vadd.f32 0.0, %v888
  %v890 = vpop.f32.mrb[0].mxu0
  %v891 = vpop.f32.mrb[0].mxu0
  %892 = vdwg.mxu0
  %v893 = vadd.f32 %v806, %v846
  %v894 = vadd.f32 %v807, %v848
  %v895 = vadd.f32 %v808, %v887
  %v896 = vadd.f32 %v809, %v889
  %v897 = vxor.u32 %v893, 2147483648
  %v898 = vxor.u32 %v894, 2147483648
  %v899 = vxor.u32 %v895, 2147483648
  %v900 = vmul.f32 %v897, 1.442695
  %v901 = vpow.pop %v900
  %v902 = vmul.f32 %v898, 1.442695
  %v903 = vpow.pop %v902
  %v904 = vmul.f32 %v899, 1.442695
  %v905 = vpow.pop %v904
  %v906 = vadd.f32 %v901, 1.0
  %v907 = vadd.f32 %v903, 1.0
  %v908 = vadd.f32 %v905, 1.0
  %v909 = vrcp.pop %v906
  %v910 = vmul.f32 1.0, %v909
  %v911 = vrcp.pop %v907
  %v912 = vmul.f32 1.0, %v911
  %v913 = vrcp.pop %v908
  %v914 = vmul.f32 1.0, %v913
  %v915 = vtanh.pop %v896
  %v916 = vmul.f32 %v912, %v800
  %v917 = vmul.f32 %v910, %v915
  %v918 = vadd.f32 %v916, %v917
  %v919 = vtanh.pop %v918
  %v920 = vmul.f32 %v914, %v919
  %s921 = scalar_lea.vmem %s0, 96
  %v922 = vld [vmem:[%s921] sm:$0xff]
  %v923 = vld [vmem:[%s921 + $0x8] sm:$0xff]
  %v924 = vunpack.c.l.bf16 %v922
  %v925 = vunpack.c.h.bf16 %v922
  %v926 = vunpack.c.l.bf16 %v923
  %v927 = vunpack.c.h.bf16 %v923
  %v928 = vpack.c.bf16 %v920, %v920
  %929 = vmatprep.subr.bf16.mxu0 %v158
  %930 = vmatpush1.bf16.msra.mxu0 %v157
  %931 = vmatprep.subr.bf16.mxu0 %v162
  %932 = vmatpush1.bf16.msra.mxu0 %v161
  %933 = vmatprep.subr.bf16.mxu0 %v166
  %934 = vmatpush1.bf16.msra.mxu0 %v165
  %935 = vmatprep.subr.bf16.mxu0 %v170
  %936 = vmatpush1.bf16.msra.mxu0 %v169
  %937 = vmatprep.subr.bf16.mxu0 %v174
  %938 = vmatpush1.bf16.msra.mxu0 %v173
  %939 = vmatprep.subr.bf16.mxu0 %v178
  %940 = vmatpush1.bf16.msra.mxu0 %v177
  %941 = vmatprep.subr.bf16.mxu0 %v182
  %942 = vmatpush1.bf16.msra.mxu0 %v181
  %943 = vmatprep.subr.bf16.mxu0 %v186
  %944 = vmatpush1.bf16.msra.mxu0 %v185
  %945 = vmatprep.subr.bf16.mxu0 0
  %946 = vmatpush1.bf16.msra.mxu0 0
  %947 = vmatprep.subr.bf16.mxu0 0
  %948 = vmatpush1.bf16.msra.mxu0 0
  %949 = vmatprep.subr.bf16.mxu0 0
  %950 = vmatpush1.bf16.msra.mxu0 0
  %951 = vmatprep.subr.bf16.mxu0 0
  %952 = vmatpush1.bf16.msra.mxu0 0
  %953 = vmatprep.subr.bf16.mxu0 0
  %954 = vmatpush1.bf16.msra.mxu0 0
  %955 = vmatprep.subr.bf16.mxu0 0
  %956 = vmatpush1.bf16.msra.mxu0 0
  %957 = vmatprep.subr.bf16.mxu0 0
  %958 = vmatpush1.bf16.msra.mxu0 0
  %959 = vmatprep.subr.bf16.mxu0 0
  %960 = vmatpush1.bf16.msra.mxu0 0
  %961 = vmatprep.mubr.bf16.mxu0 0
  %962 = vmatmul.mubr.bf16.gmra.mrb[0].mxu0 %v928
  %v963 = vpop.f32.mrb[0].mxu0
  %v964 = vadd.f32 0.0, %v963
  %v965 = vpop.f32.mrb[0].mxu0
  %v966 = vadd.f32 0.0, %v965
  %v967 = vpop.f32.mrb[0].mxu0
  %v968 = vpop.f32.mrb[0].mxu0
  %969 = vdwg.mxu0
  %970 = vmatprep.subr.bf16.mxu0 %v160
  %971 = vmatpush1.bf16.msra.mxu0 %v159
  %972 = vmatprep.subr.bf16.mxu0 %v164
  %973 = vmatpush1.bf16.msra.mxu0 %v163
  %974 = vmatprep.subr.bf16.mxu0 %v168
  %975 = vmatpush1.bf16.msra.mxu0 %v167
  %976 = vmatprep.subr.bf16.mxu0 %v172
  %977 = vmatpush1.bf16.msra.mxu0 %v171
  %978 = vmatprep.subr.bf16.mxu0 %v176
  %979 = vmatpush1.bf16.msra.mxu0 %v175
  %980 = vmatprep.subr.bf16.mxu0 %v180
  %981 = vmatpush1.bf16.msra.mxu0 %v179
  %982 = vmatprep.subr.bf16.mxu0 %v184
  %983 = vmatpush1.bf16.msra.mxu0 %v183
  %984 = vmatprep.subr.bf16.mxu0 %v188
  %985 = vmatpush1.bf16.msra.mxu0 %v187
  %986 = vmatprep.subr.bf16.mxu0 0
  %987 = vmatpush1.bf16.msra.mxu0 0
  %988 = vmatprep.subr.bf16.mxu0 0
  %989 = vmatpush1.bf16.msra.mxu0 0
  %990 = vmatprep.subr.bf16.mxu0 0
  %991 = vmatpush1.bf16.msra.mxu0 0
  %992 = vmatprep.subr.bf16.mxu0 0
  %993 = vmatpush1.bf16.msra.mxu0 0
  %994 = vmatprep.subr.bf16.mxu0 0
  %995 = vmatpush1.bf16.msra.mxu0 0
  %996 = vmatprep.subr.bf16.mxu0 0
  %997 = vmatpush1.bf16.msra.mxu0 0
  %998 = vmatprep.subr.bf16.mxu0 0
  %999 = vmatpush1.bf16.msra.mxu0 0
  %1000 = vmatprep.subr.bf16.mxu0 0
  %1001 = vmatpush1.bf16.msra.mxu0 0
  %1002 = vmatprep.mubr.bf16.mxu0 0
  %1003 = vmatmul.mubr.bf16.gmra.mrb[0].mxu0 %v928
  %v1004 = vpop.f32.mrb[0].mxu0
  %v1005 = vadd.f32 0.0, %v1004
  %v1006 = vpop.f32.mrb[0].mxu0
  %v1007 = vadd.f32 0.0, %v1006
  %v1008 = vpop.f32.mrb[0].mxu0
  %v1009 = vpop.f32.mrb[0].mxu0
  %1010 = vdwg.mxu0
  %v1011 = vadd.f32 %v924, %v964
  %v1012 = vadd.f32 %v925, %v966
  %v1013 = vadd.f32 %v926, %v1005
  %v1014 = vadd.f32 %v927, %v1007
  %v1015 = vxor.u32 %v1011, 2147483648
  %v1016 = vxor.u32 %v1012, 2147483648
  %v1017 = vxor.u32 %v1013, 2147483648
  %v1018 = vmul.f32 %v1015, 1.442695
  %v1019 = vpow.pop %v1018
  %v1020 = vmul.f32 %v1016, 1.442695
  %v1021 = vpow.pop %v1020
  %v1022 = vmul.f32 %v1017, 1.442695
  %v1023 = vpow.pop %v1022
  %v1024 = vadd.f32 %v1019, 1.0
  %v1025 = vadd.f32 %v1021, 1.0
  %v1026 = vadd.f32 %v1023, 1.0
  %v1027 = vrcp.pop %v1024
  %v1028 = vmul.f32 1.0, %v1027
  %v1029 = vrcp.pop %v1025
  %v1030 = vmul.f32 1.0, %v1029
  %v1031 = vrcp.pop %v1026
  %v1032 = vmul.f32 1.0, %v1031
  %v1033 = vtanh.pop %v1014
  %v1034 = vmul.f32 %v1030, %v918
  %v1035 = vmul.f32 %v1028, %v1033
  %v1036 = vadd.f32 %v1034, %v1035
  %v1037 = vtanh.pop %v1036
  %v1038 = vmul.f32 %v1032, %v1037
  %s1039 = scalar_lea.vmem %s0, 112
  %v1040 = vld [vmem:[%s1039] sm:$0xff]
  %v1041 = vld [vmem:[%s1039 + $0x8] sm:$0xff]
  %v1042 = vunpack.c.l.bf16 %v1040
  %v1043 = vunpack.c.h.bf16 %v1040
  %v1044 = vunpack.c.l.bf16 %v1041
  %v1045 = vunpack.c.h.bf16 %v1041
  %v1046 = vpack.c.bf16 %v1038, %v1038
  %1047 = vmatprep.subr.bf16.mxu0 %v158
  %1048 = vmatpush1.bf16.msra.mxu0 %v157
  %1049 = vmatprep.subr.bf16.mxu0 %v162
  %1050 = vmatpush1.bf16.msra.mxu0 %v161
  %1051 = vmatprep.subr.bf16.mxu0 %v166
  %1052 = vmatpush1.bf16.msra.mxu0 %v165
  %1053 = vmatprep.subr.bf16.mxu0 %v170
  %1054 = vmatpush1.bf16.msra.mxu0 %v169
  %1055 = vmatprep.subr.bf16.mxu0 %v174
  %1056 = vmatpush1.bf16.msra.mxu0 %v173
  %1057 = vmatprep.subr.bf16.mxu0 %v178
  %1058 = vmatpush1.bf16.msra.mxu0 %v177
  %1059 = vmatprep.subr.bf16.mxu0 %v182
  %1060 = vmatpush1.bf16.msra.mxu0 %v181
  %1061 = vmatprep.subr.bf16.mxu0 %v186
  %1062 = vmatpush1.bf16.msra.mxu0 %v185
  %1063 = vmatprep.subr.bf16.mxu0 0
  %1064 = vmatpush1.bf16.msra.mxu0 0
  %1065 = vmatprep.subr.bf16.mxu0 0
  %1066 = vmatpush1.bf16.msra.mxu0 0
  %1067 = vmatprep.subr.bf16.mxu0 0
  %1068 = vmatpush1.bf16.msra.mxu0 0
  %1069 = vmatprep.subr.bf16.mxu0 0
  %1070 = vmatpush1.bf16.msra.mxu0 0
  %1071 = vmatprep.subr.bf16.mxu0 0
  %1072 = vmatpush1.bf16.msra.mxu0 0
  %1073 = vmatprep.subr.bf16.mxu0 0
  %1074 = vmatpush1.bf16.msra.mxu0 0
  %1075 = vmatprep.subr.bf16.mxu0 0
  %1076 = vmatpush1.bf16.msra.mxu0 0
  %1077 = vmatprep.subr.bf16.mxu0 0
  %1078 = vmatpush1.bf16.msra.mxu0 0
  %1079 = vmatprep.mubr.bf16.mxu0 0
  %1080 = vmatmul.mubr.bf16.gmra.mrb[0].mxu0 %v1046
  %v1081 = vpop.f32.mrb[0].mxu0
  %v1082 = vadd.f32 0.0, %v1081
  %v1083 = vpop.f32.mrb[0].mxu0
  %v1084 = vadd.f32 0.0, %v1083
  %v1085 = vpop.f32.mrb[0].mxu0
  %v1086 = vpop.f32.mrb[0].mxu0
  %1087 = vdwg.mxu0
  %1088 = vmatprep.subr.bf16.mxu0 %v160
  %1089 = vmatpush1.bf16.msra.mxu0 %v159
  %1090 = vmatprep.subr.bf16.mxu0 %v164
  %1091 = vmatpush1.bf16.msra.mxu0 %v163
  %1092 = vmatprep.subr.bf16.mxu0 %v168
  %1093 = vmatpush1.bf16.msra.mxu0 %v167
  %1094 = vmatprep.subr.bf16.mxu0 %v172
  %1095 = vmatpush1.bf16.msra.mxu0 %v171
  %1096 = vmatprep.subr.bf16.mxu0 %v176
  %1097 = vmatpush1.bf16.msra.mxu0 %v175
  %1098 = vmatprep.subr.bf16.mxu0 %v180
  %1099 = vmatpush1.bf16.msra.mxu0 %v179
  %1100 = vmatprep.subr.bf16.mxu0 %v184
  %1101 = vmatpush1.bf16.msra.mxu0 %v183
  %1102 = vmatprep.subr.bf16.mxu0 %v188
  %1103 = vmatpush1.bf16.msra.mxu0 %v187
  %1104 = vmatprep.subr.bf16.mxu0 0
  %1105 = vmatpush1.bf16.msra.mxu0 0
  %1106 = vmatprep.subr.bf16.mxu0 0
  %1107 = vmatpush1.bf16.msra.mxu0 0
  %1108 = vmatprep.subr.bf16.mxu0 0
  %1109 = vmatpush1.bf16.msra.mxu0 0
  %1110 = vmatprep.subr.bf16.mxu0 0
  %1111 = vmatpush1.bf16.msra.mxu0 0
  %1112 = vmatprep.subr.bf16.mxu0 0
  %1113 = vmatpush1.bf16.msra.mxu0 0
  %1114 = vmatprep.subr.bf16.mxu0 0
  %1115 = vmatpush1.bf16.msra.mxu0 0
  %1116 = vmatprep.subr.bf16.mxu0 0
  %1117 = vmatpush1.bf16.msra.mxu0 0
  %1118 = vmatprep.subr.bf16.mxu0 0
  %1119 = vmatpush1.bf16.msra.mxu0 0
  %1120 = vmatprep.mubr.bf16.mxu0 0
  %1121 = vmatmul.mubr.bf16.gmra.mrb[0].mxu0 %v1046
  %v1122 = vpop.f32.mrb[0].mxu0
  %v1123 = vadd.f32 0.0, %v1122
  %v1124 = vpop.f32.mrb[0].mxu0
  %v1125 = vadd.f32 0.0, %v1124
  %v1126 = vpop.f32.mrb[0].mxu0
  %v1127 = vpop.f32.mrb[0].mxu0
  %1128 = vdwg.mxu0
  %v1129 = vadd.f32 %v1042, %v1082
  %v1130 = vadd.f32 %v1043, %v1084
  %v1131 = vadd.f32 %v1044, %v1123
  %v1132 = vadd.f32 %v1045, %v1125
  %v1133 = vxor.u32 %v1129, 2147483648
  %v1134 = vxor.u32 %v1130, 2147483648
  %v1135 = vxor.u32 %v1131, 2147483648
  %v1136 = vmul.f32 %v1133, 1.442695
  %v1137 = vpow.pop %v1136
  %v1138 = vmul.f32 %v1134, 1.442695
  %v1139 = vpow.pop %v1138
  %v1140 = vmul.f32 %v1135, 1.442695
  %v1141 = vpow.pop %v1140
  %v1142 = vadd.f32 %v1137, 1.0
  %v1143 = vadd.f32 %v1139, 1.0
  %v1144 = vadd.f32 %v1141, 1.0
  %v1145 = vrcp.pop %v1142
  %v1146 = vmul.f32 1.0, %v1145
  %v1147 = vrcp.pop %v1143
  %v1148 = vmul.f32 1.0, %v1147
  %v1149 = vrcp.pop %v1144
  %v1150 = vmul.f32 1.0, %v1149
  %v1151 = vtanh.pop %v1132
  %v1152 = vmul.f32 %v1148, %v1036
  %v1153 = vmul.f32 %v1146, %v1151
  %v1154 = vadd.f32 %v1152, %v1153
  %v1155 = vtanh.pop %v1154
  %v1156 = vmul.f32 %v1150, %v1155
  %1157 = vst [vmem:[%s2] sm:$0xff] %v1156
  %1158 = vst [vmem:[%s3] sm:$0xff] %v1154
  // Predicated region
  $region14: #{seq2seq_forward.2} parent=0 // pred_check
    _
  $region15: #{seq2seq_forward.2} parent=0 // pred_check_branch
    %1160 = sbr.rel (0) target = $region17
  $region16: #{seq2seq_forward.2} parent=0 // pred_region
    _
  $region17: #{seq2seq_forward.2} parent=0 // pred_fallthru
    _
  // Predicated region
  $region18: #{seq2seq_forward.2} parent=0 // pred_check
    _
  $region19: #{seq2seq_forward.2} parent=0 // pred_check_branch
    %1162 = sbr.rel (0) target = $region21
  $region20: #{seq2seq_forward.2} parent=0 // pred_region
    _
  $region21: #{seq2seq_forward.2} parent=0 // pred_fallthru
    _
  // Predicated region
  $region22: #{seq2seq_forward.2} parent=0 // pred_check
    _
  $region23: #{seq2seq_forward.2} parent=0 // pred_check_branch
    %1164 = sbr.rel (0) target = $region25
  $region24: #{seq2seq_forward.2} parent=0 // pred_region
    _
  $region25: #{seq2seq_forward.2} parent=0 // pred_fallthru
    _
  // Predicated region
  $region26: #{seq2seq_forward.2} parent=0 // pred_check
    _
  $region27: #{seq2seq_forward.2} parent=0 // pred_check_branch
    %1166 = sbr.rel (0) target = $region29
  $region28: #{seq2seq_forward.2} parent=0 // pred_region
    _
  $region29: #{seq2seq_forward.2} parent=0 // pred_fallthru
    _

// kernel: seq2seq_forward.3
$region0: #{seq2seq_forward.3}
  #allocation0 [shape = 'u32[]', space=smem, size = 0x4, offset = 0x4, fixed_abs, tag = 'smem constant byte address 0x4 - core index']
  #allocation1 [shape = 'u32[144,128]{1,0:T(1,128)}', space=vmem, size = 0x12000, scoped, tag = 'internal scratch']
  #allocation2 [shape = 'f32[8,128]{1,0:T(8,128)}', space=vmem, size = 0x1000, scoped, tag = 'scratch operand']
  #allocation3 [shape = 'f32[8,128]{1,0:T(8,128)}', space=vmem, size = 0x1000, scoped, tag = 'scratch operand']
  #allocation4 [shape = 'f32[8,512]{1,0:T(8,128)}', space=vmem, size = 0x4000, scoped, tag = 'scratch operand']
  #allocation5 [shape = 's32[8,1]{1,0:T(8,128)}', space=vmem, size = 0x1000, scoped, tag = 'scratch operand']
  #allocation6 [shape = 's32[8]{0}', space=sflag, size = 0x20, scoped, tag = 'scratch operand']
  #allocation7 [shape = 's32[]', space=sflag, size = 0x4, offset = 0, fixed_abs, tag = 'sflag constant byte address 0x0 - dummy sync flag']
  #allocation8 [shape = 's32[]', space=sflag, size = 0x4, offset = 0, fixed_abs, tag = 'sflag constant byte address 0x0 - dummy sync flag']
  #allocation9 [shape = 's32[]', space=sflag, size = 0x4, offset = 0, fixed_abs, tag = 'sflag constant byte address 0x0 - dummy sync flag']
  #allocation10 [shape = 's32[]', space=sflag, size = 0x4, offset = 0, fixed_abs, tag = 'sflag constant byte address 0x0 - dummy sync flag']
  #allocation11 [shape = 's32[]', space=sflag, size = 0x4, offset = 0, fixed_abs, tag = 'sflag constant byte address 0x0 - dummy sync flag']
  #allocation12 [shape = 's32[]', space=sflag, size = 0x4, offset = 0, fixed_abs, tag = 'sflag constant byte address 0x0 - dummy sync flag']
  #allocation13 [shape = 's32[]', space=sflag, size = 0x4, offset = 0, fixed_abs, tag = 'sflag constant byte address 0x0 - dummy sync flag']
  #allocation14 [shape = 's32[]', space=sflag, size = 0x4, offset = 0, fixed_abs, tag = 'sflag constant byte address 0x0 - dummy sync flag']
  %s0 = inlined_call_operand.vmem [shape: f32[8,512], index: 0, kind: input, shape index: {}]
  %s1 = inlined_call_operand.vmem [shape: f32[8,128], index: 1, kind: input, shape index: {}]
  %s2 = inlined_call_operand.vmem [shape: f32[8,128], index: 2, kind: input, shape index: {}]
  %s3 = inlined_call_operand.vmem [shape: f32[128,512], index: 3, kind: input, shape index: {}]
  %s4 = inlined_call_operand.vmem [shape: bf16[128,512], index: 4, kind: input, shape index: {}]
  %s5 = inlined_call_operand.vmem [shape: bf16[128,128], index: 5, kind: input, shape index: {}]
  %s6 = inlined_call_operand.vmem [shape: f32[1,128], index: 6, kind: input, shape index: {}]
  %s7 = inlined_call_operand.vmem [shape: f32[8,8,128], index: 7, kind: output, shape index: {}]
  %s8 = sld [smem:[#allocation0]]
  $region309: #{seq2seq_forward.3} parent=0
    _
  %s10 = ssub.s32 1, %s8
  %s11 = scalar_select 0, %s10, %s8
  loop: start=0, step=1, limit=10
  $region2: #{seq2seq_forward.3} parent=0 // loop_pre_header
    _
  $region3: #{seq2seq_forward.3} parent=0 // loop_header
    %s13 = sphi 0, %s17
    %p14 = scmp.ge.s32.totalorder %s13, 10
    %s21 = sphi 0, %s21
    %s23 = sphi 0, %s21
    %s24 = sphi 0, %s23
    %s38 = sphi 0, %s24
    %s42 = sphi 0, %s42
    %s44 = sphi 0, %s42
    %s45 = sphi 0, %s44
    %s59 = sphi 0, %s45
    %s63 = sphi 0, %s63
    %s65 = sphi 0, %s63
    %s66 = sphi 0, %s65
    %s80 = sphi 0, %s66
    %s84 = sphi 0, %s84
    %s86 = sphi 0, %s84
    %s87 = sphi 0, %s86
    %s101 = sphi 0, %s87
    %s105 = sphi 0, %s105
    %s107 = sphi 0, %s105
    %s108 = sphi 0, %s107
    %s122 = sphi 0, %s108
    %s126 = sphi 0, %s126
    %s128 = sphi 0, %s126
    %s129 = sphi 0, %s128
    %s143 = sphi 0, %s129
    %s149 = sphi 0, %s151
    %s152 = sphi 0, %s149
    %s153 = sphi 0, %s152
    %s169 = sphi 0, %s153
  $region4: #{seq2seq_forward.3} parent=0 // loop_header_branch
    %16 = sbr.rel (%p14) target = $region8
  $region5: #{seq2seq_forward.3} parent=0 // loop_body
    %s18 = ssub.s32 %s13, 1
    %s19 = ssub.s32 %s13, 2
    %s20 = sadd.s32 %s13, 1
    %s22 = sadd.s32 %s21, 1
    %p25 = scmp.eq.s32.totalorder %s13, 7
    %p26 = scmp.ne.s32.totalorder %s21, %s23
    %p27 = scmp.eq.s32.totalorder %s13, 0
    %p28 = por %p26, %p27
    %p29 = scmp.ne.s32.totalorder %s21, %s23
    %p30 = scmp.eq.s32.totalorder %s18, 7
    %p31 = por %p29, %p30
    %p32 = scmp.ne.s32.totalorder %s23, %s24
    %p33 = scmp.eq.s32.totalorder %s18, 0
    %p34 = por %p32, %p33
    %p35 = scmp.ne.s32.totalorder %s23, %s24
    %p36 = scmp.eq.s32.totalorder %s19, 7
    %p37 = por %p35, %p36
    %p39 = scmp.ne.s32.totalorder %s24, %s38
    %p40 = scmp.eq.s32.totalorder %s19, 0
    %p41 = por %p39, %p40
    %s43 = sadd.s32 %s42, 1
    %p46 = scmp.eq.s32.totalorder %s13, 7
    %p47 = scmp.ne.s32.totalorder %s42, %s44
    %p48 = scmp.eq.s32.totalorder %s13, 0
    %p49 = por %p47, %p48
    %p50 = scmp.ne.s32.totalorder %s42, %s44
    %p51 = scmp.eq.s32.totalorder %s18, 7
    %p52 = por %p50, %p51
    %p53 = scmp.ne.s32.totalorder %s44, %s45
    %p54 = scmp.eq.s32.totalorder %s18, 0
    %p55 = por %p53, %p54
    %p56 = scmp.ne.s32.totalorder %s44, %s45
    %p57 = scmp.eq.s32.totalorder %s19, 7
    %p58 = por %p56, %p57
    %p60 = scmp.ne.s32.totalorder %s45, %s59
    %p61 = scmp.eq.s32.totalorder %s19, 0
    %p62 = por %p60, %p61
    %s64 = sadd.s32 %s63, 1
    %p67 = scmp.eq.s32.totalorder %s13, 7
    %p68 = scmp.ne.s32.totalorder %s63, %s65
    %p69 = scmp.eq.s32.totalorder %s13, 0
    %p70 = por %p68, %p69
    %p71 = scmp.ne.s32.totalorder %s63, %s65
    %p72 = scmp.eq.s32.totalorder %s18, 7
    %p73 = por %p71, %p72
    %p74 = scmp.ne.s32.totalorder %s65, %s66
    %p75 = scmp.eq.s32.totalorder %s18, 0
    %p76 = por %p74, %p75
    %p77 = scmp.ne.s32.totalorder %s65, %s66
    %p78 = scmp.eq.s32.totalorder %s19, 7
    %p79 = por %p77, %p78
    %p81 = scmp.ne.s32.totalorder %s66, %s80
    %p82 = scmp.eq.s32.totalorder %s19, 0
    %p83 = por %p81, %p82
    %s85 = sadd.s32 %s84, 1
    %p88 = scmp.eq.s32.totalorder %s13, 7
    %p89 = scmp.ne.s32.totalorder %s84, %s86
    %p90 = scmp.eq.s32.totalorder %s13, 0
    %p91 = por %p89, %p90
    %p92 = scmp.ne.s32.totalorder %s84, %s86
    %p93 = scmp.eq.s32.totalorder %s18, 7
    %p94 = por %p92, %p93
    %p95 = scmp.ne.s32.totalorder %s86, %s87
    %p96 = scmp.eq.s32.totalorder %s18, 0
    %p97 = por %p95, %p96
    %p98 = scmp.ne.s32.totalorder %s86, %s87
    %p99 = scmp.eq.s32.totalorder %s19, 7
    %p100 = por %p98, %p99
    %p102 = scmp.ne.s32.totalorder %s87, %s101
    %p103 = scmp.eq.s32.totalorder %s19, 0
    %p104 = por %p102, %p103
    %s106 = sadd.s32 %s105, 1
    %p109 = scmp.eq.s32.totalorder %s13, 7
    %p110 = scmp.ne.s32.totalorder %s105, %s107
    %p111 = scmp.eq.s32.totalorder %s13, 0
    %p112 = por %p110, %p111
    %p113 = scmp.ne.s32.totalorder %s105, %s107
    %p114 = scmp.eq.s32.totalorder %s18, 7
    %p115 = por %p113, %p114
    %p116 = scmp.ne.s32.totalorder %s107, %s108
    %p117 = scmp.eq.s32.totalorder %s18, 0
    %p118 = por %p116, %p117
    %p119 = scmp.ne.s32.totalorder %s107, %s108
    %p120 = scmp.eq.s32.totalorder %s19, 7
    %p121 = por %p119, %p120
    %p123 = scmp.ne.s32.totalorder %s108, %s122
    %p124 = scmp.eq.s32.totalorder %s19, 0
    %p125 = por %p123, %p124
    %s127 = sadd.s32 %s126, 1
    %p130 = scmp.eq.s32.totalorder %s13, 7
    %p131 = scmp.ne.s32.totalorder %s126, %s128
    %p132 = scmp.eq.s32.totalorder %s13, 0
    %p133 = por %p131, %p132
    %p134 = scmp.ne.s32.totalorder %s126, %s128
    %p135 = scmp.eq.s32.totalorder %s18, 7
    %p136 = por %p134, %p135
    %p137 = scmp.ne.s32.totalorder %s128, %s129
    %p138 = scmp.eq.s32.totalorder %s18, 0
    %p139 = por %p137, %p138
    %p140 = scmp.ne.s32.totalorder %s128, %s129
    %p141 = scmp.eq.s32.totalorder %s19, 7
    %p142 = por %p140, %p141
    %p144 = scmp.ne.s32.totalorder %s129, %s143
    %p145 = scmp.eq.s32.totalorder %s19, 0
    %p146 = por %p144, %p145
    %s147 = ssub.s32 %s13, %s20
    %p148 = scmp.eq.s32.totalorder %s147, 0
    %s150 = sadd.s32 %s149, 1
    %s151 = scalar_select %p148, %s149, %s150
    %p154 = pneg %p148
    %p155 = scmp.eq.s32.totalorder %s13, 7
    %p156 = por %p154, %p155
    %p157 = scmp.ne.s32.totalorder %s149, %s152
    %p158 = scmp.eq.s32.totalorder %s13, 0
    %p159 = por %p157, %p158
    %p160 = scmp.ne.s32.totalorder %s149, %s152
    %p161 = scmp.eq.s32.totalorder %s18, 7
    %p162 = por %p160, %p161
    %p163 = scmp.ne.s32.totalorder %s152, %s153
    %p164 = scmp.eq.s32.totalorder %s18, 0
    %p165 = por %p163, %p164
    %p166 = scmp.ne.s32.totalorder %s152, %s153
    %p167 = scmp.eq.s32.totalorder %s19, 7
    %p168 = por %p166, %p167
    %p170 = scmp.ne.s32.totalorder %s153, %s169
    %p171 = scmp.eq.s32.totalorder %s19, 0
    %p172 = por %p170, %p171
    %p173 = scmp.le.s32.totalorder 1, %s13
    %p174 = scmp.lt.s32.totalorder %s13, 9
    %p175 = pnand %p173, %p174
    %p176 = pneg %p175
    // Predicated region
    $region9: #{seq2seq_forward.3} parent=5 // pred_check
      _
    $region10: #{seq2seq_forward.3} parent=5 // pred_check_branch
      %178 = sbr.rel (%p175) target = $region12
    $region11: #{seq2seq_forward.3} parent=5 // pred_region
      %s179 = ssub.s32 %s13, 1
      // Predicated region
      $region13: #{seq2seq_forward.3} parent=11 // pred_check
        %p180 = pneg %p34
      $region14: #{seq2seq_forward.3} parent=11 // pred_check_branch
        %182 = sbr.rel (%p180) target = $region16
      $region15: #{seq2seq_forward.3} parent=11 // pred_region
        _
      $region16: #{seq2seq_forward.3} parent=11 // pred_fallthru
        _
      // Predicated region
      $region17: #{seq2seq_forward.3} parent=11 // pred_check
        %p183 = pneg %p55
      $region18: #{seq2seq_forward.3} parent=11 // pred_check_branch
        %185 = sbr.rel (%p183) target = $region20
      $region19: #{seq2seq_forward.3} parent=11 // pred_region
        _
      $region20: #{seq2seq_forward.3} parent=11 // pred_fallthru
        _
      // Predicated region
      $region21: #{seq2seq_forward.3} parent=11 // pred_check
        %p186 = pneg %p76
      $region22: #{seq2seq_forward.3} parent=11 // pred_check_branch
        %188 = sbr.rel (%p186) target = $region24
      $region23: #{seq2seq_forward.3} parent=11 // pred_region
        _
      $region24: #{seq2seq_forward.3} parent=11 // pred_fallthru
        _
      // Predicated region
      $region25: #{seq2seq_forward.3} parent=11 // pred_check
        %p189 = pneg %p97
      $region26: #{seq2seq_forward.3} parent=11 // pred_check_branch
        %191 = sbr.rel (%p189) target = $region28
      $region27: #{seq2seq_forward.3} parent=11 // pred_region
        _
      $region28: #{seq2seq_forward.3} parent=11 // pred_fallthru
        _
      // Predicated region
      $region29: #{seq2seq_forward.3} parent=11 // pred_check
        %p192 = pneg %p118
      $region30: #{seq2seq_forward.3} parent=11 // pred_check_branch
        %194 = sbr.rel (%p192) target = $region32
      $region31: #{seq2seq_forward.3} parent=11 // pred_region
        _
      $region32: #{seq2seq_forward.3} parent=11 // pred_fallthru
        _
      // Predicated region
      $region33: #{seq2seq_forward.3} parent=11 // pred_check
        %p195 = pneg %p139
      $region34: #{seq2seq_forward.3} parent=11 // pred_check_branch
        %197 = sbr.rel (%p195) target = $region36
      $region35: #{seq2seq_forward.3} parent=11 // pred_region
        _
      $region36: #{seq2seq_forward.3} parent=11 // pred_fallthru
        _
    $region12: #{seq2seq_forward.3} parent=5 // pred_fallthru
      _
    %p198 = scmp.lt.s32.totalorder %s13, 8
    // Predicated region
    $region37: #{seq2seq_forward.3} parent=5 // pred_check
      %p199 = pneg %p198
    $region38: #{seq2seq_forward.3} parent=5 // pred_check_branch
      %201 = sbr.rel (%p199) target = $region40
    $region39: #{seq2seq_forward.3} parent=5 // pred_region
      _
    $region40: #{seq2seq_forward.3} parent=5 // pred_fallthru
      _
    %p202 = scmp.le.s32.totalorder 1, %s13
    %p203 = scmp.lt.s32.totalorder %s13, 9
    %p204 = pnand %p202, %p203
    %p205 = pneg %p204
    // Predicated region
    $region41: #{seq2seq_forward.3} parent=5 // pred_check
      _
    $region42: #{seq2seq_forward.3} parent=5 // pred_check_branch
      %207 = sbr.rel (%p204) target = $region44
    $region43: #{seq2seq_forward.3} parent=5 // pred_region
      %s208 = ssub.s32 %s13, 1
      %p209 = pneg %p34
      %p210 = pneg %p31
      %p211 = pneg %p55
      %p212 = pneg %p52
      %p213 = pneg %p76
      %p214 = pneg %p73
      %p215 = pneg %p97
      %p216 = pneg %p94
      %p217 = pneg %p118
      %p218 = pneg %p115
      %p219 = pneg %p139
      %p220 = pneg %p136
      %p221 = pneg %p165
      %p222 = pneg %p162
      %p223 = scmp.lt.s32.totalorder %s18, 7
      %s224 = scalar_select %p223, %s18, 7
      %s225 = smul.addr %s224, 8
      %s226 = scalar_lea.vmem %s7, %s225
      %p227 = scmp.lt.s32.totalorder %s18, 7
      %s228 = scalar_select %p227, %s18, 7
      %s229 = smul.addr %s228, 8
      %s230 = scalar_lea.vmem %s7, %s229
      %p232 = scmp.eq.s32.totalorder %s18, 0
      // Predicated region
      $region45: #{seq2seq_forward.3} parent=43 // pred_check
        %p233 = pneg %p232
      $region46: #{seq2seq_forward.3} parent=43 // pred_check_branch
        %235 = sbr.rel (%p233) target = $region48
      $region47: #{seq2seq_forward.3} parent=43 // pred_region
        %236 = vst [vmem:[%s230] sm:$0xff] 0.0
        %v237 = vld [vmem:[%s1] sm:$0xff]
        %238 = vst [vmem:[#allocation2] sm:$0xff] %v237
        %v239 = vld [vmem:[%s2] sm:$0xff]
        %240 = vst [vmem:[#allocation3] sm:$0xff] %v239
        %v241 = vld [vmem:[%s0] sm:$0xff]
        %v242 = vld [vmem:[%s0 + $0x8] sm:$0xff]
        %v243 = vld [vmem:[%s0 + $0x10] sm:$0xff]
        %v244 = vld [vmem:[%s0 + $0x18] sm:$0xff]
        %245 = vst [vmem:[#allocation4] sm:$0xff] %v241
        %246 = vst [vmem:[#allocation4 + $0x8] sm:$0xff] %v242
        %247 = vst [vmem:[#allocation4 + $0x10] sm:$0xff] %v243
        %248 = vst [vmem:[#allocation4 + $0x18] sm:$0xff] %v244
      $region48: #{seq2seq_forward.3} parent=43 // pred_fallthru
        _
      %p249 = scmp.gt.s32.totalorder %s18, 0
      // Predicated region
      $region49: #{seq2seq_forward.3} parent=43 // pred_check
        %p250 = pneg %p249
      $region50: #{seq2seq_forward.3} parent=43 // pred_check_branch
        %252 = sbr.rel (%p250) target = $region52
      $region51: #{seq2seq_forward.3} parent=43 // pred_region
        %v253 = vld [vmem:[#allocation4] sm:$0xff]
        %v254 = vld [vmem:[#allocation4 + $0x8] sm:$0xff]
        %v255 = vld [vmem:[#allocation4 + $0x10] sm:$0xff]
        %v256 = vld [vmem:[#allocation4 + $0x18] sm:$0xff]
        %v257 = vld [vmem:[#allocation2] sm:$0xff]
        %v258 = vld [vmem:[#allocation3] sm:$0xff]
        %v259 = vld [vmem:[%s4] sm:$0xff]
        %v260 = vld [vmem:[%s4 + $0x8] sm:$0xff]
        %v261 = vld [vmem:[%s4 + $0x10] sm:$0xff]
        %v262 = vld [vmem:[%s4 + $0x18] sm:$0xff]
        %v263 = vld [vmem:[%s4 + $0x20] sm:$0xff]
        %v264 = vld [vmem:[%s4 + $0x28] sm:$0xff]
        %v265 = vld [vmem:[%s4 + $0x30] sm:$0xff]
        %v266 = vld [vmem:[%s4 + $0x38] sm:$0xff]
        %v267 = vld [vmem:[%s4 + $0x40] sm:$0xff]
        %v268 = vld [vmem:[%s4 + $0x48] sm:$0xff]
        %v269 = vld [vmem:[%s4 + $0x50] sm:$0xff]
        %v270 = vld [vmem:[%s4 + $0x58] sm:$0xff]
        %v271 = vld [vmem:[%s4 + $0x60] sm:$0xff]
        %v272 = vld [vmem:[%s4 + $0x68] sm:$0xff]
        %v273 = vld [vmem:[%s4 + $0x70] sm:$0xff]
        %v274 = vld [vmem:[%s4 + $0x78] sm:$0xff]
        %v275 = vld [vmem:[%s4 + $0x80] sm:$0xff]
        %v276 = vld [vmem:[%s4 + $0x88] sm:$0xff]
        %v277 = vld [vmem:[%s4 + $0x90] sm:$0xff]
        %v278 = vld [vmem:[%s4 + $0x98] sm:$0xff]
        %v279 = vld [vmem:[%s4 + $0xa0] sm:$0xff]
        %v280 = vld [vmem:[%s4 + $0xa8] sm:$0xff]
        %v281 = vld [vmem:[%s4 + $0xb0] sm:$0xff]
        %v282 = vld [vmem:[%s4 + $0xb8] sm:$0xff]
        %v283 = vld [vmem:[%s4 + $0xc0] sm:$0xff]
        %v284 = vld [vmem:[%s4 + $0xc8] sm:$0xff]
        %v285 = vld [vmem:[%s4 + $0xd0] sm:$0xff]
        %v286 = vld [vmem:[%s4 + $0xd8] sm:$0xff]
        %v287 = vld [vmem:[%s4 + $0xe0] sm:$0xff]
        %v288 = vld [vmem:[%s4 + $0xe8] sm:$0xff]
        %v289 = vld [vmem:[%s4 + $0xf0] sm:$0xff]
        %v290 = vld [vmem:[%s4 + $0xf8] sm:$0xff]
        %v291 = vpack.c.bf16 %v257, %v257
        %v324 = vunpack.c.l.b16 %v259
        %v325 = vunpack.c.h.b16 %v259
        %v326 = vunpack.c.l.b16 %v260
        %v327 = vunpack.c.h.b16 %v260
        %v328 = vunpack.c.l.b16 %v261
        %v329 = vunpack.c.h.b16 %v261
        %v330 = vunpack.c.l.b16 %v262
        %v331 = vunpack.c.h.b16 %v262
        %v332 = vunpack.c.l.b16 %v263
        %v333 = vunpack.c.h.b16 %v263
        %v334 = vunpack.c.l.b16 %v264
        %v335 = vunpack.c.h.b16 %v264
        %v336 = vunpack.c.l.b16 %v265
        %v337 = vunpack.c.h.b16 %v265
        %v338 = vunpack.c.l.b16 %v266
        %v339 = vunpack.c.h.b16 %v266
        %v340 = vunpack.c.l.b16 %v267
        %v341 = vunpack.c.h.b16 %v267
        %v342 = vunpack.c.l.b16 %v268
        %v343 = vunpack.c.h.b16 %v268
        %v344 = vunpack.c.l.b16 %v269
        %v345 = vunpack.c.h.b16 %v269
        %v346 = vunpack.c.l.b16 %v270
        %v347 = vunpack.c.h.b16 %v270
        %v348 = vunpack.c.l.b16 %v271
        %v349 = vunpack.c.h.b16 %v271
        %v350 = vunpack.c.l.b16 %v272
        %v351 = vunpack.c.h.b16 %v272
        %v352 = vunpack.c.l.b16 %v273
        %v353 = vunpack.c.h.b16 %v273
        %v354 = vunpack.c.l.b16 %v274
        %v355 = vunpack.c.h.b16 %v274
        %v356 = vunpack.c.l.b16 %v275
        %v357 = vunpack.c.h.b16 %v275
        %v358 = vunpack.c.l.b16 %v276
        %v359 = vunpack.c.h.b16 %v276
        %v360 = vunpack.c.l.b16 %v277
        %v361 = vunpack.c.h.b16 %v277
        %v362 = vunpack.c.l.b16 %v278
        %v363 = vunpack.c.h.b16 %v278
        %v364 = vunpack.c.l.b16 %v279
        %v365 = vunpack.c.h.b16 %v279
        %v366 = vunpack.c.l.b16 %v280
        %v367 = vunpack.c.h.b16 %v280
        %v368 = vunpack.c.l.b16 %v281
        %v369 = vunpack.c.h.b16 %v281
        %v370 = vunpack.c.l.b16 %v282
        %v371 = vunpack.c.h.b16 %v282
        %v372 = vunpack.c.l.b16 %v283
        %v373 = vunpack.c.h.b16 %v283
        %v374 = vunpack.c.l.b16 %v284
        %v375 = vunpack.c.h.b16 %v284
        %v376 = vunpack.c.l.b16 %v285
        %v377 = vunpack.c.h.b16 %v285
        %v378 = vunpack.c.l.b16 %v286
        %v379 = vunpack.c.h.b16 %v286
        %v380 = vunpack.c.l.b16 %v287
        %v381 = vunpack.c.h.b16 %v287
        %v382 = vunpack.c.l.b16 %v288
        %v383 = vunpack.c.h.b16 %v288
        %v384 = vunpack.c.l.b16 %v289
        %v385 = vunpack.c.h.b16 %v289
        %v386 = vunpack.c.l.b16 %v290
        %v387 = vunpack.c.h.b16 %v290
        %v388 = vpack.c.b16 %v328, %v324
        %v389 = vpack.c.b16 %v329, %v325
        %v390 = vpack.c.b16 %v330, %v326
        %v391 = vpack.c.b16 %v331, %v327
        %v392 = vpack.c.b16 %v336, %v332
        %v393 = vpack.c.b16 %v337, %v333
        %v394 = vpack.c.b16 %v338, %v334
        %v395 = vpack.c.b16 %v339, %v335
        %v396 = vpack.c.b16 %v344, %v340
        %v397 = vpack.c.b16 %v345, %v341
        %v398 = vpack.c.b16 %v346, %v342
        %v399 = vpack.c.b16 %v347, %v343
        %v400 = vpack.c.b16 %v352, %v348
        %v401 = vpack.c.b16 %v353, %v349
        %v402 = vpack.c.b16 %v354, %v350
        %v403 = vpack.c.b16 %v355, %v351
        %v404 = vpack.c.b16 %v360, %v356
        %v405 = vpack.c.b16 %v361, %v357
        %v406 = vpack.c.b16 %v362, %v358
        %v407 = vpack.c.b16 %v363, %v359
        %v408 = vpack.c.b16 %v368, %v364
        %v409 = vpack.c.b16 %v369, %v365
        %v410 = vpack.c.b16 %v370, %v366
        %v411 = vpack.c.b16 %v371, %v367
        %v412 = vpack.c.b16 %v376, %v372
        %v413 = vpack.c.b16 %v377, %v373
        %v414 = vpack.c.b16 %v378, %v374
        %v415 = vpack.c.b16 %v379, %v375
        %v416 = vpack.c.b16 %v384, %v380
        %v417 = vpack.c.b16 %v385, %v381
        %v418 = vpack.c.b16 %v386, %v382
        %v419 = vpack.c.b16 %v387, %v383
        %452 = vmatprep.subr.bf16.mxu0 %v389
        %453 = vmatpush1.bf16.msra.mxu0 %v388
        %454 = vmatprep.subr.bf16.mxu0 %v393
        %455 = vmatpush1.bf16.msra.mxu0 %v392
        %456 = vmatprep.subr.bf16.mxu0 %v397
        %457 = vmatpush1.bf16.msra.mxu0 %v396
        %458 = vmatprep.subr.bf16.mxu0 %v401
        %459 = vmatpush1.bf16.msra.mxu0 %v400
        %460 = vmatprep.subr.bf16.mxu0 %v405
        %461 = vmatpush1.bf16.msra.mxu0 %v404
        %462 = vmatprep.subr.bf16.mxu0 %v409
        %463 = vmatpush1.bf16.msra.mxu0 %v408
        %464 = vmatprep.subr.bf16.mxu0 %v413
        %465 = vmatpush1.bf16.msra.mxu0 %v412
        %466 = vmatprep.subr.bf16.mxu0 %v417
        %467 = vmatpush1.bf16.msra.mxu0 %v416
        %468 = vmatprep.subr.bf16.mxu0 0
        %469 = vmatpush1.bf16.msra.mxu0 0
        %470 = vmatprep.subr.bf16.mxu0 0
        %471 = vmatpush1.bf16.msra.mxu0 0
        %472 = vmatprep.subr.bf16.mxu0 0
        %473 = vmatpush1.bf16.msra.mxu0 0
        %474 = vmatprep.subr.bf16.mxu0 0
        %475 = vmatpush1.bf16.msra.mxu0 0
        %476 = vmatprep.subr.bf16.mxu0 0
        %477 = vmatpush1.bf16.msra.mxu0 0
        %478 = vmatprep.subr.bf16.mxu0 0
        %479 = vmatpush1.bf16.msra.mxu0 0
        %480 = vmatprep.subr.bf16.mxu0 0
        %481 = vmatpush1.bf16.msra.mxu0 0
        %482 = vmatprep.subr.bf16.mxu0 0
        %483 = vmatpush1.bf16.msra.mxu0 0
        %484 = vmatprep.mubr.bf16.mxu0 0
        %485 = vmatmul.mubr.bf16.gmra.mrb[0].mxu0 %v291
        %v486 = vpop.f32.mrb[0].mxu0
        %v487 = vadd.f32 0.0, %v486
        %v488 = vpop.f32.mrb[0].mxu0
        %v489 = vadd.f32 0.0, %v488
        %v490 = vpop.f32.mrb[0].mxu0
        %v491 = vpop.f32.mrb[0].mxu0
        %492 = vdwg.mxu0
        %493 = vmatprep.subr.bf16.mxu0 %v391
        %494 = vmatpush1.bf16.msra.mxu0 %v390
        %495 = vmatprep.subr.bf16.mxu0 %v395
        %496 = vmatpush1.bf16.msra.mxu0 %v394
        %497 = vmatprep.subr.bf16.mxu0 %v399
        %498 = vmatpush1.bf16.msra.mxu0 %v398
        %499 = vmatprep.subr.bf16.mxu0 %v403
        %500 = vmatpush1.bf16.msra.mxu0 %v402
        %501 = vmatprep.subr.bf16.mxu0 %v407
        %502 = vmatpush1.bf16.msra.mxu0 %v406
        %503 = vmatprep.subr.bf16.mxu0 %v411
        %504 = vmatpush1.bf16.msra.mxu0 %v410
        %505 = vmatprep.subr.bf16.mxu0 %v415
        %506 = vmatpush1.bf16.msra.mxu0 %v414
        %507 = vmatprep.subr.bf16.mxu0 %v419
        %508 = vmatpush1.bf16.msra.mxu0 %v418
        %509 = vmatprep.subr.bf16.mxu0 0
        %510 = vmatpush1.bf16.msra.mxu0 0
        %511 = vmatprep.subr.bf16.mxu0 0
        %512 = vmatpush1.bf16.msra.mxu0 0
        %513 = vmatprep.subr.bf16.mxu0 0
        %514 = vmatpush1.bf16.msra.mxu0 0
        %515 = vmatprep.subr.bf16.mxu0 0
        %516 = vmatpush1.bf16.msra.mxu0 0
        %517 = vmatprep.subr.bf16.mxu0 0
        %518 = vmatpush1.bf16.msra.mxu0 0
        %519 = vmatprep.subr.bf16.mxu0 0
        %520 = vmatpush1.bf16.msra.mxu0 0
        %521 = vmatprep.subr.bf16.mxu0 0
        %522 = vmatpush1.bf16.msra.mxu0 0
        %523 = vmatprep.subr.bf16.mxu0 0
        %524 = vmatpush1.bf16.msra.mxu0 0
        %525 = vmatprep.mubr.bf16.mxu0 0
        %526 = vmatmul.mubr.bf16.gmra.mrb[0].mxu0 %v291
        %v527 = vpop.f32.mrb[0].mxu0
        %v528 = vadd.f32 0.0, %v527
        %v529 = vpop.f32.mrb[0].mxu0
        %v530 = vadd.f32 0.0, %v529
        %v531 = vpop.f32.mrb[0].mxu0
        %v532 = vpop.f32.mrb[0].mxu0
        %533 = vdwg.mxu0
        %v534 = vadd.f32 %v253, %v487
        %v535 = vadd.f32 %v254, %v489
        %v536 = vadd.f32 %v255, %v528
        %v537 = vadd.f32 %v256, %v530
        %v538 = vxor.u32 %v534, 2147483648
        %v539 = vxor.u32 %v535, 2147483648
        %v540 = vxor.u32 %v536, 2147483648
        %v541 = vmul.f32 %v538, 1.442695
        %v542 = vpow.pop %v541
        %v543 = vmul.f32 %v539, 1.442695
        %v544 = vpow.pop %v543
        %v545 = vmul.f32 %v540, 1.442695
        %v546 = vpow.pop %v545
        %v547 = vadd.f32 %v542, 1.0
        %v548 = vadd.f32 %v544, 1.0
        %v549 = vadd.f32 %v546, 1.0
        %v550 = vrcp.pop %v547
        %v551 = vmul.f32 1.0, %v550
        %v552 = vrcp.pop %v548
        %v553 = vmul.f32 1.0, %v552
        %v554 = vrcp.pop %v549
        %v555 = vmul.f32 1.0, %v554
        %v556 = vtanh.pop %v537
        %v557 = vmul.f32 %v553, %v258
        %v558 = vmul.f32 %v551, %v556
        %v559 = vadd.f32 %v557, %v558
        %v560 = vtanh.pop %v559
        %v561 = vmul.f32 %v555, %v560
        %v562 = vpack.c.bf16 %v561, %v561
        %v563 = vld [vmem:[%s5] sm:$0xf]
        %v564 = vld [vmem:[%s5 + $0x4] sm:$0xf]
        %v565 = vld [vmem:[%s5 + $0x8] sm:$0xf]
        %v566 = vld [vmem:[%s5 + $0xc] sm:$0xf]
        %v567 = vld [vmem:[%s5 + $0x10] sm:$0xf]
        %v568 = vld [vmem:[%s5 + $0x14] sm:$0xf]
        %v569 = vld [vmem:[%s5 + $0x18] sm:$0xf]
        %v570 = vld [vmem:[%s5 + $0x1c] sm:$0xf]
        %v571 = vld [vmem:[%s5 + $0x20] sm:$0xf]
        %v572 = vld [vmem:[%s5 + $0x24] sm:$0xf]
        %v573 = vld [vmem:[%s5 + $0x28] sm:$0xf]
        %v574 = vld [vmem:[%s5 + $0x2c] sm:$0xf]
        %v575 = vld [vmem:[%s5 + $0x30] sm:$0xf]
        %v576 = vld [vmem:[%s5 + $0x34] sm:$0xf]
        %v577 = vld [vmem:[%s5 + $0x38] sm:$0xf]
        %v578 = vld [vmem:[%s5 + $0x3c] sm:$0xf]
        %v579 = vld [vmem:[%s6] sm:$0x1]
        %v581 = vlaneseq
        %v582 = vshrl.u32 %v581, 7
        %v583 = vsub.s32 0, %v582
        %v584 = vrot.slane %v579, %v583
        %v602 = vunpack.c.l.b16 %v563
        %v603 = vunpack.c.l.b16 %v564
        %v604 = vunpack.c.l.b16 %v565
        %v605 = vunpack.c.l.b16 %v566
        %v606 = vunpack.c.l.b16 %v567
        %v607 = vunpack.c.l.b16 %v568
        %v608 = vunpack.c.l.b16 %v569
        %v609 = vunpack.c.l.b16 %v570
        %v610 = vunpack.c.l.b16 %v571
        %v611 = vunpack.c.l.b16 %v572
        %v612 = vunpack.c.l.b16 %v573
        %v613 = vunpack.c.l.b16 %v574
        %v614 = vunpack.c.l.b16 %v575
        %v615 = vunpack.c.l.b16 %v576
        %v616 = vunpack.c.l.b16 %v577
        %v617 = vunpack.c.l.b16 %v578
        %v618 = vpack.c.b16 %v603, %v602
        %v619 = vpack.c.b16 %v605, %v604
        %v620 = vpack.c.b16 %v607, %v606
        %v621 = vpack.c.b16 %v609, %v608
        %v622 = vpack.c.b16 %v611, %v610
        %v623 = vpack.c.b16 %v613, %v612
        %v624 = vpack.c.b16 %v615, %v614
        %v625 = vpack.c.b16 %v617, %v616
        %634 = vmatprep.subr.bf16.mxu0 0
        %635 = vmatpush1.bf16.msra.mxu0 %v618
        %636 = vmatprep.subr.bf16.mxu0 0
        %637 = vmatpush1.bf16.msra.mxu0 %v619
        %638 = vmatprep.subr.bf16.mxu0 0
        %639 = vmatpush1.bf16.msra.mxu0 %v620
        %640 = vmatprep.subr.bf16.mxu0 0
        %641 = vmatpush1.bf16.msra.mxu0 %v621
        %642 = vmatprep.subr.bf16.mxu0 0
        %643 = vmatpush1.bf16.msra.mxu0 %v622
        %644 = vmatprep.subr.bf16.mxu0 0
        %645 = vmatpush1.bf16.msra.mxu0 %v623
        %646 = vmatprep.subr.bf16.mxu0 0
        %647 = vmatpush1.bf16.msra.mxu0 %v624
        %648 = vmatprep.subr.bf16.mxu0 0
        %649 = vmatpush1.bf16.msra.mxu0 %v625
        %650 = vmatprep.subr.bf16.mxu0 0
        %651 = vmatpush1.bf16.msra.mxu0 0
        %652 = vmatprep.subr.bf16.mxu0 0
        %653 = vmatpush1.bf16.msra.mxu0 0
        %654 = vmatprep.subr.bf16.mxu0 0
        %655 = vmatpush1.bf16.msra.mxu0 0
        %656 = vmatprep.subr.bf16.mxu0 0
        %657 = vmatpush1.bf16.msra.mxu0 0
        %658 = vmatprep.subr.bf16.mxu0 0
        %659 = vmatpush1.bf16.msra.mxu0 0
        %660 = vmatprep.subr.bf16.mxu0 0
        %661 = vmatpush1.bf16.msra.mxu0 0
        %662 = vmatprep.subr.bf16.mxu0 0
        %663 = vmatpush1.bf16.msra.mxu0 0
        %664 = vmatprep.subr.bf16.mxu0 0
        %665 = vmatpush1.bf16.msra.mxu0 0
        %666 = vmatprep.mubr.bf16.mxu0 0
        %667 = vmatmul.mubr.bf16.gmra.mrb[0].mxu0 %v562
        %v668 = vpop.f32.mrb[0].mxu0
        %v669 = vadd.f32 %v584, %v668
        %v670 = vpop.f32.mrb[0].mxu0
        %v671 = vpop.f32.mrb[0].mxu0
        %v672 = vpop.f32.mrb[0].mxu0
        %673 = vdwg.mxu0
        %674 = vst [vmem:[%s230] sm:$0xff] %v669
        %675 = vst [vmem:[#allocation2] sm:$0xff] %v561
        %676 = vst [vmem:[#allocation3] sm:$0xff] %v559
        %p677 = scmp.lt.s32.totalorder %s18, 7
        // Predicated region
        $region53: #{seq2seq_forward.3} parent=51 // pred_check
          %p678 = pneg %p677
        $region54: #{seq2seq_forward.3} parent=51 // pred_check_branch
          %680 = sbr.rel (%p678) target = $region56
        $region55: #{seq2seq_forward.3} parent=51 // pred_region
          %v681 = vlaneseq
          %v682 = vand.u32 %v681, 127
          %vm683 = vcmp.lt.s32.totalorder %v682, 64
          %v684 = vsel %vm683, %v669, -inf
          %685 = vmax.xlane.f32.xlu0 %v684
          %v686 = vpop.xlane.xlu0 %685
          %vm687 = vcmp.eq.f32.partialorder %v684, %v686
          %v688 = vsel %vm687, %v682, 128
          %v689 = vand.u32 %v688, 65535
          %v690 = vshra.s32 %v688, 16
          %v691 = vcvt.s32.f32 %v689
          %v692 = vcvt.s32.f32 %v690
          %693 = vmin.xlane.f32.xlu0 %v692
          %v694 = vpop.xlane.xlu0 %693
          %vm695 = vcmp.eq.f32.partialorder %v692, %v694
          %v696 = vsel %vm695, %v691, inf
          %697 = vmin.xlane.f32.xlu0 %v696
          %v698 = vpop.xlane.xlu0 %697
          %v699 = vcvt.f32.s32 %v698
          %v700 = vcvt.f32.s32 %v694
          %v701 = vshll.u32 %v700, 16
          %v702 = vadd.s32 %v701, %v699
          %vm703 = vcmask 7168
          %704 = vst.msk [vmem:[#allocation5] sm:$0xff] %vm703, %v702
          %v705 = vld [vmem:[#allocation5] sm:$0x1]
          %s706 = vtos %v705
          %s707 = sshrl.u32 %s706, 3
          %s708 = sand.u32 %s706, 7
          %s709 = smul.u32 %s707, 32
          %s710 = sadd.s32 %s708, %s709
          %s711 = scalar_lea.vmem %s3, %s710
          %p713 = scmp.lt.u32.totalorder 1, 8
          %p714 = pneg %p713
          // Predicated region
          $region57: #{seq2seq_forward.3} parent=55 // pred_check
            _
          $region58: #{seq2seq_forward.3} parent=55 // pred_check_branch
            %716 = sbr.rel (%p713) target = $region60
          $region59: #{seq2seq_forward.3} parent=55 // pred_region
            %s737 = sand.u32 1, 7
            %p738 = scmp.eq.s32.totalorder %s737, 0
            %p739 = pneg %p738
            // Predicated region
            $region72: #{seq2seq_forward.3} parent=59 // pred_check
              _
            $region73: #{seq2seq_forward.3} parent=59 // pred_check_branch
              %741 = sbr.rel (%p738) target = $region75
            $region74: #{seq2seq_forward.3} parent=59 // pred_region
              %s742 = sand.u32 1, 7
              %s743 = ssub.s32 1, %s742
              %s744 = scalar_lea.vmem %s711, %s743
              %s745 = ssub.s32 1, %s742
              %s746 = scalar_lea.vmem [#allocation4], %s745
              %s747 = sshllo.u32 0, %s742
              loop: start=0, step=1, limit=1
              $region76: #{seq2seq_forward.3} parent=74 // loop_pre_header
                _
              $region77: #{seq2seq_forward.3} parent=74 // loop_header
                %s749 = sphi 0, %s753
                %p750 = scmp.ge.s32.totalorder %s749, 1
                %s754 = sphi %s744, %s744
                %s755 = sphi %s746, %s746
              $region78: #{seq2seq_forward.3} parent=74 // loop_header_branch
                %752 = sbr.rel (%p750) target = $region82
              $region79: #{seq2seq_forward.3} parent=74 // loop_body
                %v756 = vld [vmem:[%s754] sm:%s747]
                %757 = vst [vmem:[%s755] sm:%s747] %v756
                %v758 = vld [vmem:[%s754 + $0x8] sm:%s747]
                %759 = vst [vmem:[%s755 + $0x8] sm:%s747] %v758
                %v760 = vld [vmem:[%s754 + $0x10] sm:%s747]
                %761 = vst [vmem:[%s755 + $0x10] sm:%s747] %v760
                %v762 = vld [vmem:[%s754 + $0x18] sm:%s747]
                %763 = vst [vmem:[%s755 + $0x18] sm:%s747] %v762
              $region80: #{seq2seq_forward.3} parent=74 // loop_footer
                %s753 = sadd.s32 1, %s749
              $region81: #{seq2seq_forward.3} parent=74 // loop_footer_branch
                %748 = sbr.rel target = $region77
              $region82: #{seq2seq_forward.3} parent=74 // loop_exit
                _
            $region75: #{seq2seq_forward.3} parent=59 // pred_fallthru
              _
          $region60: #{seq2seq_forward.3} parent=55 // pred_fallthru
            _
          // Predicated region
          $region61: #{seq2seq_forward.3} parent=55 // pred_check
            %p717 = pneg %p713
          $region62: #{seq2seq_forward.3} parent=55 // pred_check_branch
            %719 = sbr.rel (%p717) target = $region64
          $region63: #{seq2seq_forward.3} parent=55 // pred_region
            %s720 = sshllo.u32 0, 1
            loop: start=0, step=1, limit=1
            $region65: #{seq2seq_forward.3} parent=63 // loop_pre_header
              _
            $region66: #{seq2seq_forward.3} parent=63 // loop_header
              %s722 = sphi 0, %s726
              %p723 = scmp.ge.s32.totalorder %s722, 1
              %s727 = sphi %s711, %s711
              %s728 = sphi [#allocation4], [#allocation4]
            $region67: #{seq2seq_forward.3} parent=63 // loop_header_branch
              %725 = sbr.rel (%p723) target = $region71
            $region68: #{seq2seq_forward.3} parent=63 // loop_body
              %v729 = vld [vmem:[%s727] sm:%s720]
              %730 = vst [vmem:[%s728] sm:%s720] %v729
              %v731 = vld [vmem:[%s727 + $0x8] sm:%s720]
              %732 = vst [vmem:[%s728 + $0x8] sm:%s720] %v731
              %v733 = vld [vmem:[%s727 + $0x10] sm:%s720]
              %734 = vst [vmem:[%s728 + $0x10] sm:%s720] %v733
              %v735 = vld [vmem:[%s727 + $0x18] sm:%s720]
              %736 = vst [vmem:[%s728 + $0x18] sm:%s720] %v735
            $region69: #{seq2seq_forward.3} parent=63 // loop_footer
              %s726 = sadd.s32 1, %s722
            $region70: #{seq2seq_forward.3} parent=63 // loop_footer_branch
              %721 = sbr.rel target = $region66
            $region71: #{seq2seq_forward.3} parent=63 // loop_exit
              _
          $region64: #{seq2seq_forward.3} parent=55 // pred_fallthru
            _
          // Predicated region
          $region83: #{seq2seq_forward.3} parent=55 // pred_check
            _
          $region84: #{seq2seq_forward.3} parent=55 // pred_check_branch
            %766 = sbr.rel (0) target = $region86
          $region85: #{seq2seq_forward.3} parent=55 // pred_region
            %767 = vsyncadd [#allocation6], 64
          $region86: #{seq2seq_forward.3} parent=55 // pred_fallthru
            _
          %v768 = vld [vmem:[#allocation5 + $0x1] sm:$0x1]
          %s769 = vtos %v768
          %s770 = sshrl.u32 %s769, 3
          %s771 = sand.u32 %s769, 7
          %s772 = smul.u32 %s770, 32
          %s773 = sadd.s32 %s771, %s772
          %s774 = scalar_lea.vmem %s3, %s773
          %s775 = scalar_lea.vmem [#allocation4], 1
          %s776 = scalar_lea.sflag [#allocation6], 1
          %p778 = scmp.lt.u32.totalorder 1, 8
          %p779 = pneg %p778
          // Predicated region
          $region87: #{seq2seq_forward.3} parent=55 // pred_check
            _
          $region88: #{seq2seq_forward.3} parent=55 // pred_check_branch
            %781 = sbr.rel (%p778) target = $region90
          $region89: #{seq2seq_forward.3} parent=55 // pred_region
            %s802 = sand.u32 1, 7
            %p803 = scmp.eq.s32.totalorder %s802, 0
            %p804 = pneg %p803
            // Predicated region
            $region102: #{seq2seq_forward.3} parent=89 // pred_check
              _
            $region103: #{seq2seq_forward.3} parent=89 // pred_check_branch
              %806 = sbr.rel (%p803) target = $region105
            $region104: #{seq2seq_forward.3} parent=89 // pred_region
              %s807 = sand.u32 1, 7
              %s808 = ssub.s32 1, %s807
              %s809 = scalar_lea.vmem %s774, %s808
              %s810 = ssub.s32 1, %s807
              %s811 = scalar_lea.vmem %s775, %s810 [#allocation4]
              %s812 = sshllo.u32 0, %s807
              loop: start=0, step=1, limit=1
              $region106: #{seq2seq_forward.3} parent=104 // loop_pre_header
                _
              $region107: #{seq2seq_forward.3} parent=104 // loop_header
                %s814 = sphi 0, %s818
                %p815 = scmp.ge.s32.totalorder %s814, 1
                %s819 = sphi %s809, %s809
                %s820 = sphi %s811, %s811
              $region108: #{seq2seq_forward.3} parent=104 // loop_header_branch
                %817 = sbr.rel (%p815) target = $region112
              $region109: #{seq2seq_forward.3} parent=104 // loop_body
                %v821 = vld [vmem:[%s819] sm:%s812]
                %822 = vst [vmem:[%s820] sm:%s812] %v821
                %v823 = vld [vmem:[%s819 + $0x8] sm:%s812]
                %824 = vst [vmem:[%s820 + $0x8] sm:%s812] %v823
                %v825 = vld [vmem:[%s819 + $0x10] sm:%s812]
                %826 = vst [vmem:[%s820 + $0x10] sm:%s812] %v825
                %v827 = vld [vmem:[%s819 + $0x18] sm:%s812]
                %828 = vst [vmem:[%s820 + $0x18] sm:%s812] %v827
              $region110: #{seq2seq_forward.3} parent=104 // loop_footer
                %s818 = sadd.s32 1, %s814
              $region111: #{seq2seq_forward.3} parent=104 // loop_footer_branch
                %813 = sbr.rel target = $region107
              $region112: #{seq2seq_forward.3} parent=104 // loop_exit
                _
            $region105: #{seq2seq_forward.3} parent=89 // pred_fallthru
              _
          $region90: #{seq2seq_forward.3} parent=55 // pred_fallthru
            _
          // Predicated region
          $region91: #{seq2seq_forward.3} parent=55 // pred_check
            %p782 = pneg %p778
          $region92: #{seq2seq_forward.3} parent=55 // pred_check_branch
            %784 = sbr.rel (%p782) target = $region94
          $region93: #{seq2seq_forward.3} parent=55 // pred_region
            %s785 = sshllo.u32 0, 1
            loop: start=0, step=1, limit=1
            $region95: #{seq2seq_forward.3} parent=93 // loop_pre_header
              _
            $region96: #{seq2seq_forward.3} parent=93 // loop_header
              %s787 = sphi 0, %s791
              %p788 = scmp.ge.s32.totalorder %s787, 1
              %s792 = sphi %s774, %s774
              %s793 = sphi %s775, %s775
            $region97: #{seq2seq_forward.3} parent=93 // loop_header_branch
              %790 = sbr.rel (%p788) target = $region101
            $region98: #{seq2seq_forward.3} parent=93 // loop_body
              %v794 = vld [vmem:[%s792] sm:%s785]
              %795 = vst [vmem:[%s793] sm:%s785] %v794
              %v796 = vld [vmem:[%s792 + $0x8] sm:%s785]
              %797 = vst [vmem:[%s793 + $0x8] sm:%s785] %v796
              %v798 = vld [vmem:[%s792 + $0x10] sm:%s785]
              %799 = vst [vmem:[%s793 + $0x10] sm:%s785] %v798
              %v800 = vld [vmem:[%s792 + $0x18] sm:%s785]
              %801 = vst [vmem:[%s793 + $0x18] sm:%s785] %v800
            $region99: #{seq2seq_forward.3} parent=93 // loop_footer
              %s791 = sadd.s32 1, %s787
            $region100: #{seq2seq_forward.3} parent=93 // loop_footer_branch
              %786 = sbr.rel target = $region96
            $region101: #{seq2seq_forward.3} parent=93 // loop_exit
              _
          $region94: #{seq2seq_forward.3} parent=55 // pred_fallthru
            _
          // Predicated region
          $region113: #{seq2seq_forward.3} parent=55 // pred_check
            _
          $region114: #{seq2seq_forward.3} parent=55 // pred_check_branch
            %831 = sbr.rel (0) target = $region116
          $region115: #{seq2seq_forward.3} parent=55 // pred_region
            %832 = vsyncadd %s776, 64
          $region116: #{seq2seq_forward.3} parent=55 // pred_fallthru
            _
          %v833 = vld [vmem:[#allocation5 + $0x2] sm:$0x1]
          %s834 = vtos %v833
          %s835 = sshrl.u32 %s834, 3
          %s836 = sand.u32 %s834, 7
          %s837 = smul.u32 %s835, 32
          %s838 = sadd.s32 %s836, %s837
          %s839 = scalar_lea.vmem %s3, %s838
          %s840 = scalar_lea.vmem [#allocation4], 2
          %s841 = scalar_lea.sflag [#allocation6], 2
          %p843 = scmp.lt.u32.totalorder 1, 8
          %p844 = pneg %p843
          // Predicated region
          $region117: #{seq2seq_forward.3} parent=55 // pred_check
            _
          $region118: #{seq2seq_forward.3} parent=55 // pred_check_branch
            %846 = sbr.rel (%p843) target = $region120
          $region119: #{seq2seq_forward.3} parent=55 // pred_region
            %s867 = sand.u32 1, 7
            %p868 = scmp.eq.s32.totalorder %s867, 0
            %p869 = pneg %p868
            // Predicated region
            $region132: #{seq2seq_forward.3} parent=119 // pred_check
              _
            $region133: #{seq2seq_forward.3} parent=119 // pred_check_branch
              %871 = sbr.rel (%p868) target = $region135
            $region134: #{seq2seq_forward.3} parent=119 // pred_region
              %s872 = sand.u32 1, 7
              %s873 = ssub.s32 1, %s872
              %s874 = scalar_lea.vmem %s839, %s873
              %s875 = ssub.s32 1, %s872
              %s876 = scalar_lea.vmem %s840, %s875 [#allocation4]
              %s877 = sshllo.u32 0, %s872
              loop: start=0, step=1, limit=1
              $region136: #{seq2seq_forward.3} parent=134 // loop_pre_header
                _
              $region137: #{seq2seq_forward.3} parent=134 // loop_header
                %s879 = sphi 0, %s883
                %p880 = scmp.ge.s32.totalorder %s879, 1
                %s884 = sphi %s874, %s874
                %s885 = sphi %s876, %s876
              $region138: #{seq2seq_forward.3} parent=134 // loop_header_branch
                %882 = sbr.rel (%p880) target = $region142
              $region139: #{seq2seq_forward.3} parent=134 // loop_body
                %v886 = vld [vmem:[%s884] sm:%s877]
                %887 = vst [vmem:[%s885] sm:%s877] %v886
                %v888 = vld [vmem:[%s884 + $0x8] sm:%s877]
                %889 = vst [vmem:[%s885 + $0x8] sm:%s877] %v888
                %v890 = vld [vmem:[%s884 + $0x10] sm:%s877]
                %891 = vst [vmem:[%s885 + $0x10] sm:%s877] %v890
                %v892 = vld [vmem:[%s884 + $0x18] sm:%s877]
                %893 = vst [vmem:[%s885 + $0x18] sm:%s877] %v892
              $region140: #{seq2seq_forward.3} parent=134 // loop_footer
                %s883 = sadd.s32 1, %s879
              $region141: #{seq2seq_forward.3} parent=134 // loop_footer_branch
                %878 = sbr.rel target = $region137
              $region142: #{seq2seq_forward.3} parent=134 // loop_exit
                _
            $region135: #{seq2seq_forward.3} parent=119 // pred_fallthru
              _
          $region120: #{seq2seq_forward.3} parent=55 // pred_fallthru
            _
          // Predicated region
          $region121: #{seq2seq_forward.3} parent=55 // pred_check
            %p847 = pneg %p843
          $region122: #{seq2seq_forward.3} parent=55 // pred_check_branch
            %849 = sbr.rel (%p847) target = $region124
          $region123: #{seq2seq_forward.3} parent=55 // pred_region
            %s850 = sshllo.u32 0, 1
            loop: start=0, step=1, limit=1
            $region125: #{seq2seq_forward.3} parent=123 // loop_pre_header
              _
            $region126: #{seq2seq_forward.3} parent=123 // loop_header
              %s852 = sphi 0, %s856
              %p853 = scmp.ge.s32.totalorder %s852, 1
              %s857 = sphi %s839, %s839
              %s858 = sphi %s840, %s840
            $region127: #{seq2seq_forward.3} parent=123 // loop_header_branch
              %855 = sbr.rel (%p853) target = $region131
            $region128: #{seq2seq_forward.3} parent=123 // loop_body
              %v859 = vld [vmem:[%s857] sm:%s850]
              %860 = vst [vmem:[%s858] sm:%s850] %v859
              %v861 = vld [vmem:[%s857 + $0x8] sm:%s850]
              %862 = vst [vmem:[%s858 + $0x8] sm:%s850] %v861
              %v863 = vld [vmem:[%s857 + $0x10] sm:%s850]
              %864 = vst [vmem:[%s858 + $0x10] sm:%s850] %v863
              %v865 = vld [vmem:[%s857 + $0x18] sm:%s850]
              %866 = vst [vmem:[%s858 + $0x18] sm:%s850] %v865
            $region129: #{seq2seq_forward.3} parent=123 // loop_footer
              %s856 = sadd.s32 1, %s852
            $region130: #{seq2seq_forward.3} parent=123 // loop_footer_branch
              %851 = sbr.rel target = $region126
            $region131: #{seq2seq_forward.3} parent=123 // loop_exit
              _
          $region124: #{seq2seq_forward.3} parent=55 // pred_fallthru
            _
          // Predicated region
          $region143: #{seq2seq_forward.3} parent=55 // pred_check
            _
          $region144: #{seq2seq_forward.3} parent=55 // pred_check_branch
            %896 = sbr.rel (0) target = $region146
          $region145: #{seq2seq_forward.3} parent=55 // pred_region
            %897 = vsyncadd %s841, 64
          $region146: #{seq2seq_forward.3} parent=55 // pred_fallthru
            _
          %v898 = vld [vmem:[#allocation5 + $0x3] sm:$0x1]
          %s899 = vtos %v898
          %s900 = sshrl.u32 %s899, 3
          %s901 = sand.u32 %s899, 7
          %s902 = smul.u32 %s900, 32
          %s903 = sadd.s32 %s901, %s902
          %s904 = scalar_lea.vmem %s3, %s903
          %s905 = scalar_lea.vmem [#allocation4], 3
          %s906 = scalar_lea.sflag [#allocation6], 3
          %p908 = scmp.lt.u32.totalorder 1, 8
          %p909 = pneg %p908
          // Predicated region
          $region147: #{seq2seq_forward.3} parent=55 // pred_check
            _
          $region148: #{seq2seq_forward.3} parent=55 // pred_check_branch
            %911 = sbr.rel (%p908) target = $region150
          $region149: #{seq2seq_forward.3} parent=55 // pred_region
            %s932 = sand.u32 1, 7
            %p933 = scmp.eq.s32.totalorder %s932, 0
            %p934 = pneg %p933
            // Predicated region
            $region162: #{seq2seq_forward.3} parent=149 // pred_check
              _
            $region163: #{seq2seq_forward.3} parent=149 // pred_check_branch
              %936 = sbr.rel (%p933) target = $region165
            $region164: #{seq2seq_forward.3} parent=149 // pred_region
              %s937 = sand.u32 1, 7
              %s938 = ssub.s32 1, %s937
              %s939 = scalar_lea.vmem %s904, %s938
              %s940 = ssub.s32 1, %s937
              %s941 = scalar_lea.vmem %s905, %s940 [#allocation4]
              %s942 = sshllo.u32 0, %s937
              loop: start=0, step=1, limit=1
              $region166: #{seq2seq_forward.3} parent=164 // loop_pre_header
                _
              $region167: #{seq2seq_forward.3} parent=164 // loop_header
                %s944 = sphi 0, %s948
                %p945 = scmp.ge.s32.totalorder %s944, 1
                %s949 = sphi %s939, %s939
                %s950 = sphi %s941, %s941
              $region168: #{seq2seq_forward.3} parent=164 // loop_header_branch
                %947 = sbr.rel (%p945) target = $region172
              $region169: #{seq2seq_forward.3} parent=164 // loop_body
                %v951 = vld [vmem:[%s949] sm:%s942]
                %952 = vst [vmem:[%s950] sm:%s942] %v951
                %v953 = vld [vmem:[%s949 + $0x8] sm:%s942]
                %954 = vst [vmem:[%s950 + $0x8] sm:%s942] %v953
                %v955 = vld [vmem:[%s949 + $0x10] sm:%s942]
                %956 = vst [vmem:[%s950 + $0x10] sm:%s942] %v955
                %v957 = vld [vmem:[%s949 + $0x18] sm:%s942]
                %958 = vst [vmem:[%s950 + $0x18] sm:%s942] %v957
              $region170: #{seq2seq_forward.3} parent=164 // loop_footer
                %s948 = sadd.s32 1, %s944
              $region171: #{seq2seq_forward.3} parent=164 // loop_footer_branch
                %943 = sbr.rel target = $region167
              $region172: #{seq2seq_forward.3} parent=164 // loop_exit
                _
            $region165: #{seq2seq_forward.3} parent=149 // pred_fallthru
              _
          $region150: #{seq2seq_forward.3} parent=55 // pred_fallthru
            _
          // Predicated region
          $region151: #{seq2seq_forward.3} parent=55 // pred_check
            %p912 = pneg %p908
          $region152: #{seq2seq_forward.3} parent=55 // pred_check_branch
            %914 = sbr.rel (%p912) target = $region154
          $region153: #{seq2seq_forward.3} parent=55 // pred_region
            %s915 = sshllo.u32 0, 1
            loop: start=0, step=1, limit=1
            $region155: #{seq2seq_forward.3} parent=153 // loop_pre_header
              _
            $region156: #{seq2seq_forward.3} parent=153 // loop_header
              %s917 = sphi 0, %s921
              %p918 = scmp.ge.s32.totalorder %s917, 1
              %s922 = sphi %s904, %s904
              %s923 = sphi %s905, %s905
            $region157: #{seq2seq_forward.3} parent=153 // loop_header_branch
              %920 = sbr.rel (%p918) target = $region161
            $region158: #{seq2seq_forward.3} parent=153 // loop_body
              %v924 = vld [vmem:[%s922] sm:%s915]
              %925 = vst [vmem:[%s923] sm:%s915] %v924
              %v926 = vld [vmem:[%s922 + $0x8] sm:%s915]
              %927 = vst [vmem:[%s923 + $0x8] sm:%s915] %v926
              %v928 = vld [vmem:[%s922 + $0x10] sm:%s915]
              %929 = vst [vmem:[%s923 + $0x10] sm:%s915] %v928
              %v930 = vld [vmem:[%s922 + $0x18] sm:%s915]
              %931 = vst [vmem:[%s923 + $0x18] sm:%s915] %v930
            $region159: #{seq2seq_forward.3} parent=153 // loop_footer
              %s921 = sadd.s32 1, %s917
            $region160: #{seq2seq_forward.3} parent=153 // loop_footer_branch
              %916 = sbr.rel target = $region156
            $region161: #{seq2seq_forward.3} parent=153 // loop_exit
              _
          $region154: #{seq2seq_forward.3} parent=55 // pred_fallthru
            _
          // Predicated region
          $region173: #{seq2seq_forward.3} parent=55 // pred_check
            _
          $region174: #{seq2seq_forward.3} parent=55 // pred_check_branch
            %961 = sbr.rel (0) target = $region176
          $region175: #{seq2seq_forward.3} parent=55 // pred_region
            %962 = vsyncadd %s906, 64
          $region176: #{seq2seq_forward.3} parent=55 // pred_fallthru
            _
          %v963 = vld [vmem:[#allocation5 + $0x4] sm:$0x1]
          %s964 = vtos %v963
          %s965 = sshrl.u32 %s964, 3
          %s966 = sand.u32 %s964, 7
          %s967 = smul.u32 %s965, 32
          %s968 = sadd.s32 %s966, %s967
          %s969 = scalar_lea.vmem %s3, %s968
          %s970 = scalar_lea.vmem [#allocation4], 4
          %s971 = scalar_lea.sflag [#allocation6], 4
          %p973 = scmp.lt.u32.totalorder 1, 8
          %p974 = pneg %p973
          // Predicated region
          $region177: #{seq2seq_forward.3} parent=55 // pred_check
            _
          $region178: #{seq2seq_forward.3} parent=55 // pred_check_branch
            %976 = sbr.rel (%p973) target = $region180
          $region179: #{seq2seq_forward.3} parent=55 // pred_region
            %s997 = sand.u32 1, 7
            %p998 = scmp.eq.s32.totalorder %s997, 0
            %p999 = pneg %p998
            // Predicated region
            $region192: #{seq2seq_forward.3} parent=179 // pred_check
              _
            $region193: #{seq2seq_forward.3} parent=179 // pred_check_branch
              %1001 = sbr.rel (%p998) target = $region195
            $region194: #{seq2seq_forward.3} parent=179 // pred_region
              %s1002 = sand.u32 1, 7
              %s1003 = ssub.s32 1, %s1002
              %s1004 = scalar_lea.vmem %s969, %s1003
              %s1005 = ssub.s32 1, %s1002
              %s1006 = scalar_lea.vmem %s970, %s1005 [#allocation4]
              %s1007 = sshllo.u32 0, %s1002
              loop: start=0, step=1, limit=1
              $region196: #{seq2seq_forward.3} parent=194 // loop_pre_header
                _
              $region197: #{seq2seq_forward.3} parent=194 // loop_header
                %s1009 = sphi 0, %s1013
                %p1010 = scmp.ge.s32.totalorder %s1009, 1
                %s1014 = sphi %s1004, %s1004
                %s1015 = sphi %s1006, %s1006
              $region198: #{seq2seq_forward.3} parent=194 // loop_header_branch
                %1012 = sbr.rel (%p1010) target = $region202
              $region199: #{seq2seq_forward.3} parent=194 // loop_body
                %v1016 = vld [vmem:[%s1014] sm:%s1007]
                %1017 = vst [vmem:[%s1015] sm:%s1007] %v1016
                %v1018 = vld [vmem:[%s1014 + $0x8] sm:%s1007]
                %1019 = vst [vmem:[%s1015 + $0x8] sm:%s1007] %v1018
                %v1020 = vld [vmem:[%s1014 + $0x10] sm:%s1007]
                %1021 = vst [vmem:[%s1015 + $0x10] sm:%s1007] %v1020
                %v1022 = vld [vmem:[%s1014 + $0x18] sm:%s1007]
                %1023 = vst [vmem:[%s1015 + $0x18] sm:%s1007] %v1022
              $region200: #{seq2seq_forward.3} parent=194 // loop_footer
                %s1013 = sadd.s32 1, %s1009
              $region201: #{seq2seq_forward.3} parent=194 // loop_footer_branch
                %1008 = sbr.rel target = $region197
              $region202: #{seq2seq_forward.3} parent=194 // loop_exit
                _
            $region195: #{seq2seq_forward.3} parent=179 // pred_fallthru
              _
          $region180: #{seq2seq_forward.3} parent=55 // pred_fallthru
            _
          // Predicated region
          $region181: #{seq2seq_forward.3} parent=55 // pred_check
            %p977 = pneg %p973
          $region182: #{seq2seq_forward.3} parent=55 // pred_check_branch
            %979 = sbr.rel (%p977) target = $region184
          $region183: #{seq2seq_forward.3} parent=55 // pred_region
            %s980 = sshllo.u32 0, 1
            loop: start=0, step=1, limit=1
            $region185: #{seq2seq_forward.3} parent=183 // loop_pre_header
              _
            $region186: #{seq2seq_forward.3} parent=183 // loop_header
              %s982 = sphi 0, %s986
              %p983 = scmp.ge.s32.totalorder %s982, 1
              %s987 = sphi %s969, %s969
              %s988 = sphi %s970, %s970
            $region187: #{seq2seq_forward.3} parent=183 // loop_header_branch
              %985 = sbr.rel (%p983) target = $region191
            $region188: #{seq2seq_forward.3} parent=183 // loop_body
              %v989 = vld [vmem:[%s987] sm:%s980]
              %990 = vst [vmem:[%s988] sm:%s980] %v989
              %v991 = vld [vmem:[%s987 + $0x8] sm:%s980]
              %992 = vst [vmem:[%s988 + $0x8] sm:%s980] %v991
              %v993 = vld [vmem:[%s987 + $0x10] sm:%s980]
              %994 = vst [vmem:[%s988 + $0x10] sm:%s980] %v993
              %v995 = vld [vmem:[%s987 + $0x18] sm:%s980]
              %996 = vst [vmem:[%s988 + $0x18] sm:%s980] %v995
            $region189: #{seq2seq_forward.3} parent=183 // loop_footer
              %s986 = sadd.s32 1, %s982
            $region190: #{seq2seq_forward.3} parent=183 // loop_footer_branch
              %981 = sbr.rel target = $region186
            $region191: #{seq2seq_forward.3} parent=183 // loop_exit
              _
          $region184: #{seq2seq_forward.3} parent=55 // pred_fallthru
            _
          // Predicated region
          $region203: #{seq2seq_forward.3} parent=55 // pred_check
            _
          $region204: #{seq2seq_forward.3} parent=55 // pred_check_branch
            %1026 = sbr.rel (0) target = $region206
          $region205: #{seq2seq_forward.3} parent=55 // pred_region
            %1027 = vsyncadd %s971, 64
          $region206: #{seq2seq_forward.3} parent=55 // pred_fallthru
            _
          %v1028 = vld [vmem:[#allocation5 + $0x5] sm:$0x1]
          %s1029 = vtos %v1028
          %s1030 = sshrl.u32 %s1029, 3
          %s1031 = sand.u32 %s1029, 7
          %s1032 = smul.u32 %s1030, 32
          %s1033 = sadd.s32 %s1031, %s1032
          %s1034 = scalar_lea.vmem %s3, %s1033
          %s1035 = scalar_lea.vmem [#allocation4], 5
          %s1036 = scalar_lea.sflag [#allocation6], 5
          %p1038 = scmp.lt.u32.totalorder 1, 8
          %p1039 = pneg %p1038
          // Predicated region
          $region207: #{seq2seq_forward.3} parent=55 // pred_check
            _
          $region208: #{seq2seq_forward.3} parent=55 // pred_check_branch
            %1041 = sbr.rel (%p1038) target = $region210
          $region209: #{seq2seq_forward.3} parent=55 // pred_region
            %s1062 = sand.u32 1, 7
            %p1063 = scmp.eq.s32.totalorder %s1062, 0
            %p1064 = pneg %p1063
            // Predicated region
            $region222: #{seq2seq_forward.3} parent=209 // pred_check
              _
            $region223: #{seq2seq_forward.3} parent=209 // pred_check_branch
              %1066 = sbr.rel (%p1063) target = $region225
            $region224: #{seq2seq_forward.3} parent=209 // pred_region
              %s1067 = sand.u32 1, 7
              %s1068 = ssub.s32 1, %s1067
              %s1069 = scalar_lea.vmem %s1034, %s1068
              %s1070 = ssub.s32 1, %s1067
              %s1071 = scalar_lea.vmem %s1035, %s1070 [#allocation4]
              %s1072 = sshllo.u32 0, %s1067
              loop: start=0, step=1, limit=1
              $region226: #{seq2seq_forward.3} parent=224 // loop_pre_header
                _
              $region227: #{seq2seq_forward.3} parent=224 // loop_header
                %s1074 = sphi 0, %s1078
                %p1075 = scmp.ge.s32.totalorder %s1074, 1
                %s1079 = sphi %s1069, %s1069
                %s1080 = sphi %s1071, %s1071
              $region228: #{seq2seq_forward.3} parent=224 // loop_header_branch
                %1077 = sbr.rel (%p1075) target = $region232
              $region229: #{seq2seq_forward.3} parent=224 // loop_body
                %v1081 = vld [vmem:[%s1079] sm:%s1072]
                %1082 = vst [vmem:[%s1080] sm:%s1072] %v1081
                %v1083 = vld [vmem:[%s1079 + $0x8] sm:%s1072]
                %1084 = vst [vmem:[%s1080 + $0x8] sm:%s1072] %v1083
                %v1085 = vld [vmem:[%s1079 + $0x10] sm:%s1072]
                %1086 = vst [vmem:[%s1080 + $0x10] sm:%s1072] %v1085
                %v1087 = vld [vmem:[%s1079 + $0x18] sm:%s1072]
                %1088 = vst [vmem:[%s1080 + $0x18] sm:%s1072] %v1087
              $region230: #{seq2seq_forward.3} parent=224 // loop_footer
                %s1078 = sadd.s32 1, %s1074
              $region231: #{seq2seq_forward.3} parent=224 // loop_footer_branch
                %1073 = sbr.rel target = $region227
              $region232: #{seq2seq_forward.3} parent=224 // loop_exit
                _
            $region225: #{seq2seq_forward.3} parent=209 // pred_fallthru
              _
          $region210: #{seq2seq_forward.3} parent=55 // pred_fallthru
            _
          // Predicated region
          $region211: #{seq2seq_forward.3} parent=55 // pred_check
            %p1042 = pneg %p1038
          $region212: #{seq2seq_forward.3} parent=55 // pred_check_branch
            %1044 = sbr.rel (%p1042) target = $region214
          $region213: #{seq2seq_forward.3} parent=55 // pred_region
            %s1045 = sshllo.u32 0, 1
            loop: start=0, step=1, limit=1
            $region215: #{seq2seq_forward.3} parent=213 // loop_pre_header
              _
            $region216: #{seq2seq_forward.3} parent=213 // loop_header
              %s1047 = sphi 0, %s1051
              %p1048 = scmp.ge.s32.totalorder %s1047, 1
              %s1052 = sphi %s1034, %s1034
              %s1053 = sphi %s1035, %s1035
            $region217: #{seq2seq_forward.3} parent=213 // loop_header_branch
              %1050 = sbr.rel (%p1048) target = $region221
            $region218: #{seq2seq_forward.3} parent=213 // loop_body
              %v1054 = vld [vmem:[%s1052] sm:%s1045]
              %1055 = vst [vmem:[%s1053] sm:%s1045] %v1054
              %v1056 = vld [vmem:[%s1052 + $0x8] sm:%s1045]
              %1057 = vst [vmem:[%s1053 + $0x8] sm:%s1045] %v1056
              %v1058 = vld [vmem:[%s1052 + $0x10] sm:%s1045]
              %1059 = vst [vmem:[%s1053 + $0x10] sm:%s1045] %v1058
              %v1060 = vld [vmem:[%s1052 + $0x18] sm:%s1045]
              %1061 = vst [vmem:[%s1053 + $0x18] sm:%s1045] %v1060
            $region219: #{seq2seq_forward.3} parent=213 // loop_footer
              %s1051 = sadd.s32 1, %s1047
            $region220: #{seq2seq_forward.3} parent=213 // loop_footer_branch
              %1046 = sbr.rel target = $region216
            $region221: #{seq2seq_forward.3} parent=213 // loop_exit
              _
          $region214: #{seq2seq_forward.3} parent=55 // pred_fallthru
            _
          // Predicated region
          $region233: #{seq2seq_forward.3} parent=55 // pred_check
            _
          $region234: #{seq2seq_forward.3} parent=55 // pred_check_branch
            %1091 = sbr.rel (0) target = $region236
          $region235: #{seq2seq_forward.3} parent=55 // pred_region
            %1092 = vsyncadd %s1036, 64
          $region236: #{seq2seq_forward.3} parent=55 // pred_fallthru
            _
          %v1093 = vld [vmem:[#allocation5 + $0x6] sm:$0x1]
          %s1094 = vtos %v1093
          %s1095 = sshrl.u32 %s1094, 3
          %s1096 = sand.u32 %s1094, 7
          %s1097 = smul.u32 %s1095, 32
          %s1098 = sadd.s32 %s1096, %s1097
          %s1099 = scalar_lea.vmem %s3, %s1098
          %s1100 = scalar_lea.vmem [#allocation4], 6
          %s1101 = scalar_lea.sflag [#allocation6], 6
          %p1103 = scmp.lt.u32.totalorder 1, 8
          %p1104 = pneg %p1103
          // Predicated region
          $region237: #{seq2seq_forward.3} parent=55 // pred_check
            _
          $region238: #{seq2seq_forward.3} parent=55 // pred_check_branch
            %1106 = sbr.rel (%p1103) target = $region240
          $region239: #{seq2seq_forward.3} parent=55 // pred_region
            %s1127 = sand.u32 1, 7
            %p1128 = scmp.eq.s32.totalorder %s1127, 0
            %p1129 = pneg %p1128
            // Predicated region
            $region252: #{seq2seq_forward.3} parent=239 // pred_check
              _
            $region253: #{seq2seq_forward.3} parent=239 // pred_check_branch
              %1131 = sbr.rel (%p1128) target = $region255
            $region254: #{seq2seq_forward.3} parent=239 // pred_region
              %s1132 = sand.u32 1, 7
              %s1133 = ssub.s32 1, %s1132
              %s1134 = scalar_lea.vmem %s1099, %s1133
              %s1135 = ssub.s32 1, %s1132
              %s1136 = scalar_lea.vmem %s1100, %s1135 [#allocation4]
              %s1137 = sshllo.u32 0, %s1132
              loop: start=0, step=1, limit=1
              $region256: #{seq2seq_forward.3} parent=254 // loop_pre_header
                _
              $region257: #{seq2seq_forward.3} parent=254 // loop_header
                %s1139 = sphi 0, %s1143
                %p1140 = scmp.ge.s32.totalorder %s1139, 1
                %s1144 = sphi %s1134, %s1134
                %s1145 = sphi %s1136, %s1136
              $region258: #{seq2seq_forward.3} parent=254 // loop_header_branch
                %1142 = sbr.rel (%p1140) target = $region262
              $region259: #{seq2seq_forward.3} parent=254 // loop_body
                %v1146 = vld [vmem:[%s1144] sm:%s1137]
                %1147 = vst [vmem:[%s1145] sm:%s1137] %v1146
                %v1148 = vld [vmem:[%s1144 + $0x8] sm:%s1137]
                %1149 = vst [vmem:[%s1145 + $0x8] sm:%s1137] %v1148
                %v1150 = vld [vmem:[%s1144 + $0x10] sm:%s1137]
                %1151 = vst [vmem:[%s1145 + $0x10] sm:%s1137] %v1150
                %v1152 = vld [vmem:[%s1144 + $0x18] sm:%s1137]
                %1153 = vst [vmem:[%s1145 + $0x18] sm:%s1137] %v1152
              $region260: #{seq2seq_forward.3} parent=254 // loop_footer
                %s1143 = sadd.s32 1, %s1139
              $region261: #{seq2seq_forward.3} parent=254 // loop_footer_branch
                %1138 = sbr.rel target = $region257
              $region262: #{seq2seq_forward.3} parent=254 // loop_exit
                _
            $region255: #{seq2seq_forward.3} parent=239 // pred_fallthru
              _
          $region240: #{seq2seq_forward.3} parent=55 // pred_fallthru
            _
          // Predicated region
          $region241: #{seq2seq_forward.3} parent=55 // pred_check
            %p1107 = pneg %p1103
          $region242: #{seq2seq_forward.3} parent=55 // pred_check_branch
            %1109 = sbr.rel (%p1107) target = $region244
          $region243: #{seq2seq_forward.3} parent=55 // pred_region
            %s1110 = sshllo.u32 0, 1
            loop: start=0, step=1, limit=1
            $region245: #{seq2seq_forward.3} parent=243 // loop_pre_header
              _
            $region246: #{seq2seq_forward.3} parent=243 // loop_header
              %s1112 = sphi 0, %s1116
              %p1113 = scmp.ge.s32.totalorder %s1112, 1
              %s1117 = sphi %s1099, %s1099
              %s1118 = sphi %s1100, %s1100
            $region247: #{seq2seq_forward.3} parent=243 // loop_header_branch
              %1115 = sbr.rel (%p1113) target = $region251
            $region248: #{seq2seq_forward.3} parent=243 // loop_body
              %v1119 = vld [vmem:[%s1117] sm:%s1110]
              %1120 = vst [vmem:[%s1118] sm:%s1110] %v1119
              %v1121 = vld [vmem:[%s1117 + $0x8] sm:%s1110]
              %1122 = vst [vmem:[%s1118 + $0x8] sm:%s1110] %v1121
              %v1123 = vld [vmem:[%s1117 + $0x10] sm:%s1110]
              %1124 = vst [vmem:[%s1118 + $0x10] sm:%s1110] %v1123
              %v1125 = vld [vmem:[%s1117 + $0x18] sm:%s1110]
              %1126 = vst [vmem:[%s1118 + $0x18] sm:%s1110] %v1125
            $region249: #{seq2seq_forward.3} parent=243 // loop_footer
              %s1116 = sadd.s32 1, %s1112
            $region250: #{seq2seq_forward.3} parent=243 // loop_footer_branch
              %1111 = sbr.rel target = $region246
            $region251: #{seq2seq_forward.3} parent=243 // loop_exit
              _
          $region244: #{seq2seq_forward.3} parent=55 // pred_fallthru
            _
          // Predicated region
          $region263: #{seq2seq_forward.3} parent=55 // pred_check
            _
          $region264: #{seq2seq_forward.3} parent=55 // pred_check_branch
            %1156 = sbr.rel (0) target = $region266
          $region265: #{seq2seq_forward.3} parent=55 // pred_region
            %1157 = vsyncadd %s1101, 64
          $region266: #{seq2seq_forward.3} parent=55 // pred_fallthru
            _
          %v1158 = vld [vmem:[#allocation5 + $0x7] sm:$0x1]
          %s1159 = vtos %v1158
          %s1160 = sshrl.u32 %s1159, 3
          %s1161 = sand.u32 %s1159, 7
          %s1162 = smul.u32 %s1160, 32
          %s1163 = sadd.s32 %s1161, %s1162
          %s1164 = scalar_lea.vmem %s3, %s1163
          %s1165 = scalar_lea.vmem [#allocation4], 7
          %s1166 = scalar_lea.sflag [#allocation6], 7
          %p1168 = scmp.lt.u32.totalorder 1, 8
          %p1169 = pneg %p1168
          // Predicated region
          $region267: #{seq2seq_forward.3} parent=55 // pred_check
            _
          $region268: #{seq2seq_forward.3} parent=55 // pred_check_branch
            %1171 = sbr.rel (%p1168) target = $region270
          $region269: #{seq2seq_forward.3} parent=55 // pred_region
            %s1192 = sand.u32 1, 7
            %p1193 = scmp.eq.s32.totalorder %s1192, 0
            %p1194 = pneg %p1193
            // Predicated region
            $region282: #{seq2seq_forward.3} parent=269 // pred_check
              _
            $region283: #{seq2seq_forward.3} parent=269 // pred_check_branch
              %1196 = sbr.rel (%p1193) target = $region285
            $region284: #{seq2seq_forward.3} parent=269 // pred_region
              %s1197 = sand.u32 1, 7
              %s1198 = ssub.s32 1, %s1197
              %s1199 = scalar_lea.vmem %s1164, %s1198
              %s1200 = ssub.s32 1, %s1197
              %s1201 = scalar_lea.vmem %s1165, %s1200 [#allocation4]
              %s1202 = sshllo.u32 0, %s1197
              loop: start=0, step=1, limit=1
              $region286: #{seq2seq_forward.3} parent=284 // loop_pre_header
                _
              $region287: #{seq2seq_forward.3} parent=284 // loop_header
                %s1204 = sphi 0, %s1208
                %p1205 = scmp.ge.s32.totalorder %s1204, 1
                %s1209 = sphi %s1199, %s1199
                %s1210 = sphi %s1201, %s1201
              $region288: #{seq2seq_forward.3} parent=284 // loop_header_branch
                %1207 = sbr.rel (%p1205) target = $region292
              $region289: #{seq2seq_forward.3} parent=284 // loop_body
                %v1211 = vld [vmem:[%s1209] sm:%s1202]
                %1212 = vst [vmem:[%s1210] sm:%s1202] %v1211
                %v1213 = vld [vmem:[%s1209 + $0x8] sm:%s1202]
                %1214 = vst [vmem:[%s1210 + $0x8] sm:%s1202] %v1213
                %v1215 = vld [vmem:[%s1209 + $0x10] sm:%s1202]
                %1216 = vst [vmem:[%s1210 + $0x10] sm:%s1202] %v1215
                %v1217 = vld [vmem:[%s1209 + $0x18] sm:%s1202]
                %1218 = vst [vmem:[%s1210 + $0x18] sm:%s1202] %v1217
              $region290: #{seq2seq_forward.3} parent=284 // loop_footer
                %s1208 = sadd.s32 1, %s1204
              $region291: #{seq2seq_forward.3} parent=284 // loop_footer_branch
                %1203 = sbr.rel target = $region287
              $region292: #{seq2seq_forward.3} parent=284 // loop_exit
                _
            $region285: #{seq2seq_forward.3} parent=269 // pred_fallthru
              _
          $region270: #{seq2seq_forward.3} parent=55 // pred_fallthru
            _
          // Predicated region
          $region271: #{seq2seq_forward.3} parent=55 // pred_check
            %p1172 = pneg %p1168
          $region272: #{seq2seq_forward.3} parent=55 // pred_check_branch
            %1174 = sbr.rel (%p1172) target = $region274
          $region273: #{seq2seq_forward.3} parent=55 // pred_region
            %s1175 = sshllo.u32 0, 1
            loop: start=0, step=1, limit=1
            $region275: #{seq2seq_forward.3} parent=273 // loop_pre_header
              _
            $region276: #{seq2seq_forward.3} parent=273 // loop_header
              %s1177 = sphi 0, %s1181
              %p1178 = scmp.ge.s32.totalorder %s1177, 1
              %s1182 = sphi %s1164, %s1164
              %s1183 = sphi %s1165, %s1165
            $region277: #{seq2seq_forward.3} parent=273 // loop_header_branch
              %1180 = sbr.rel (%p1178) target = $region281
            $region278: #{seq2seq_forward.3} parent=273 // loop_body
              %v1184 = vld [vmem:[%s1182] sm:%s1175]
              %1185 = vst [vmem:[%s1183] sm:%s1175] %v1184
              %v1186 = vld [vmem:[%s1182 + $0x8] sm:%s1175]
              %1187 = vst [vmem:[%s1183 + $0x8] sm:%s1175] %v1186
              %v1188 = vld [vmem:[%s1182 + $0x10] sm:%s1175]
              %1189 = vst [vmem:[%s1183 + $0x10] sm:%s1175] %v1188
              %v1190 = vld [vmem:[%s1182 + $0x18] sm:%s1175]
              %1191 = vst [vmem:[%s1183 + $0x18] sm:%s1175] %v1190
            $region279: #{seq2seq_forward.3} parent=273 // loop_footer
              %s1181 = sadd.s32 1, %s1177
            $region280: #{seq2seq_forward.3} parent=273 // loop_footer_branch
              %1176 = sbr.rel target = $region276
            $region281: #{seq2seq_forward.3} parent=273 // loop_exit
              _
          $region274: #{seq2seq_forward.3} parent=55 // pred_fallthru
            _
          // Predicated region
          $region293: #{seq2seq_forward.3} parent=55 // pred_check
            _
          $region294: #{seq2seq_forward.3} parent=55 // pred_check_branch
            %1221 = sbr.rel (0) target = $region296
          $region295: #{seq2seq_forward.3} parent=55 // pred_region
            %1222 = vsyncadd %s1166, 64
          $region296: #{seq2seq_forward.3} parent=55 // pred_fallthru
            _
          %s1223 = smul.u32 1, 4
          %s1224 = sshll.u32 %s1223, 4
          %1225 = dma.done [#allocation6], %s1224
          %s1226 = sshll.u32 %s1223, 4
          %1227 = dma.done %s776, %s1226
          %s1228 = sshll.u32 %s1223, 4
          %1229 = dma.done %s841, %s1228
          %s1230 = sshll.u32 %s1223, 4
          %1231 = dma.done %s906, %s1230
          %s1232 = sshll.u32 %s1223, 4
          %1233 = dma.done %s971, %s1232
          %s1234 = sshll.u32 %s1223, 4
          %1235 = dma.done %s1036, %s1234
          %s1236 = sshll.u32 %s1223, 4
          %1237 = dma.done %s1101, %s1236
          %s1238 = sshll.u32 %s1223, 4
          %1239 = dma.done %s1166, %s1238
        $region56: #{seq2seq_forward.3} parent=51 // pred_fallthru
          _
      $region52: #{seq2seq_forward.3} parent=43 // pred_fallthru
        _
      %p1240 = scmp.lt.s32.totalorder %s18, 7
      %s1241 = scalar_select %p1240, %s18, 7
      %s1242 = smul.addr %s1241, 8
      %s1243 = scalar_lea.vmem %s7, %s1242
      // Predicated region
      $region297: #{seq2seq_forward.3} parent=43 // pred_check
        %p1244 = pneg %p162
      $region298: #{seq2seq_forward.3} parent=43 // pred_check_branch
        %1246 = sbr.rel (%p1244) target = $region300
      $region299: #{seq2seq_forward.3} parent=43 // pred_region
        _
      $region300: #{seq2seq_forward.3} parent=43 // pred_fallthru
        _
    $region44: #{seq2seq_forward.3} parent=5 // pred_fallthru
      _
    %p1247 = scmp.le.s32.totalorder 2, %s13
    // Predicated region
    $region301: #{seq2seq_forward.3} parent=5 // pred_check
      %p1248 = pneg %p1247
    $region302: #{seq2seq_forward.3} parent=5 // pred_check_branch
      %1250 = sbr.rel (%p1248) target = $region304
    $region303: #{seq2seq_forward.3} parent=5 // pred_region
      %s1251 = ssub.s32 %s13, 2
      // Predicated region
      $region305: #{seq2seq_forward.3} parent=303 // pred_check
        %p1252 = pneg %p168
      $region306: #{seq2seq_forward.3} parent=303 // pred_check_branch
        %1254 = sbr.rel (%p1252) target = $region308
      $region307: #{seq2seq_forward.3} parent=303 // pred_region
        %p1255 = scmp.lt.s32.totalorder %s19, 7
        %s1256 = scalar_select %p1255, %s19, 7
        %s1257 = smul.addr %s1256, 8
        %s1258 = scalar_lea.vmem %s7, %s1257
      $region308: #{seq2seq_forward.3} parent=303 // pred_fallthru
        _
    $region304: #{seq2seq_forward.3} parent=5 // pred_fallthru
      _
  $region6: #{seq2seq_forward.3} parent=0 // loop_footer
    %s17 = sadd.s32 1, %s13
  $region7: #{seq2seq_forward.3} parent=0 // loop_footer_branch
    %12 = sbr.rel target = $region3
  $region8: #{seq2seq_forward.3} parent=0 // loop_exit
    _
  %1259 = vsyncmov [#allocation6]
  %s1260 = vpop.sfrf %1259
  %p1261 = scmp.eq.s32.totalorder %s1260, 0
  %p1262 = pneg %p1261
  %1264 = shalt.err (%p1262)
  %s1265 = scalar_lea.sflag [#allocation6], 1
  %1266 = vsyncmov %s1265
  %s1267 = vpop.sfrf %1266
  %p1268 = scmp.eq.s32.totalorder %s1267, 0
  %p1269 = pneg %p1268
  %1271 = shalt.err (%p1269)
  %s1272 = scalar_lea.sflag [#allocation6], 2
  %1273 = vsyncmov %s1272
  %s1274 = vpop.sfrf %1273
  %p1275 = scmp.eq.s32.totalorder %s1274, 0
  %p1276 = pneg %p1275
  %1278 = shalt.err (%p1276)
  %s1279 = scalar_lea.sflag [#allocation6], 3
  %1280 = vsyncmov %s1279
  %s1281 = vpop.sfrf %1280
  %p1282 = scmp.eq.s32.totalorder %s1281, 0
  %p1283 = pneg %p1282
  %1285 = shalt.err (%p1283)
  %s1286 = scalar_lea.sflag [#allocation6], 4
  %1287 = vsyncmov %s1286
  %s1288 = vpop.sfrf %1287
  %p1289 = scmp.eq.s32.totalorder %s1288, 0
  %p1290 = pneg %p1289
  %1292 = shalt.err (%p1290)
  %s1293 = scalar_lea.sflag [#allocation6], 5
  %1294 = vsyncmov %s1293
  %s1295 = vpop.sfrf %1294
  %p1296 = scmp.eq.s32.totalorder %s1295, 0
  %p1297 = pneg %p1296
  %1299 = shalt.err (%p1297)
  %s1300 = scalar_lea.sflag [#allocation6], 6
  %1301 = vsyncmov %s1300
  %s1302 = vpop.sfrf %1301
  %p1303 = scmp.eq.s32.totalorder %s1302, 0
  %p1304 = pneg %p1303
  %1306 = shalt.err (%p1304)
  %s1307 = scalar_lea.sflag [#allocation6], 7
  %1308 = vsyncmov %s1307
  %s1309 = vpop.sfrf %1308
  %p1310 = scmp.eq.s32.totalorder %s1309, 0
  %p1311 = pneg %p1310
  %1313 = shalt.err (%p1311)

</llo_original>
